<compile_context>
chip_gen: v6e
topology: v6e:2x2x1
jax: 0.10.0
libtpu: 0.0.40
codegen_flags: <defaults>
</compile_context>

<pallas_src>
import functools
import math

import jax
import jax.numpy as jnp
from jax.experimental import pallas as pl
from jax.experimental.pallas import tpu as pltpu


_TM_MAX = 1024      # max rows per grid step (review: raised from 512)
_TM_SINGLE = 256    # at or below this, collapse to one block (latency regime)


def _round_up(x, m):
    return (x + m - 1) // m * m


def _row_tiling(m, *, granularity=1, tm_max=_TM_MAX):
    """Return (m_pad, tm): padded row count and row-tile size.

    Guarantees m_pad % tm == 0, tm % 8 == 0 and m_pad % granularity == 0.
    Small m -> one maximal block; m (8-rounded) > 256 -> at least two blocks
    of <= ~tm_max rows each, so the parallel M grid can shard across v7x's
    two TensorCores.
    """
    g = 8 * granularity // math.gcd(8, granularity)
    m8 = _round_up(m, g)
    if m8 <= _TM_SINGLE:
        return m8, m8
    n = max(2, -(-m8 // tm_max))
    tm = _round_up(-(-m8 // n), g)
    return tm * n, tm


# ---------------------------------------------------------------------------
# Kernels
# ---------------------------------------------------------------------------

def _gemm_bias_act_kernel(x_ref, w_ref, b_ref, o_ref, *, apply_relu):
    # bf16 MXU inputs, fp32 accumulate, fp32 bias + ReLU epilogue.
    acc = jnp.dot(x_ref[...], w_ref[...], preferred_element_type=jnp.float32)
    acc = acc + b_ref[...]                       # (TM, N) + (1, N)
    if apply_relu:
        acc = jnp.maximum(acc, 0.0)
    o_ref[...] = acc.astype(o_ref.dtype)


def _head_kernel(x_ref, w1_ref, b1_ref, w2_ref, b2_ref, o_ref):
    # Fused linear_1 (+ReLU) and actor; hidden (TM, 512) never leaves VMEM.
    h = jnp.dot(x_ref[...], w1_ref[...], preferred_element_type=jnp.float32)
    h = jnp.maximum(h + b1_ref[...], 0.0)
    out = jnp.dot(h.astype(jnp.bfloat16), w2_ref[...],
                  preferred_element_type=jnp.float32)
    o_ref[...] = (out + b2_ref[...]).astype(o_ref.dtype)


# ---------------------------------------------------------------------------
# Pallas wrappers
# ---------------------------------------------------------------------------

def pallas_gemm_bias_relu(x, w, b, *, tm, apply_relu, out_dtype):
    """act(x @ w + b). x:(M_pad,K_pad) bf16, w:(K_pad,N_pad) bf16, b:(1,N_pad) f32."""
    m_pad, k_pad = x.shape
    n_pad = w.shape[1]
    flops = 2 * m_pad * k_pad * n_pad
    bytes_accessed = ((x.size + w.size) * 2 + b.size * 4
                      + m_pad * n_pad * jnp.dtype(out_dtype).itemsize)
    kernel = functools.partial(_gemm_bias_act_kernel, apply_relu=apply_relu)
    return pl.pallas_call(
        kernel,
        out_shape=jax.ShapeDtypeStruct((m_pad, n_pad), out_dtype),
        grid=(m_pad // tm,),
        in_specs=[
            pl.BlockSpec((tm, k_pad), lambda i: (i, 0)),
            pl.BlockSpec((k_pad, n_pad), lambda i: (0, 0)),
            pl.BlockSpec((1, n_pad), lambda i: (0, 0)),
        ],
        out_specs=pl.BlockSpec((tm, n_pad), lambda i: (i, 0)),
        compiler_params=pltpu.CompilerParams(
            dimension_semantics=("parallel",)),
        cost_estimate=pl.CostEstimate(flops=flops, transcendentals=0,
                                      bytes_accessed=bytes_accessed),
    )(x, w, b)


def head_forward(x, w1, b1, w2, b2, *, n_out):
    """Fused linear_1(+ReLU) + actor.  x:(rows, K) bf16, K == w1.shape[0]."""
    rows, k = x.shape
    n1 = w1.shape[1]
    n2p = w2.shape[1]
    # Cap head TM at 512: the fp32 (TM, 512) hidden is its only TM-scaling
    # intermediate (review item on VMEM/spill pressure when TM is raised).
    m_pad, tm = _row_tiling(rows, tm_max=512)
    if m_pad != rows:
        x = jnp.pad(x, ((0, m_pad - rows), (0, 0)))
    flops = 2 * m_pad * (k * n1 + n1 * n2p)
    bytes_accessed = ((x.size + w1.size + w2.size) * 2
                      + (b1.size + b2.size) * 4 + m_pad * n2p * 4)
    out = pl.pallas_call(
        _head_kernel,
        out_shape=jax.ShapeDtypeStruct((m_pad, n2p), jnp.float32),
        grid=(m_pad // tm,),
        in_specs=[
            pl.BlockSpec((tm, k), lambda i: (i, 0)),
            pl.BlockSpec((k, n1), lambda i: (0, 0)),
            pl.BlockSpec((1, n1), lambda i: (0, 0)),
            pl.BlockSpec((n1, n2p), lambda i: (0, 0)),
            pl.BlockSpec((1, n2p), lambda i: (0, 0)),
        ],
        out_specs=pl.BlockSpec((tm, n2p), lambda i: (i, 0)),
        compiler_params=pltpu.CompilerParams(
            dimension_semantics=("parallel",)),
        cost_estimate=pl.CostEstimate(flops=flops, transcendentals=0,
                                      bytes_accessed=bytes_accessed),
    )(x, w1, b1, w2, b2)
    return out[:rows, :n_out]


# ---------------------------------------------------------------------------
# NHWC im2col + conv layers
# ---------------------------------------------------------------------------

def im2col_nhwc(x, kh, kw, c, stride, k_pad):
    """x:(B,H,W,C_pad) -> patches (B*OH*OW, k_pad), patch order (KH, KW, C).

    Gathers only the first `c` (real) channels of each tap (channel trim of
    the 128-padded activation fuses into this concat) and folds the K zero
    padding into the same concatenate (no separate jnp.pad pass).
    """
    B, H, W, _ = x.shape
    oh = (H - kh) // stride + 1
    ow = (W - kw) // stride + 1
    cols = []
    for i in range(kh):
        for j in range(kw):
            cols.append(x[:, i:i + stride * oh:stride,
                          j:j + stride * ow:stride, :c])
    k = kh * kw * c
    if k_pad > k:
        cols.append(jnp.zeros((B, oh, ow, k_pad - k), x.dtype))
    p = jnp.concatenate(cols, axis=-1)            # (B, OH, OW, k_pad), lane-dense
    return p.reshape(B * oh * ow, k_pad), oh, ow


def conv2d_relu(x, w, b, *, kh, kw, c, stride):
    """NHWC Conv2d + ReLU.  w:(K_pad,128) bf16, b:(1,128) f32 (pre-padded).

    Returns (B, OH, OW, 128) bf16 with out-channels padded to 128 (real first,
    pad channels exactly zero); stays NHWC, no transpose, no channel slice.
    """
    B = x.shape[0]
    k_pad, n_pad = w.shape
    patches, oh, ow = im2col_nhwc(x, kh, kw, c, stride, k_pad)
    M = patches.shape[0]
    m_pad, tm = _row_tiling(M)
    if m_pad != M:
        patches = jnp.pad(patches, ((0, m_pad - M), (0, 0)))
    out = pallas_gemm_bias_relu(patches, w, b, tm=tm, apply_relu=True,
                                out_dtype=jnp.bfloat16)
    if m_pad != M:
        out = out[:M]
    return out.reshape(B, oh, ow, n_pad)


def conv3_flatten(x, w, b, *, kh, kw, c, stride):
    """conv3 + ReLU whose padded GEMM output reshapes directly into the
    128-channel-padded NHWC flatten that lin1_w is prepped for.

    Row padding is a multiple of 8*spatial so fake rows form whole fake
    samples (sliced off only at the final output).  Returns
    (B_pad, spatial*128) bf16 with B_pad >= B, real samples first.
    """
    k_pad, n_pad = w.shape
    patches, oh, ow = im2col_nhwc(x, kh, kw, c, stride, k_pad)
    spatial = oh * ow
    M = patches.shape[0]
    m_pad, tm = _row_tiling(M, granularity=8 * spatial)
    if m_pad != M:
        patches = jnp.pad(patches, ((0, m_pad - M), (0, 0)))
    out = pallas_gemm_bias_relu(patches, w, b, tm=tm, apply_relu=True,
                                out_dtype=jnp.bfloat16)
    return out.reshape(m_pad // spatial, spatial * n_pad)


# ---------------------------------------------------------------------------
# Params: torch-layout init + one-time prep (reshape / transpose / pad / bf16)
# ---------------------------------------------------------------------------

def _conv_size(s, k, stride=2):
    return (s - k) // stride + 1


def init_dqn_params(key, h, w):
    """Torch-layout params with PyTorch-default-style uniform(+-1/sqrt(fan_in))."""
    convw = _conv_size(_conv_size(_conv_size(w, 7), 5), 4)
    convh = _conv_size(_conv_size(_conv_size(h, 7), 5), 4)
    lin_in = convw * convh * 64
    keys = jax.random.split(key, 10)

    def uinit(k, shape, fan_in):
        bound = 1.0 / float(fan_in) ** 0.5
        return jax.random.uniform(k, shape, jnp.float32, -bound, bound)

    return {
        "conv1_w": uinit(keys[0], (32, 4, 7, 7), 4 * 7 * 7),
        "conv1_b": uinit(keys[1], (32,), 4 * 7 * 7),
        "conv2_w": uinit(keys[2], (64, 32, 5, 5), 32 * 5 * 5),
        "conv2_b": uinit(keys[3], (64,), 32 * 5 * 5),
        "conv3_w": uinit(keys[4], (64, 64, 4, 4), 64 * 4 * 4),
        "conv3_b": uinit(keys[5], (64,), 64 * 4 * 4),
        "lin1_w": uinit(keys[6], (512, lin_in), lin_in),
        "lin1_b": uinit(keys[7], (512,), lin_in),
        "actor_w": uinit(keys[8], (3, 512), 512),
        "actor_b": uinit(keys[9], (3,), 512),
    }


def prepare_params(params, h, w):
    """One-time weight prep: GEMM layout (K,N), K->mult of 128, N->128, bf16."""
    convw = _conv_size(_conv_size(_conv_size(w, 7), 5), 4)
    convh = _conv_size(_conv_size(_conv_size(h, 7), 5), 4)

    def prep_conv(cw, cb):
        oc, c, kh, kw = cw.shape
        k = kh * kw * c
        k_pad = _round_up(k, 128)
        n_pad = _round_up(oc, 128)
        wk = jnp.transpose(cw, (2, 3, 1, 0)).reshape(k, oc)   # (KH,KW,C,OC)->(K,OC)
        wk = jnp.pad(wk, ((0, k_pad - k), (0, n_pad - oc))).astype(jnp.bfloat16)
        bk = jnp.pad(cb, (0, n_pad - oc)).reshape(1, n_pad).astype(jnp.float32)
        return wk, bk

    c1w, c1b = prep_conv(params["conv1_w"], params["conv1_b"])
    c2w, c2b = prep_conv(params["conv2_w"], params["conv2_b"])
    c3w, c3b = prep_conv(params["conv3_w"], params["conv3_b"])

    # linear_1: accept conv3's 128-channel-padded NHWC flatten directly.
    # torch's x.view(B,-1) flattens NCHW as (c, h, w); our flatten order is
    # (h, w, c_pad) with c_pad in [0,128) and rows for channels >= 64 zero.
    oc3_pad = c3w.shape[1]                                    # 128
    lw = params["lin1_w"].reshape(512, 64, convh, convw)      # (out, c, h, w)
    lw = jnp.transpose(lw, (2, 3, 1, 0))                      # (h, w, c, out)
    lw = jnp.pad(lw, ((0, 0), (0, 0), (0, oc3_pad - 64), (0, 0)))
    w1 = lw.reshape(convh * convw * oc3_pad, 512).astype(jnp.bfloat16)
    b1 = params["lin1_b"].reshape(1, 512).astype(jnp.float32)

    n2 = params["actor_w"].shape[0]                           # 3
    n2_pad = _round_up(n2, 128)
    w2 = jnp.pad(params["actor_w"].T,
                 ((0, 0), (0, n2_pad - n2))).astype(jnp.bfloat16)
    b2 = jnp.pad(params["actor_b"],
                 (0, n2_pad - n2)).reshape(1, n2_pad).astype(jnp.float32)

    return {
        "conv1_w": c1w, "conv1_b": c1b,
        "conv2_w": c2w, "conv2_b": c2b,
        "conv3_w": c3w, "conv3_b": c3b,
        "lin1_w": w1, "lin1_b": b1,
        "actor_w": w2, "actor_b": b2,
    }


# ---------------------------------------------------------------------------
# Forward
# ---------------------------------------------------------------------------

def dqn_forward(prepared, x):
    # x: (B, 4, H, W) NCHW float32 (torch convention). One transpose to NHWC
    # up front; everything downstream is lane-dense NHWC bf16 with
    # out-channels padded to 128 (real channels first, pad channels zero).
    B = x.shape[0]
    x = jnp.transpose(x, (0, 2, 3, 1)).astype(jnp.bfloat16)
    x = conv2d_relu(x, prepared["conv1_w"], prepared["conv1_b"],
                    kh=7, kw=7, c=4, stride=2)
    x = conv2d_relu(x, prepared["conv2_w"], prepared["conv2_b"],
                    kh=5, kw=5, c=32, stride=2)
    flat = conv3_flatten(x, prepared["conv3_w"], prepared["conv3_b"],
                         kh=4, kw=4, c=64, stride=2)
    out = head_forward(flat, prepared["lin1_w"], prepared["lin1_b"],
                       prepared["actor_w"], prepared["actor_b"], n_out=3)
    return out[:B]


if __name__ == "__main__":
    B, C, H, W = 2, 4, 40, 40                     # 40 -> 17 -> 7 -> 2 spatial
    key = jax.random.PRNGKey(0)
    pkey, xkey = jax.random.split(key)
    params = init_dqn_params(pkey, H, W)
    prepared = prepare_params(params, H, W)       # one-time weight prep
    x = jax.random.normal(xkey, (B, C, H, W), jnp.float32)

    out = jax.jit(dqn_forward)(prepared, x)
    jax.block_until_ready(out)
    assert out.shape == (B, 3) and out.dtype == jnp.float32
    print("KERNEL_OK")
</pallas_src>

<mosaic_0001>
module attributes {stable_mosaic.version = 11 : i64} {
  func.func @_gemm_bias_act_kernel(%arg0: i32, %arg1: memref<296x256xbf16, #tpu.memory_space<vmem>>, %arg2: memref<256x128xbf16, #tpu.memory_space<vmem>>, %arg3: memref<1x128xf32, #tpu.memory_space<vmem>>, %arg4: memref<296x128xbf16, #tpu.memory_space<vmem>>) attributes {dimension_semantics = [#tpu.dimension_semantics<parallel>], iteration_bounds = array<i64: 2>, scalar_prefetch = 0 : i64, scratch_operands = 0 : i64, tpu.core_type = #tpu.core_type<tc>, window_params = [{transform_indices = @transform_0, window_bounds = array<i64: 296, 256>}, {pipeline_mode = #tpu.pipeline_mode<synchronous>, transform_indices = @transform_1, window_bounds = array<i64: 256, 128>}, {pipeline_mode = #tpu.pipeline_mode<synchronous>, transform_indices = @transform_2, window_bounds = array<i64: 1, 128>}, {transform_indices = @transform_3, window_bounds = array<i64: 296, 128>}]} {
    %c0 = arith.constant 0 : index
    %c0_0 = arith.constant 0 : index
    %0 = vector.load %arg1[%c0, %c0_0] : memref<296x256xbf16, #tpu.memory_space<vmem>>, vector<296x256xbf16>
    %c0_1 = arith.constant 0 : index
    %c0_2 = arith.constant 0 : index
    %1 = vector.load %arg2[%c0_1, %c0_2] : memref<256x128xbf16, #tpu.memory_space<vmem>>, vector<256x128xbf16>
    %cst = arith.constant dense<0.000000e+00> : vector<296x128xf32>
    %2 = tpu.matmul %0, %1, %cst {dimension_numbers = #tpu.dot_dimension_numbers<[1], [0], [0], [1], [0, 0, 1, 1], [], []>} : vector<296x256xbf16>, vector<256x128xbf16>, vector<296x128xf32> -> vector<296x128xf32>
    %c0_3 = arith.constant 0 : index
    %c0_4 = arith.constant 0 : index
    %3 = vector.load %arg3[%c0_3, %c0_4] : memref<1x128xf32, #tpu.memory_space<vmem>>, vector<1x128xf32>
    %4 = vector.broadcast %3 : vector<1x128xf32> to vector<296x128xf32>
    %5 = arith.addf %2, %4 : vector<296x128xf32>
    %cst_5 = arith.constant 0.000000e+00 : f32
    %6 = vector.broadcast %cst_5 : f32 to vector<296x128xf32>
    %7 = arith.maximumf %5, %6 : vector<296x128xf32>
    %8 = arith.truncf %7 : vector<296x128xf32> to vector<296x128xbf16>
    %c0_6 = arith.constant 0 : index
    %c0_7 = arith.constant 0 : index
    %9 = vector.load %arg4[%c0_6, %c0_7] : memref<296x128xbf16, #tpu.memory_space<vmem>>, vector<296x128xbf16>
    tpu.vector_store %arg4[%c0_6, %c0_7], %8 {strides = array<i32>} : memref<296x128xbf16, #tpu.memory_space<vmem>>, vector<296x128xbf16>,
    return
  }
  func.func @transform_0(%arg0: i32) -> (i32, i32) {
    %c0_i32 = arith.constant 0 : i32
    %c0_i32_0 = arith.constant 0 : i32
    return %arg0, %c0_i32 : i32, i32
  }
  func.func @transform_1(%arg0: i32) -> (i32, i32) {
    %c0_i32 = arith.constant 0 : i32
    %c0_i32_0 = arith.constant 0 : i32
    %c0_i32_1 = arith.constant 0 : i32
    return %c0_i32, %c0_i32_0 : i32, i32
  }
  func.func @transform_2(%arg0: i32) -> (i32, i32) {
    %c0_i32 = arith.constant 0 : i32
    %c0_i32_0 = arith.constant 0 : i32
    %c0_i32_1 = arith.constant 0 : i32
    return %c0_i32, %c0_i32_0 : i32, i32
  }
  func.func @transform_3(%arg0: i32) -> (i32, i32) {
    %c0_i32 = arith.constant 0 : i32
    %c0_i32_0 = arith.constant 0 : i32
    return %arg0, %c0_i32 : i32, i32
  }
}

module attributes {stable_mosaic.version = 11 : i64} {
  func.func @_gemm_bias_act_kernel(%arg0: i32, %arg1: memref<104x896xbf16, #tpu.memory_space<vmem>>, %arg2: memref<896x128xbf16, #tpu.memory_space<vmem>>, %arg3: memref<1x128xf32, #tpu.memory_space<vmem>>, %arg4: memref<104x128xbf16, #tpu.memory_space<vmem>>) attributes {dimension_semantics = [#tpu.dimension_semantics<parallel>], iteration_bounds = array<i64: 1>, scalar_prefetch = 0 : i64, scratch_operands = 0 : i64, tpu.core_type = #tpu.core_type<tc>, window_params = [{transform_indices = @transform_0, window_bounds = array<i64: 104, 896>}, {pipeline_mode = #tpu.pipeline_mode<synchronous>, transform_indices = @transform_1, window_bounds = array<i64: 896, 128>}, {pipeline_mode = #tpu.pipeline_mode<synchronous>, transform_indices = @transform_2, window_bounds = array<i64: 1, 128>}, {transform_indices = @transform_3, window_bounds = array<i64: 104, 128>}]} {
    %c0 = arith.constant 0 : index
    %c0_0 = arith.constant 0 : index
    %0 = vector.load %arg1[%c0, %c0_0] : memref<104x896xbf16, #tpu.memory_space<vmem>>, vector<104x896xbf16>
    %c0_1 = arith.constant 0 : index
    %c0_2 = arith.constant 0 : index
    %1 = vector.load %arg2[%c0_1, %c0_2] : memref<896x128xbf16, #tpu.memory_space<vmem>>, vector<896x128xbf16>
    %cst = arith.constant dense<0.000000e+00> : vector<104x128xf32>
    %2 = tpu.matmul %0, %1, %cst {dimension_numbers = #tpu.dot_dimension_numbers<[1], [0], [0], [1], [0, 0, 1, 1], [], []>} : vector<104x896xbf16>, vector<896x128xbf16>, vector<104x128xf32> -> vector<104x128xf32>
    %c0_3 = arith.constant 0 : index
    %c0_4 = arith.constant 0 : index
    %3 = vector.load %arg3[%c0_3, %c0_4] : memref<1x128xf32, #tpu.memory_space<vmem>>, vector<1x128xf32>
    %4 = vector.broadcast %3 : vector<1x128xf32> to vector<104x128xf32>
    %5 = arith.addf %2, %4 : vector<104x128xf32>
    %cst_5 = arith.constant 0.000000e+00 : f32
    %6 = vector.broadcast %cst_5 : f32 to vector<104x128xf32>
    %7 = arith.maximumf %5, %6 : vector<104x128xf32>
    %8 = arith.truncf %7 : vector<104x128xf32> to vector<104x128xbf16>
    %c0_6 = arith.constant 0 : index
    %c0_7 = arith.constant 0 : index
    %9 = vector.load %arg4[%c0_6, %c0_7] : memref<104x128xbf16, #tpu.memory_space<vmem>>, vector<104x128xbf16>
    tpu.vector_store %arg4[%c0_6, %c0_7], %8 {strides = array<i32>} : memref<104x128xbf16, #tpu.memory_space<vmem>>, vector<104x128xbf16>,
    return
  }
  func.func @transform_0(%arg0: i32) -> (i32, i32) {
    %c0_i32 = arith.constant 0 : i32
    %c0_i32_0 = arith.constant 0 : i32
    return %arg0, %c0_i32 : i32, i32
  }
  func.func @transform_1(%arg0: i32) -> (i32, i32) {
    %c0_i32 = arith.constant 0 : i32
    %c0_i32_0 = arith.constant 0 : i32
    %c0_i32_1 = arith.constant 0 : i32
    return %c0_i32, %c0_i32_0 : i32, i32
  }
  func.func @transform_2(%arg0: i32) -> (i32, i32) {
    %c0_i32 = arith.constant 0 : i32
    %c0_i32_0 = arith.constant 0 : i32
    %c0_i32_1 = arith.constant 0 : i32
    return %c0_i32, %c0_i32_0 : i32, i32
  }
  func.func @transform_3(%arg0: i32) -> (i32, i32) {
    %c0_i32 = arith.constant 0 : i32
    %c0_i32_0 = arith.constant 0 : i32
    return %arg0, %c0_i32 : i32, i32
  }
}

module attributes {stable_mosaic.version = 11 : i64} {
  func.func @_head_kernel(%arg0: i32, %arg1: memref<8x512xbf16, #tpu.memory_space<vmem>>, %arg2: memref<512x512xbf16, #tpu.memory_space<vmem>>, %arg3: memref<1x512xf32, #tpu.memory_space<vmem>>, %arg4: memref<512x128xbf16, #tpu.memory_space<vmem>>, %arg5: memref<1x128xf32, #tpu.memory_space<vmem>>, %arg6: memref<8x128xf32, #tpu.memory_space<vmem>>) attributes {dimension_semantics = [#tpu.dimension_semantics<parallel>], iteration_bounds = array<i64: 1>, scalar_prefetch = 0 : i64, scratch_operands = 0 : i64, tpu.core_type = #tpu.core_type<tc>, window_params = [{transform_indices = @transform_0, window_bounds = array<i64: 8, 512>}, {pipeline_mode = #tpu.pipeline_mode<synchronous>, transform_indices = @transform_1, window_bounds = array<i64: 512, 512>}, {pipeline_mode = #tpu.pipeline_mode<synchronous>, transform_indices = @transform_2, window_bounds = array<i64: 1, 512>}, {pipeline_mode = #tpu.pipeline_mode<synchronous>, transform_indices = @transform_3, window_bounds = array<i64: 512, 128>}, {pipeline_mode = #tpu.pipeline_mode<synchronous>, transform_indices = @transform_4, window_bounds = array<i64: 1, 128>}, {transform_indices = @transform_5, window_bounds = array<i64: 8, 128>}]} {
    %c0 = arith.constant 0 : index
    %c0_0 = arith.constant 0 : index
    %0 = vector.load %arg1[%c0, %c0_0] : memref<8x512xbf16, #tpu.memory_space<vmem>>, vector<8x512xbf16>
    %c0_1 = arith.constant 0 : index
    %c0_2 = arith.constant 0 : index
    %1 = vector.load %arg2[%c0_1, %c0_2] : memref<512x512xbf16, #tpu.memory_space<vmem>>, vector<512x512xbf16>
    %cst = arith.constant dense<0.000000e+00> : vector<8x512xf32>
    %2 = tpu.matmul %0, %1, %cst {dimension_numbers = #tpu.dot_dimension_numbers<[1], [0], [0], [1], [0, 0, 1, 1], [], []>} : vector<8x512xbf16>, vector<512x512xbf16>, vector<8x512xf32> -> vector<8x512xf32>
    %c0_3 = arith.constant 0 : index
    %c0_4 = arith.constant 0 : index
    %3 = vector.load %arg3[%c0_3, %c0_4] : memref<1x512xf32, #tpu.memory_space<vmem>>, vector<1x512xf32>
    %4 = vector.broadcast %3 : vector<1x512xf32> to vector<8x512xf32>
    %5 = arith.addf %2, %4 : vector<8x512xf32>
    %cst_5 = arith.constant 0.000000e+00 : f32
    %6 = vector.broadcast %cst_5 : f32 to vector<8x512xf32>
    %7 = arith.maximumf %5, %6 : vector<8x512xf32>
    %8 = arith.truncf %7 : vector<8x512xf32> to vector<8x512xbf16>
    %c0_6 = arith.constant 0 : index
    %c0_7 = arith.constant 0 : index
    %9 = vector.load %arg4[%c0_6, %c0_7] : memref<512x128xbf16, #tpu.memory_space<vmem>>, vector<512x128xbf16>
    %cst_8 = arith.constant dense<0.000000e+00> : vector<8x128xf32>
    %10 = tpu.matmul %8, %9, %cst_8 {dimension_numbers = #tpu.dot_dimension_numbers<[1], [0], [0], [1], [0, 0, 1, 1], [], []>} : vector<8x512xbf16>, vector<512x128xbf16>, vector<8x128xf32> -> vector<8x128xf32>
    %c0_9 = arith.constant 0 : index
    %c0_10 = arith.constant 0 : index
    %11 = vector.load %arg5[%c0_9, %c0_10] : memref<1x128xf32, #tpu.memory_space<vmem>>, vector<1x128xf32>
    %12 = vector.broadcast %11 : vector<1x128xf32> to vector<8x128xf32>
    %13 = arith.addf %10, %12 : vector<8x128xf32>
    %c0_11 = arith.constant 0 : index
    %c0_12 = arith.constant 0 : index
    %14 = vector.load %arg6[%c0_11, %c0_12] : memref<8x128xf32, #tpu.memory_space<vmem>>, vector<8x128xf32>
    tpu.vector_store %arg6[%c0_11, %c0_12], %13 {strides = array<i32>} : memref<8x128xf32, #tpu.memory_space<vmem>>, vector<8x128xf32>,
    return
  }
  func.func @transform_0(%arg0: i32) -> (i32, i32) {
    %c0_i32 = arith.constant 0 : i32
    %c0_i32_0 = arith.constant 0 : i32
    return %arg0, %c0_i32 : i32, i32
  }
  func.func @transform_1(%arg0: i32) -> (i32, i32) {
    %c0_i32 = arith.constant 0 : i32
    %c0_i32_0 = arith.constant 0 : i32
    %c0_i32_1 = arith.constant 0 : i32
    return %c0_i32, %c0_i32_0 : i32, i32
  }
  func.func @transform_2(%arg0: i32) -> (i32, i32) {
    %c0_i32 = arith.constant 0 : i32
    %c0_i32_0 = arith.constant 0 : i32
    %c0_i32_1 = arith.constant 0 : i32
    return %c0_i32, %c0_i32_0 : i32, i32
  }
  func.func @transform_3(%arg0: i32) -> (i32, i32) {
    %c0_i32 = arith.constant 0 : i32
    %c0_i32_0 = arith.constant 0 : i32
    %c0_i32_1 = arith.constant 0 : i32
    return %c0_i32, %c0_i32_0 : i32, i32
  }
  func.func @transform_4(%arg0: i32) -> (i32, i32) {
    %c0_i32 = arith.constant 0 : i32
    %c0_i32_0 = arith.constant 0 : i32
    %c0_i32_1 = arith.constant 0 : i32
    return %c0_i32, %c0_i32_0 : i32, i32
  }
  func.func @transform_5(%arg0: i32) -> (i32, i32) {
    %c0_i32 = arith.constant 0 : i32
    %c0_i32_0 = arith.constant 0 : i32
    return %arg0, %c0_i32 : i32, i32
  }
}

module attributes {stable_mosaic.version = 11 : i64} {
  func.func @_gemm_bias_act_kernel(%arg0: i32, %arg1: memref<32x1024xbf16, #tpu.memory_space<vmem>>, %arg2: memref<1024x128xbf16, #tpu.memory_space<vmem>>, %arg3: memref<1x128xf32, #tpu.memory_space<vmem>>, %arg4: memref<32x128xbf16, #tpu.memory_space<vmem>>) attributes {dimension_semantics = [#tpu.dimension_semantics<parallel>], iteration_bounds = array<i64: 1>, scalar_prefetch = 0 : i64, scratch_operands = 0 : i64, tpu.core_type = #tpu.core_type<tc>, window_params = [{transform_indices = @transform_0, window_bounds = array<i64: 32, 1024>}, {pipeline_mode = #tpu.pipeline_mode<synchronous>, transform_indices = @transform_1, window_bounds = array<i64: 1024, 128>}, {pipeline_mode = #tpu.pipeline_mode<synchronous>, transform_indices = @transform_2, window_bounds = array<i64: 1, 128>}, {transform_indices = @transform_3, window_bounds = array<i64: 32, 128>}]} {
    %c0 = arith.constant 0 : index
    %c0_0 = arith.constant 0 : index
    %0 = vector.load %arg1[%c0, %c0_0] : memref<32x1024xbf16, #tpu.memory_space<vmem>>, vector<32x1024xbf16>
    %c0_1 = arith.constant 0 : index
    %c0_2 = arith.constant 0 : index
    %1 = vector.load %arg2[%c0_1, %c0_2] : memref<1024x128xbf16, #tpu.memory_space<vmem>>, vector<1024x128xbf16>
    %cst = arith.constant dense<0.000000e+00> : vector<32x128xf32>
    %2 = tpu.matmul %0, %1, %cst {dimension_numbers = #tpu.dot_dimension_numbers<[1], [0], [0], [1], [0, 0, 1, 1], [], []>} : vector<32x1024xbf16>, vector<1024x128xbf16>, vector<32x128xf32> -> vector<32x128xf32>
    %c0_3 = arith.constant 0 : index
    %c0_4 = arith.constant 0 : index
    %3 = vector.load %arg3[%c0_3, %c0_4] : memref<1x128xf32, #tpu.memory_space<vmem>>, vector<1x128xf32>
    %4 = vector.broadcast %3 : vector<1x128xf32> to vector<32x128xf32>
    %5 = arith.addf %2, %4 : vector<32x128xf32>
    %cst_5 = arith.constant 0.000000e+00 : f32
    %6 = vector.broadcast %cst_5 : f32 to vector<32x128xf32>
    %7 = arith.maximumf %5, %6 : vector<32x128xf32>
    %8 = arith.truncf %7 : vector<32x128xf32> to vector<32x128xbf16>
    %c0_6 = arith.constant 0 : index
    %c0_7 = arith.constant 0 : index
    %9 = vector.load %arg4[%c0_6, %c0_7] : memref<32x128xbf16, #tpu.memory_space<vmem>>, vector<32x128xbf16>
    tpu.vector_store %arg4[%c0_6, %c0_7], %8 {strides = array<i32>} : memref<32x128xbf16, #tpu.memory_space<vmem>>, vector<32x128xbf16>,
    return
  }
  func.func @transform_0(%arg0: i32) -> (i32, i32) {
    %c0_i32 = arith.constant 0 : i32
    %c0_i32_0 = arith.constant 0 : i32
    return %arg0, %c0_i32 : i32, i32
  }
  func.func @transform_1(%arg0: i32) -> (i32, i32) {
    %c0_i32 = arith.constant 0 : i32
    %c0_i32_0 = arith.constant 0 : i32
    %c0_i32_1 = arith.constant 0 : i32
    return %c0_i32, %c0_i32_0 : i32, i32
  }
  func.func @transform_2(%arg0: i32) -> (i32, i32) {
    %c0_i32 = arith.constant 0 : i32
    %c0_i32_0 = arith.constant 0 : i32
    %c0_i32_1 = arith.constant 0 : i32
    return %c0_i32, %c0_i32_0 : i32, i32
  }
  func.func @transform_3(%arg0: i32) -> (i32, i32) {
    %c0_i32 = arith.constant 0 : i32
    %c0_i32_0 = arith.constant 0 : i32
    return %arg0, %c0_i32 : i32, i32
  }
}

</mosaic_0001>

<llo_original>
// kernel: dqn_forward.4
$region0: #{dqn_forward.4}
  #allocation0 [shape = 'u32[]', space=smem, size = 0x4, offset = 0x4, fixed_abs, tag = 'smem constant byte address 0x4 - core index']
  #allocation1 [shape = 'u32[144,128]{1,0:T(1,128)}', space=vmem, size = 0x12000, scoped, tag = 'internal scratch']
  %s0 = inlined_call_operand.vmem [shape: bf16[592,256], index: 0, kind: input, shape index: {}]
  %s1 = inlined_call_operand.vmem [shape: bf16[256,128], index: 1, kind: input, shape index: {}]
  %s2 = inlined_call_operand.vmem [shape: f32[1,128], index: 2, kind: input, shape index: {}]
  %s3 = inlined_call_operand.vmem [shape: bf16[592,128], index: 3, kind: output, shape index: {}]
  %s4 = sld [smem:[#allocation0]]
  $region45: #{dqn_forward.4} parent=0
    _
  %s6 = ssub.s32 1, %s4
  %s7 = scalar_select 0, %s6, %s4
  loop: start=0, step=1, limit=4
  $region2: #{dqn_forward.4} parent=0 // loop_pre_header
    _
  $region3: #{dqn_forward.4} parent=0 // loop_header
    %s9 = sphi 0, %s13
    %p10 = scmp.ge.s32.totalorder %s9, 4
    %s19 = sphi 0, %s21
    %s22 = sphi 0, %s19
    %s23 = sphi 0, %s22
    %s39 = sphi 0, %s23
    %s43 = sphi 0, %s43
    %s45 = sphi 0, %s43
    %s46 = sphi 0, %s45
    %s60 = sphi 0, %s46
    %s64 = sphi 0, %s64
    %s66 = sphi 0, %s64
    %s67 = sphi 0, %s66
    %s81 = sphi 0, %s67
    %s87 = sphi 0, %s89
    %s90 = sphi 0, %s87
    %s91 = sphi 0, %s90
    %s107 = sphi 0, %s91
  $region4: #{dqn_forward.4} parent=0 // loop_header_branch
    %12 = sbr.rel (%p10) target = $region8
  $region5: #{dqn_forward.4} parent=0 // loop_body
    %s14 = ssub.s32 %s9, 1
    %s15 = ssub.s32 %s9, 2
    %s16 = sadd.s32 %s9, 1
    %s17 = ssub.s32 %s9, %s16
    %p18 = scmp.eq.s32.totalorder %s17, 0
    %s20 = sadd.s32 %s19, 1
    %s21 = scalar_select %p18, %s19, %s20
    %p24 = pneg %p18
    %p25 = scmp.eq.s32.totalorder %s9, 1
    %p26 = por %p24, %p25
    %p27 = scmp.ne.s32.totalorder %s19, %s22
    %p28 = scmp.eq.s32.totalorder %s9, 0
    %p29 = por %p27, %p28
    %p30 = scmp.ne.s32.totalorder %s19, %s22
    %p31 = scmp.eq.s32.totalorder %s14, 1
    %p32 = por %p30, %p31
    %p33 = scmp.ne.s32.totalorder %s22, %s23
    %p34 = scmp.eq.s32.totalorder %s14, 0
    %p35 = por %p33, %p34
    %p36 = scmp.ne.s32.totalorder %s22, %s23
    %p37 = scmp.eq.s32.totalorder %s15, 1
    %p38 = por %p36, %p37
    %p40 = scmp.ne.s32.totalorder %s23, %s39
    %p41 = scmp.eq.s32.totalorder %s15, 0
    %p42 = por %p40, %p41
    %s44 = sadd.s32 %s43, 1
    %p47 = scmp.eq.s32.totalorder %s9, 1
    %p48 = scmp.ne.s32.totalorder %s43, %s45
    %p49 = scmp.eq.s32.totalorder %s9, 0
    %p50 = por %p48, %p49
    %p51 = scmp.ne.s32.totalorder %s43, %s45
    %p52 = scmp.eq.s32.totalorder %s14, 1
    %p53 = por %p51, %p52
    %p54 = scmp.ne.s32.totalorder %s45, %s46
    %p55 = scmp.eq.s32.totalorder %s14, 0
    %p56 = por %p54, %p55
    %p57 = scmp.ne.s32.totalorder %s45, %s46
    %p58 = scmp.eq.s32.totalorder %s15, 1
    %p59 = por %p57, %p58
    %p61 = scmp.ne.s32.totalorder %s46, %s60
    %p62 = scmp.eq.s32.totalorder %s15, 0
    %p63 = por %p61, %p62
    %s65 = sadd.s32 %s64, 1
    %p68 = scmp.eq.s32.totalorder %s9, 1
    %p69 = scmp.ne.s32.totalorder %s64, %s66
    %p70 = scmp.eq.s32.totalorder %s9, 0
    %p71 = por %p69, %p70
    %p72 = scmp.ne.s32.totalorder %s64, %s66
    %p73 = scmp.eq.s32.totalorder %s14, 1
    %p74 = por %p72, %p73
    %p75 = scmp.ne.s32.totalorder %s66, %s67
    %p76 = scmp.eq.s32.totalorder %s14, 0
    %p77 = por %p75, %p76
    %p78 = scmp.ne.s32.totalorder %s66, %s67
    %p79 = scmp.eq.s32.totalorder %s15, 1
    %p80 = por %p78, %p79
    %p82 = scmp.ne.s32.totalorder %s67, %s81
    %p83 = scmp.eq.s32.totalorder %s15, 0
    %p84 = por %p82, %p83
    %s85 = ssub.s32 %s9, %s16
    %p86 = scmp.eq.s32.totalorder %s85, 0
    %s88 = sadd.s32 %s87, 1
    %s89 = scalar_select %p86, %s87, %s88
    %p92 = pneg %p86
    %p93 = scmp.eq.s32.totalorder %s9, 1
    %p94 = por %p92, %p93
    %p95 = scmp.ne.s32.totalorder %s87, %s90
    %p96 = scmp.eq.s32.totalorder %s9, 0
    %p97 = por %p95, %p96
    %p98 = scmp.ne.s32.totalorder %s87, %s90
    %p99 = scmp.eq.s32.totalorder %s14, 1
    %p100 = por %p98, %p99
    %p101 = scmp.ne.s32.totalorder %s90, %s91
    %p102 = scmp.eq.s32.totalorder %s14, 0
    %p103 = por %p101, %p102
    %p104 = scmp.ne.s32.totalorder %s90, %s91
    %p105 = scmp.eq.s32.totalorder %s15, 1
    %p106 = por %p104, %p105
    %p108 = scmp.ne.s32.totalorder %s91, %s107
    %p109 = scmp.eq.s32.totalorder %s15, 0
    %p110 = por %p108, %p109
    %p111 = scmp.le.s32.totalorder 1, %s9
    %p112 = scmp.lt.s32.totalorder %s9, 3
    %p113 = pnand %p111, %p112
    %p114 = pneg %p113
    // Predicated region
    $region9: #{dqn_forward.4} parent=5 // pred_check
      _
    $region10: #{dqn_forward.4} parent=5 // pred_check_branch
      %116 = sbr.rel (%p113) target = $region12
    $region11: #{dqn_forward.4} parent=5 // pred_region
      %s117 = ssub.s32 %s9, 1
      // Predicated region
      $region13: #{dqn_forward.4} parent=11 // pred_check
        %p118 = pneg %p56
      $region14: #{dqn_forward.4} parent=11 // pred_check_branch
        %120 = sbr.rel (%p118) target = $region16
      $region15: #{dqn_forward.4} parent=11 // pred_region
        _
      $region16: #{dqn_forward.4} parent=11 // pred_fallthru
        _
      // Predicated region
      $region17: #{dqn_forward.4} parent=11 // pred_check
        %p121 = pneg %p77
      $region18: #{dqn_forward.4} parent=11 // pred_check_branch
        %123 = sbr.rel (%p121) target = $region20
      $region19: #{dqn_forward.4} parent=11 // pred_region
        _
      $region20: #{dqn_forward.4} parent=11 // pred_fallthru
        _
    $region12: #{dqn_forward.4} parent=5 // pred_fallthru
      _
    %p124 = scmp.lt.s32.totalorder %s9, 2
    // Predicated region
    $region21: #{dqn_forward.4} parent=5 // pred_check
      %p125 = pneg %p124
    $region22: #{dqn_forward.4} parent=5 // pred_check_branch
      %127 = sbr.rel (%p125) target = $region24
    $region23: #{dqn_forward.4} parent=5 // pred_region
      // Predicated region
      $region25: #{dqn_forward.4} parent=23 // pred_check
        %p128 = pneg %p29
      $region26: #{dqn_forward.4} parent=23 // pred_check_branch
        %130 = sbr.rel (%p128) target = $region28
      $region27: #{dqn_forward.4} parent=23 // pred_region
        %s131 = smul.u32 37, %s9
        %p132 = scmp.lt.s32.totalorder %s131, 73
        %s133 = scalar_select %p132, %s131, 73
        %s134 = smul.addr %s133, 2
        %s135 = smul.addr %s134, 4
        %s136 = scalar_lea.vmem %s0, %s135
        %s137 = smul.u32 37, %s9
      $region28: #{dqn_forward.4} parent=23 // pred_fallthru
        _
    $region24: #{dqn_forward.4} parent=5 // pred_fallthru
      _
    %p138 = scmp.le.s32.totalorder 1, %s9
    %p139 = scmp.lt.s32.totalorder %s9, 3
    %p140 = pnand %p138, %p139
    %p141 = pneg %p140
    // Predicated region
    $region29: #{dqn_forward.4} parent=5 // pred_check
      _
    $region30: #{dqn_forward.4} parent=5 // pred_check_branch
      %143 = sbr.rel (%p140) target = $region32
    $region31: #{dqn_forward.4} parent=5 // pred_region
      %s144 = ssub.s32 %s9, 1
      %s145 = smul.u32 37, %s14
      %p146 = scmp.lt.s32.totalorder %s145, 73
      %s147 = scalar_select %p146, %s145, 73
      %s148 = smul.addr %s147, 2
      %s149 = smul.addr %s148, 4
      %s150 = scalar_lea.vmem %s0, %s149
      %p151 = pneg %p35
      %p152 = pneg %p32
      %p153 = pneg %p56
      %p154 = pneg %p53
      %p155 = pneg %p77
      %p156 = pneg %p74
      %p157 = pneg %p103
      %p158 = pneg %p100
      %s159 = smul.u32 37, %s14
      %p160 = scmp.lt.s32.totalorder %s159, 73
      %s161 = scalar_select %p160, %s159, 73
      %s162 = smul.addr %s161, 4
      %s163 = scalar_lea.vmem %s3, %s162
      %s164 = smul.u32 37, %s14
      %p165 = scmp.lt.s32.totalorder %s164, 73
      %s166 = scalar_select %p165, %s164, 73
      %s167 = smul.addr %s166, 2
      %s168 = smul.addr %s167, 4
      %s169 = scalar_lea.vmem %s0, %s168
      %s170 = smul.u32 37, %s14
      %s171 = smul.u32 37, %s14
      %p172 = scmp.lt.s32.totalorder %s171, 73
      %s173 = scalar_select %p172, %s171, 73
      %s174 = smul.addr %s173, 4
      %s175 = scalar_lea.vmem %s3, %s174
      %s176 = smul.u32 37, %s14
      %v178 = vld [vmem:[%s169] sm:$0xff]
      %v179 = vld [vmem:[%s169 + $0x8] sm:$0xff]
      %v180 = vld [vmem:[%s169 + $0x10] sm:$0xff]
      %v181 = vld [vmem:[%s169 + $0x18] sm:$0xff]
      %v182 = vld [vmem:[%s169 + $0x20] sm:$0xff]
      %v183 = vld [vmem:[%s169 + $0x28] sm:$0xff]
      %v184 = vld [vmem:[%s169 + $0x30] sm:$0xff]
      %v185 = vld [vmem:[%s169 + $0x38] sm:$0xff]
      %v186 = vld [vmem:[%s169 + $0x40] sm:$0xff]
      %v187 = vld [vmem:[%s169 + $0x48] sm:$0xff]
      %v188 = vld [vmem:[%s169 + $0x50] sm:$0xff]
      %v189 = vld [vmem:[%s169 + $0x58] sm:$0xff]
      %v190 = vld [vmem:[%s169 + $0x60] sm:$0xff]
      %v191 = vld [vmem:[%s169 + $0x68] sm:$0xff]
      %v192 = vld [vmem:[%s169 + $0x70] sm:$0xff]
      %v193 = vld [vmem:[%s169 + $0x78] sm:$0xff]
      %v194 = vld [vmem:[%s169 + $0x80] sm:$0xff]
      %v195 = vld [vmem:[%s169 + $0x88] sm:$0xff]
      %v196 = vld [vmem:[%s169 + $0x90] sm:$0xff]
      %v197 = vld [vmem:[%s169 + $0x98] sm:$0xff]
      %v198 = vld [vmem:[%s169 + $0xa0] sm:$0xff]
      %v199 = vld [vmem:[%s169 + $0xa8] sm:$0xff]
      %v200 = vld [vmem:[%s169 + $0xb0] sm:$0xff]
      %v201 = vld [vmem:[%s169 + $0xb8] sm:$0xff]
      %v202 = vld [vmem:[%s169 + $0xc0] sm:$0xff]
      %v203 = vld [vmem:[%s169 + $0xc8] sm:$0xff]
      %v204 = vld [vmem:[%s169 + $0xd0] sm:$0xff]
      %v205 = vld [vmem:[%s169 + $0xd8] sm:$0xff]
      %v206 = vld [vmem:[%s169 + $0xe0] sm:$0xff]
      %v207 = vld [vmem:[%s169 + $0xe8] sm:$0xff]
      %v208 = vld [vmem:[%s169 + $0xf0] sm:$0xff]
      %v209 = vld [vmem:[%s169 + $0xf8] sm:$0xff]
      %v210 = vld [vmem:[%s169 + $0x100] sm:$0xff]
      %v211 = vld [vmem:[%s169 + $0x108] sm:$0xff]
      %v212 = vld [vmem:[%s169 + $0x110] sm:$0xff]
      %v213 = vld [vmem:[%s169 + $0x118] sm:$0xff]
      %v214 = vld [vmem:[%s169 + $0x120] sm:$0xff]
      %v215 = vld [vmem:[%s1] sm:$0xf]
      %v216 = vld [vmem:[%s1 + $0x4] sm:$0xf]
      %v217 = vld [vmem:[%s1 + $0x8] sm:$0xf]
      %v218 = vld [vmem:[%s1 + $0xc] sm:$0xf]
      %v219 = vld [vmem:[%s1 + $0x10] sm:$0xf]
      %v220 = vld [vmem:[%s1 + $0x14] sm:$0xf]
      %v221 = vld [vmem:[%s1 + $0x18] sm:$0xf]
      %v222 = vld [vmem:[%s1 + $0x1c] sm:$0xf]
      %v223 = vld [vmem:[%s1 + $0x20] sm:$0xf]
      %v224 = vld [vmem:[%s1 + $0x24] sm:$0xf]
      %v225 = vld [vmem:[%s1 + $0x28] sm:$0xf]
      %v226 = vld [vmem:[%s1 + $0x2c] sm:$0xf]
      %v227 = vld [vmem:[%s1 + $0x30] sm:$0xf]
      %v228 = vld [vmem:[%s1 + $0x34] sm:$0xf]
      %v229 = vld [vmem:[%s1 + $0x38] sm:$0xf]
      %v230 = vld [vmem:[%s1 + $0x3c] sm:$0xf]
      %v231 = vld [vmem:[%s1 + $0x40] sm:$0xf]
      %v232 = vld [vmem:[%s1 + $0x44] sm:$0xf]
      %v233 = vld [vmem:[%s1 + $0x48] sm:$0xf]
      %v234 = vld [vmem:[%s1 + $0x4c] sm:$0xf]
      %v235 = vld [vmem:[%s1 + $0x50] sm:$0xf]
      %v236 = vld [vmem:[%s1 + $0x54] sm:$0xf]
      %v237 = vld [vmem:[%s1 + $0x58] sm:$0xf]
      %v238 = vld [vmem:[%s1 + $0x5c] sm:$0xf]
      %v239 = vld [vmem:[%s1 + $0x60] sm:$0xf]
      %v240 = vld [vmem:[%s1 + $0x64] sm:$0xf]
      %v241 = vld [vmem:[%s1 + $0x68] sm:$0xf]
      %v242 = vld [vmem:[%s1 + $0x6c] sm:$0xf]
      %v243 = vld [vmem:[%s1 + $0x70] sm:$0xf]
      %v244 = vld [vmem:[%s1 + $0x74] sm:$0xf]
      %v245 = vld [vmem:[%s1 + $0x78] sm:$0xf]
      %v246 = vld [vmem:[%s1 + $0x7c] sm:$0xf]
      %v247 = vld [vmem:[%s2] sm:$0x1]
      %v249 = vlaneseq
      %v250 = vshrl.u32 %v249, 7
      %v251 = vsub.s32 0, %v250
      %v252 = vrot.slane %v247, %v251
      %v291 = vunpack.c.l.b16 %v178
      %v292 = vunpack.c.h.b16 %v178
      %v293 = vunpack.c.l.b16 %v179
      %v294 = vunpack.c.h.b16 %v179
      %v295 = vunpack.c.l.b16 %v180
      %v296 = vunpack.c.h.b16 %v180
      %v297 = vunpack.c.l.b16 %v181
      %v298 = vunpack.c.h.b16 %v181
      %v299 = vunpack.c.l.b16 %v182
      %v300 = vunpack.c.h.b16 %v182
      %v301 = vunpack.c.l.b16 %v183
      %v302 = vunpack.c.h.b16 %v183
      %v303 = vunpack.c.l.b16 %v184
      %v304 = vunpack.c.h.b16 %v184
      %v305 = vunpack.c.l.b16 %v185
      %v306 = vunpack.c.h.b16 %v185
      %v307 = vunpack.c.l.b16 %v186
      %v308 = vunpack.c.h.b16 %v186
      %v309 = vunpack.c.l.b16 %v187
      %v310 = vunpack.c.h.b16 %v187
      %v311 = vunpack.c.l.b16 %v188
      %v312 = vunpack.c.h.b16 %v188
      %v313 = vunpack.c.l.b16 %v189
      %v314 = vunpack.c.h.b16 %v189
      %v315 = vunpack.c.l.b16 %v190
      %v316 = vunpack.c.h.b16 %v190
      %v317 = vunpack.c.l.b16 %v191
      %v318 = vunpack.c.h.b16 %v191
      %v319 = vunpack.c.l.b16 %v192
      %v320 = vunpack.c.h.b16 %v192
      %v321 = vunpack.c.l.b16 %v193
      %v322 = vunpack.c.h.b16 %v193
      %v323 = vunpack.c.l.b16 %v194
      %v324 = vunpack.c.h.b16 %v194
      %v325 = vunpack.c.l.b16 %v195
      %v326 = vunpack.c.h.b16 %v195
      %v327 = vunpack.c.l.b16 %v196
      %v328 = vunpack.c.h.b16 %v196
      %v329 = vunpack.c.l.b16 %v197
      %v330 = vunpack.c.h.b16 %v197
      %v331 = vunpack.c.l.b16 %v198
      %v332 = vunpack.c.h.b16 %v198
      %v333 = vunpack.c.l.b16 %v199
      %v334 = vunpack.c.h.b16 %v199
      %v335 = vunpack.c.l.b16 %v200
      %v336 = vunpack.c.h.b16 %v200
      %v337 = vunpack.c.l.b16 %v201
      %v338 = vunpack.c.h.b16 %v201
      %v339 = vunpack.c.l.b16 %v202
      %v340 = vunpack.c.h.b16 %v202
      %v341 = vunpack.c.l.b16 %v203
      %v342 = vunpack.c.h.b16 %v203
      %v343 = vunpack.c.l.b16 %v204
      %v344 = vunpack.c.h.b16 %v204
      %v345 = vunpack.c.l.b16 %v205
      %v346 = vunpack.c.h.b16 %v205
      %v347 = vunpack.c.l.b16 %v206
      %v348 = vunpack.c.h.b16 %v206
      %v349 = vunpack.c.l.b16 %v207
      %v350 = vunpack.c.h.b16 %v207
      %v351 = vunpack.c.l.b16 %v208
      %v352 = vunpack.c.h.b16 %v208
      %v353 = vunpack.c.l.b16 %v209
      %v354 = vunpack.c.h.b16 %v209
      %v355 = vunpack.c.l.b16 %v210
      %v356 = vunpack.c.h.b16 %v210
      %v357 = vunpack.c.l.b16 %v211
      %v358 = vunpack.c.h.b16 %v211
      %v359 = vunpack.c.l.b16 %v212
      %v360 = vunpack.c.h.b16 %v212
      %v361 = vunpack.c.l.b16 %v213
      %v362 = vunpack.c.h.b16 %v213
      %v363 = vunpack.c.l.b16 %v214
      %v364 = vunpack.c.h.b16 %v214
      %v365 = vpack.c.b16 %v293, %v291
      %v366 = vpack.c.b16 %v294, %v292
      %v367 = vpack.c.b16 %v297, %v295
      %v368 = vpack.c.b16 %v298, %v296
      %v369 = vpack.c.b16 %v301, %v299
      %v370 = vpack.c.b16 %v302, %v300
      %v371 = vpack.c.b16 %v305, %v303
      %v372 = vpack.c.b16 %v306, %v304
      %v373 = vpack.c.b16 %v309, %v307
      %v374 = vpack.c.b16 %v310, %v308
      %v375 = vpack.c.b16 %v313, %v311
      %v376 = vpack.c.b16 %v314, %v312
      %v377 = vpack.c.b16 %v317, %v315
      %v378 = vpack.c.b16 %v318, %v316
      %v379 = vpack.c.b16 %v321, %v319
      %v380 = vpack.c.b16 %v322, %v320
      %v381 = vpack.c.b16 %v325, %v323
      %v382 = vpack.c.b16 %v326, %v324
      %v383 = vpack.c.b16 %v329, %v327
      %v384 = vpack.c.b16 %v330, %v328
      %v385 = vpack.c.b16 %v333, %v331
      %v386 = vpack.c.b16 %v334, %v332
      %v387 = vpack.c.b16 %v337, %v335
      %v388 = vpack.c.b16 %v338, %v336
      %v389 = vpack.c.b16 %v341, %v339
      %v390 = vpack.c.b16 %v342, %v340
      %v391 = vpack.c.b16 %v345, %v343
      %v392 = vpack.c.b16 %v346, %v344
      %v393 = vpack.c.b16 %v349, %v347
      %v394 = vpack.c.b16 %v350, %v348
      %v395 = vpack.c.b16 %v353, %v351
      %v396 = vpack.c.b16 %v354, %v352
      %v397 = vpack.c.b16 %v357, %v355
      %v398 = vpack.c.b16 %v358, %v356
      %v399 = vpack.c.b16 %v361, %v359
      %v400 = vpack.c.b16 %v362, %v360
      %v401 = vpack.c.b16 %v363, %v363
      %v402 = vpack.c.b16 %v364, %v364
      %v473 = vunpack.c.l.b16 %v215
      %v474 = vunpack.c.l.b16 %v216
      %v475 = vunpack.c.l.b16 %v217
      %v476 = vunpack.c.l.b16 %v218
      %v477 = vunpack.c.l.b16 %v219
      %v478 = vunpack.c.l.b16 %v220
      %v479 = vunpack.c.l.b16 %v221
      %v480 = vunpack.c.l.b16 %v222
      %v481 = vunpack.c.l.b16 %v223
      %v482 = vunpack.c.l.b16 %v224
      %v483 = vunpack.c.l.b16 %v225
      %v484 = vunpack.c.l.b16 %v226
      %v485 = vunpack.c.l.b16 %v227
      %v486 = vunpack.c.l.b16 %v228
      %v487 = vunpack.c.l.b16 %v229
      %v488 = vunpack.c.l.b16 %v230
      %v489 = vunpack.c.l.b16 %v231
      %v490 = vunpack.c.l.b16 %v232
      %v491 = vunpack.c.l.b16 %v233
      %v492 = vunpack.c.l.b16 %v234
      %v493 = vunpack.c.l.b16 %v235
      %v494 = vunpack.c.l.b16 %v236
      %v495 = vunpack.c.l.b16 %v237
      %v496 = vunpack.c.l.b16 %v238
      %v497 = vunpack.c.l.b16 %v239
      %v498 = vunpack.c.l.b16 %v240
      %v499 = vunpack.c.l.b16 %v241
      %v500 = vunpack.c.l.b16 %v242
      %v501 = vunpack.c.l.b16 %v243
      %v502 = vunpack.c.l.b16 %v244
      %v503 = vunpack.c.l.b16 %v245
      %v504 = vunpack.c.l.b16 %v246
      %v505 = vpack.c.b16 %v474, %v473
      %v506 = vpack.c.b16 %v476, %v475
      %v507 = vpack.c.b16 %v478, %v477
      %v508 = vpack.c.b16 %v480, %v479
      %v509 = vpack.c.b16 %v482, %v481
      %v510 = vpack.c.b16 %v484, %v483
      %v511 = vpack.c.b16 %v486, %v485
      %v512 = vpack.c.b16 %v488, %v487
      %v513 = vpack.c.b16 %v490, %v489
      %v514 = vpack.c.b16 %v492, %v491
      %v515 = vpack.c.b16 %v494, %v493
      %v516 = vpack.c.b16 %v496, %v495
      %v517 = vpack.c.b16 %v498, %v497
      %v518 = vpack.c.b16 %v500, %v499
      %v519 = vpack.c.b16 %v502, %v501
      %v520 = vpack.c.b16 %v504, %v503
      %537 = vmatprep.subr.bf16.mxu0 0
      %538 = vmatpush1.bf16.msra.mxu0 %v512
      %539 = vmatprep.subr.bf16.mxu0 0
      %540 = vmatpush1.bf16.msra.mxu0 %v511
      %541 = vmatprep.subr.bf16.mxu0 0
      %542 = vmatpush1.bf16.msra.mxu0 %v510
      %543 = vmatprep.subr.bf16.mxu0 0
      %544 = vmatpush1.bf16.msra.mxu0 %v509
      %545 = vmatprep.subr.bf16.mxu0 0
      %546 = vmatpush1.bf16.msra.mxu0 %v508
      %547 = vmatprep.subr.bf16.mxu0 0
      %548 = vmatpush1.bf16.msra.mxu0 %v507
      %549 = vmatprep.subr.bf16.mxu0 0
      %550 = vmatpush1.bf16.msra.mxu0 %v506
      %551 = vmatprep.subr.bf16.mxu0 0
      %552 = vmatpush1.bf16.msra.mxu0 %v505
      %553 = vmatprep.subr.bf16.mxu0 0
      %554 = vmatpush2.bf16.msra.mxu0 %v520
      %555 = vmatprep.subr.bf16.mxu0 0
      %556 = vmatpush2.bf16.msra.mxu0 %v519
      %557 = vmatprep.subr.bf16.mxu0 0
      %558 = vmatpush2.bf16.msra.mxu0 %v518
      %559 = vmatprep.subr.bf16.mxu0 0
      %560 = vmatpush2.bf16.msra.mxu0 %v517
      %561 = vmatprep.subr.bf16.mxu0 0
      %562 = vmatpush2.bf16.msra.mxu0 %v516
      %563 = vmatprep.subr.bf16.mxu0 0
      %564 = vmatpush2.bf16.msra.mxu0 %v515
      %565 = vmatprep.subr.bf16.mxu0 0
      %566 = vmatpush2.bf16.msra.mxu0 %v514
      %567 = vmatprep.subr.bf16.mxu0 0
      %568 = vmatpush2.bf16.msra.mxu0 %v513
      %569 = vmatprep.mubr.bf16.mxu0 %v366
      %570 = vmatmul.mubr.bf16.gmra.mxu0 %v365
      %v571 = vpop.f32.mrf.mxu0
      %v572 = vadd.f32 %v252, %v571
      %v573 = vpop.f32.mrf.mxu0
      %v574 = vpop.f32.mrf.mxu0
      %v575 = vadd.f32 %v252, %v574
      %v576 = vpop.f32.mrf.mxu0
      %577 = vmatprep.mubr.bf16.mxu0 %v368
      %578 = vmatmul.mubr.bf16.gmra.mxu0 %v367
      %v579 = vpop.f32.mrf.mxu0
      %v580 = vadd.f32 %v252, %v579
      %v581 = vpop.f32.mrf.mxu0
      %v582 = vpop.f32.mrf.mxu0
      %v583 = vadd.f32 %v252, %v582
      %v584 = vpop.f32.mrf.mxu0
      %585 = vmatprep.mubr.bf16.mxu0 %v370
      %586 = vmatmul.mubr.bf16.gmra.mxu0 %v369
      %v587 = vpop.f32.mrf.mxu0
      %v588 = vadd.f32 %v252, %v587
      %v589 = vpop.f32.mrf.mxu0
      %v590 = vpop.f32.mrf.mxu0
      %v591 = vadd.f32 %v252, %v590
      %v592 = vpop.f32.mrf.mxu0
      %593 = vmatprep.mubr.bf16.mxu0 %v372
      %594 = vmatmul.mubr.bf16.gmra.mxu0 %v371
      %v595 = vpop.f32.mrf.mxu0
      %v596 = vadd.f32 %v252, %v595
      %v597 = vpop.f32.mrf.mxu0
      %v598 = vpop.f32.mrf.mxu0
      %v599 = vadd.f32 %v252, %v598
      %v600 = vpop.f32.mrf.mxu0
      %601 = vmatprep.mubr.bf16.mxu0 %v374
      %602 = vmatmul.mubr.bf16.gmra.mxu0 %v373
      %v603 = vpop.f32.mrf.mxu0
      %v604 = vadd.f32 %v252, %v603
      %v605 = vpop.f32.mrf.mxu0
      %v606 = vpop.f32.mrf.mxu0
      %v607 = vadd.f32 %v252, %v606
      %v608 = vpop.f32.mrf.mxu0
      %609 = vmatprep.mubr.bf16.mxu0 %v376
      %610 = vmatmul.mubr.bf16.gmra.mxu0 %v375
      %v611 = vpop.f32.mrf.mxu0
      %v612 = vadd.f32 %v252, %v611
      %v613 = vpop.f32.mrf.mxu0
      %v614 = vpop.f32.mrf.mxu0
      %v615 = vadd.f32 %v252, %v614
      %v616 = vpop.f32.mrf.mxu0
      %617 = vmatprep.mubr.bf16.mxu0 %v378
      %618 = vmatmul.mubr.bf16.gmra.mxu0 %v377
      %v619 = vpop.f32.mrf.mxu0
      %v620 = vadd.f32 %v252, %v619
      %v621 = vpop.f32.mrf.mxu0
      %v622 = vpop.f32.mrf.mxu0
      %v623 = vadd.f32 %v252, %v622
      %v624 = vpop.f32.mrf.mxu0
      %625 = vmatprep.mubr.bf16.mxu0 %v380
      %626 = vmatmul.mubr.bf16.gmra.mxu0 %v379
      %v627 = vpop.f32.mrf.mxu0
      %v628 = vadd.f32 %v252, %v627
      %v629 = vpop.f32.mrf.mxu0
      %v630 = vpop.f32.mrf.mxu0
      %v631 = vadd.f32 %v252, %v630
      %v632 = vpop.f32.mrf.mxu0
      %633 = vmatprep.mubr.bf16.mxu0 %v382
      %634 = vmatmul.mubr.bf16.gmra.mxu0 %v381
      %v635 = vpop.f32.mrf.mxu0
      %v636 = vadd.f32 %v252, %v635
      %v637 = vpop.f32.mrf.mxu0
      %v638 = vpop.f32.mrf.mxu0
      %v639 = vadd.f32 %v252, %v638
      %v640 = vpop.f32.mrf.mxu0
      %641 = vmatprep.mubr.bf16.mxu0 %v384
      %642 = vmatmul.mubr.bf16.gmra.mxu0 %v383
      %v643 = vpop.f32.mrf.mxu0
      %v644 = vadd.f32 %v252, %v643
      %v645 = vpop.f32.mrf.mxu0
      %v646 = vpop.f32.mrf.mxu0
      %v647 = vadd.f32 %v252, %v646
      %v648 = vpop.f32.mrf.mxu0
      %649 = vmatprep.mubr.bf16.mxu0 %v386
      %650 = vmatmul.mubr.bf16.gmra.mxu0 %v385
      %v651 = vpop.f32.mrf.mxu0
      %v652 = vadd.f32 %v252, %v651
      %v653 = vpop.f32.mrf.mxu0
      %v654 = vpop.f32.mrf.mxu0
      %v655 = vadd.f32 %v252, %v654
      %v656 = vpop.f32.mrf.mxu0
      %657 = vmatprep.mubr.bf16.mxu0 %v388
      %658 = vmatmul.mubr.bf16.gmra.mxu0 %v387
      %v659 = vpop.f32.mrf.mxu0
      %v660 = vadd.f32 %v252, %v659
      %v661 = vpop.f32.mrf.mxu0
      %v662 = vpop.f32.mrf.mxu0
      %v663 = vadd.f32 %v252, %v662
      %v664 = vpop.f32.mrf.mxu0
      %665 = vmatprep.mubr.bf16.mxu0 %v390
      %666 = vmatmul.mubr.bf16.gmra.mxu0 %v389
      %v667 = vpop.f32.mrf.mxu0
      %v668 = vadd.f32 %v252, %v667
      %v669 = vpop.f32.mrf.mxu0
      %v670 = vpop.f32.mrf.mxu0
      %v671 = vadd.f32 %v252, %v670
      %v672 = vpop.f32.mrf.mxu0
      %673 = vmatprep.mubr.bf16.mxu0 %v392
      %674 = vmatmul.mubr.bf16.gmra.mxu0 %v391
      %v675 = vpop.f32.mrf.mxu0
      %v676 = vadd.f32 %v252, %v675
      %v677 = vpop.f32.mrf.mxu0
      %v678 = vpop.f32.mrf.mxu0
      %v679 = vadd.f32 %v252, %v678
      %v680 = vpop.f32.mrf.mxu0
      %681 = vmatprep.mubr.bf16.mxu0 %v394
      %682 = vmatmul.mubr.bf16.gmra.mxu0 %v393
      %v683 = vpop.f32.mrf.mxu0
      %v684 = vadd.f32 %v252, %v683
      %v685 = vpop.f32.mrf.mxu0
      %v686 = vpop.f32.mrf.mxu0
      %v687 = vadd.f32 %v252, %v686
      %v688 = vpop.f32.mrf.mxu0
      %689 = vmatprep.mubr.bf16.mxu0 %v396
      %690 = vmatmul.mubr.bf16.gmra.mxu0 %v395
      %v691 = vpop.f32.mrf.mxu0
      %v692 = vadd.f32 %v252, %v691
      %v693 = vpop.f32.mrf.mxu0
      %v694 = vpop.f32.mrf.mxu0
      %v695 = vadd.f32 %v252, %v694
      %v696 = vpop.f32.mrf.mxu0
      %697 = vmatprep.mubr.bf16.mxu0 %v398
      %698 = vmatmul.mubr.bf16.gmra.mxu0 %v397
      %v699 = vpop.f32.mrf.mxu0
      %v700 = vadd.f32 %v252, %v699
      %v701 = vpop.f32.mrf.mxu0
      %v702 = vpop.f32.mrf.mxu0
      %v703 = vadd.f32 %v252, %v702
      %v704 = vpop.f32.mrf.mxu0
      %705 = vmatprep.mubr.bf16.mxu0 %v400
      %706 = vmatmul.mubr.bf16.gmra.mxu0 %v399
      %v707 = vpop.f32.mrf.mxu0
      %v708 = vadd.f32 %v252, %v707
      %v709 = vpop.f32.mrf.mxu0
      %v710 = vpop.f32.mrf.mxu0
      %v711 = vadd.f32 %v252, %v710
      %v712 = vpop.f32.mrf.mxu0
      %713 = vmatprep.mubr.bf16.mxu0 %v402
      %714 = vmatmul.mubr.bf16.gmra.mxu0 %v401
      %v715 = vpop.f32.mrf.mxu0
      %v716 = vadd.f32 %v252, %v715
      %v717 = vpop.f32.mrf.mxu0
      %v718 = vpop.f32.mrf.mxu0
      %v719 = vpop.f32.mrf.mxu0
      %720 = vdwg.mxu0
      %v721 = vmax.f32 %v572, 0.0
      %v722 = vmax.f32 %v575, 0.0
      %v723 = vmax.f32 %v580, 0.0
      %v724 = vmax.f32 %v583, 0.0
      %v725 = vmax.f32 %v588, 0.0
      %v726 = vmax.f32 %v591, 0.0
      %v727 = vmax.f32 %v596, 0.0
      %v728 = vmax.f32 %v599, 0.0
      %v729 = vmax.f32 %v604, 0.0
      %v730 = vmax.f32 %v607, 0.0
      %v731 = vmax.f32 %v612, 0.0
      %v732 = vmax.f32 %v615, 0.0
      %v733 = vmax.f32 %v620, 0.0
      %v734 = vmax.f32 %v623, 0.0
      %v735 = vmax.f32 %v628, 0.0
      %v736 = vmax.f32 %v631, 0.0
      %v737 = vmax.f32 %v636, 0.0
      %v738 = vmax.f32 %v639, 0.0
      %v739 = vmax.f32 %v644, 0.0
      %v740 = vmax.f32 %v647, 0.0
      %v741 = vmax.f32 %v652, 0.0
      %v742 = vmax.f32 %v655, 0.0
      %v743 = vmax.f32 %v660, 0.0
      %v744 = vmax.f32 %v663, 0.0
      %v745 = vmax.f32 %v668, 0.0
      %v746 = vmax.f32 %v671, 0.0
      %v747 = vmax.f32 %v676, 0.0
      %v748 = vmax.f32 %v679, 0.0
      %v749 = vmax.f32 %v684, 0.0
      %v750 = vmax.f32 %v687, 0.0
      %v751 = vmax.f32 %v692, 0.0
      %v752 = vmax.f32 %v695, 0.0
      %v753 = vmax.f32 %v700, 0.0
      %v754 = vmax.f32 %v703, 0.0
      %v755 = vmax.f32 %v708, 0.0
      %v756 = vmax.f32 %v711, 0.0
      %v757 = vmax.f32 %v716, 0.0
      %v758 = vpack.c.bf16 %v722, %v721
      %v759 = vpack.c.bf16 %v724, %v723
      %v760 = vpack.c.bf16 %v726, %v725
      %v761 = vpack.c.bf16 %v728, %v727
      %v762 = vpack.c.bf16 %v730, %v729
      %v763 = vpack.c.bf16 %v732, %v731
      %v764 = vpack.c.bf16 %v734, %v733
      %v765 = vpack.c.bf16 %v736, %v735
      %v766 = vpack.c.bf16 %v738, %v737
      %v767 = vpack.c.bf16 %v740, %v739
      %v768 = vpack.c.bf16 %v742, %v741
      %v769 = vpack.c.bf16 %v744, %v743
      %v770 = vpack.c.bf16 %v746, %v745
      %v771 = vpack.c.bf16 %v748, %v747
      %v772 = vpack.c.bf16 %v750, %v749
      %v773 = vpack.c.bf16 %v752, %v751
      %v774 = vpack.c.bf16 %v754, %v753
      %v775 = vpack.c.bf16 %v756, %v755
      %v776 = vpack.c.bf16 %v757, %v757
      %v796 = vunpack.c.l.b16 %v758
      %v797 = vunpack.c.h.b16 %v758
      %v798 = vunpack.c.l.b16 %v759
      %v799 = vunpack.c.h.b16 %v759
      %v800 = vunpack.c.l.b16 %v760
      %v801 = vunpack.c.h.b16 %v760
      %v802 = vunpack.c.l.b16 %v761
      %v803 = vunpack.c.h.b16 %v761
      %v804 = vunpack.c.l.b16 %v762
      %v805 = vunpack.c.h.b16 %v762
      %v806 = vunpack.c.l.b16 %v763
      %v807 = vunpack.c.h.b16 %v763
      %v808 = vunpack.c.l.b16 %v764
      %v809 = vunpack.c.h.b16 %v764
      %v810 = vunpack.c.l.b16 %v765
      %v811 = vunpack.c.h.b16 %v765
      %v812 = vunpack.c.l.b16 %v766
      %v813 = vunpack.c.h.b16 %v766
      %v814 = vunpack.c.l.b16 %v767
      %v815 = vunpack.c.h.b16 %v767
      %v816 = vunpack.c.l.b16 %v768
      %v817 = vunpack.c.h.b16 %v768
      %v818 = vunpack.c.l.b16 %v769
      %v819 = vunpack.c.h.b16 %v769
      %v820 = vunpack.c.l.b16 %v770
      %v821 = vunpack.c.h.b16 %v770
      %v822 = vunpack.c.l.b16 %v771
      %v823 = vunpack.c.h.b16 %v771
      %v824 = vunpack.c.l.b16 %v772
      %v825 = vunpack.c.h.b16 %v772
      %v826 = vunpack.c.l.b16 %v773
      %v827 = vunpack.c.h.b16 %v773
      %v828 = vunpack.c.l.b16 %v774
      %v829 = vunpack.c.h.b16 %v774
      %v830 = vunpack.c.l.b16 %v775
      %v831 = vunpack.c.h.b16 %v775
      %v832 = vunpack.c.l.b16 %v776
      %v833 = vpack.c.b16 %v796, %v796
      %v834 = vpack.c.b16 %v797, %v797
      %v835 = vpack.c.b16 %v798, %v798
      %v836 = vpack.c.b16 %v799, %v799
      %v837 = vpack.c.b16 %v800, %v800
      %v838 = vpack.c.b16 %v801, %v801
      %v839 = vpack.c.b16 %v802, %v802
      %v840 = vpack.c.b16 %v803, %v803
      %v841 = vpack.c.b16 %v804, %v804
      %v842 = vpack.c.b16 %v805, %v805
      %v843 = vpack.c.b16 %v806, %v806
      %v844 = vpack.c.b16 %v807, %v807
      %v845 = vpack.c.b16 %v808, %v808
      %v846 = vpack.c.b16 %v809, %v809
      %v847 = vpack.c.b16 %v810, %v810
      %v848 = vpack.c.b16 %v811, %v811
      %v849 = vpack.c.b16 %v812, %v812
      %v850 = vpack.c.b16 %v813, %v813
      %v851 = vpack.c.b16 %v814, %v814
      %v852 = vpack.c.b16 %v815, %v815
      %v853 = vpack.c.b16 %v816, %v816
      %v854 = vpack.c.b16 %v817, %v817
      %v855 = vpack.c.b16 %v818, %v818
      %v856 = vpack.c.b16 %v819, %v819
      %v857 = vpack.c.b16 %v820, %v820
      %v858 = vpack.c.b16 %v821, %v821
      %v859 = vpack.c.b16 %v822, %v822
      %v860 = vpack.c.b16 %v823, %v823
      %v861 = vpack.c.b16 %v824, %v824
      %v862 = vpack.c.b16 %v825, %v825
      %v863 = vpack.c.b16 %v826, %v826
      %v864 = vpack.c.b16 %v827, %v827
      %v865 = vpack.c.b16 %v828, %v828
      %v866 = vpack.c.b16 %v829, %v829
      %v867 = vpack.c.b16 %v830, %v830
      %v868 = vpack.c.b16 %v831, %v831
      %v869 = vpack.c.b16 %v832, %v832
      %907 = vst [vmem:[%s175] sm:$0xf] %v833
      %908 = vst [vmem:[%s175 + $0x4] sm:$0xf] %v834
      %909 = vst [vmem:[%s175 + $0x8] sm:$0xf] %v835
      %910 = vst [vmem:[%s175 + $0xc] sm:$0xf] %v836
      %911 = vst [vmem:[%s175 + $0x10] sm:$0xf] %v837
      %912 = vst [vmem:[%s175 + $0x14] sm:$0xf] %v838
      %913 = vst [vmem:[%s175 + $0x18] sm:$0xf] %v839
      %914 = vst [vmem:[%s175 + $0x1c] sm:$0xf] %v840
      %915 = vst [vmem:[%s175 + $0x20] sm:$0xf] %v841
      %916 = vst [vmem:[%s175 + $0x24] sm:$0xf] %v842
      %917 = vst [vmem:[%s175 + $0x28] sm:$0xf] %v843
      %918 = vst [vmem:[%s175 + $0x2c] sm:$0xf] %v844
      %919 = vst [vmem:[%s175 + $0x30] sm:$0xf] %v845
      %920 = vst [vmem:[%s175 + $0x34] sm:$0xf] %v846
      %921 = vst [vmem:[%s175 + $0x38] sm:$0xf] %v847
      %922 = vst [vmem:[%s175 + $0x3c] sm:$0xf] %v848
      %923 = vst [vmem:[%s175 + $0x40] sm:$0xf] %v849
      %924 = vst [vmem:[%s175 + $0x44] sm:$0xf] %v850
      %925 = vst [vmem:[%s175 + $0x48] sm:$0xf] %v851
      %926 = vst [vmem:[%s175 + $0x4c] sm:$0xf] %v852
      %927 = vst [vmem:[%s175 + $0x50] sm:$0xf] %v853
      %928 = vst [vmem:[%s175 + $0x54] sm:$0xf] %v854
      %929 = vst [vmem:[%s175 + $0x58] sm:$0xf] %v855
      %930 = vst [vmem:[%s175 + $0x5c] sm:$0xf] %v856
      %931 = vst [vmem:[%s175 + $0x60] sm:$0xf] %v857
      %932 = vst [vmem:[%s175 + $0x64] sm:$0xf] %v858
      %933 = vst [vmem:[%s175 + $0x68] sm:$0xf] %v859
      %934 = vst [vmem:[%s175 + $0x6c] sm:$0xf] %v860
      %935 = vst [vmem:[%s175 + $0x70] sm:$0xf] %v861
      %936 = vst [vmem:[%s175 + $0x74] sm:$0xf] %v862
      %937 = vst [vmem:[%s175 + $0x78] sm:$0xf] %v863
      %938 = vst [vmem:[%s175 + $0x7c] sm:$0xf] %v864
      %939 = vst [vmem:[%s175 + $0x80] sm:$0xf] %v865
      %940 = vst [vmem:[%s175 + $0x84] sm:$0xf] %v866
      %941 = vst [vmem:[%s175 + $0x88] sm:$0xf] %v867
      %942 = vst [vmem:[%s175 + $0x8c] sm:$0xf] %v868
      %943 = vst [vmem:[%s175 + $0x90] sm:$0xf] %v869
      %s944 = smul.u32 37, %s14
      %p945 = scmp.lt.s32.totalorder %s944, 73
      %s946 = scalar_select %p945, %s944, 73
      %s947 = smul.addr %s946, 4
      %s948 = scalar_lea.vmem %s3, %s947
      // Predicated region
      $region33: #{dqn_forward.4} parent=31 // pred_check
        %p949 = pneg %p100
      $region34: #{dqn_forward.4} parent=31 // pred_check_branch
        %951 = sbr.rel (%p949) target = $region36
      $region35: #{dqn_forward.4} parent=31 // pred_region
        %s952 = smul.u32 37, %s14
      $region36: #{dqn_forward.4} parent=31 // pred_fallthru
        _
    $region32: #{dqn_forward.4} parent=5 // pred_fallthru
      _
    %p953 = scmp.le.s32.totalorder 2, %s9
    // Predicated region
    $region37: #{dqn_forward.4} parent=5 // pred_check
      %p954 = pneg %p953
    $region38: #{dqn_forward.4} parent=5 // pred_check_branch
      %956 = sbr.rel (%p954) target = $region40
    $region39: #{dqn_forward.4} parent=5 // pred_region
      %s957 = ssub.s32 %s9, 2
      // Predicated region
      $region41: #{dqn_forward.4} parent=39 // pred_check
        %p958 = pneg %p106
      $region42: #{dqn_forward.4} parent=39 // pred_check_branch
        %960 = sbr.rel (%p958) target = $region44
      $region43: #{dqn_forward.4} parent=39 // pred_region
        %s961 = smul.u32 37, %s15
        %p962 = scmp.lt.s32.totalorder %s961, 73
        %s963 = scalar_select %p962, %s961, 73
        %s964 = smul.addr %s963, 4
        %s965 = scalar_lea.vmem %s3, %s964
      $region44: #{dqn_forward.4} parent=39 // pred_fallthru
        _
    $region40: #{dqn_forward.4} parent=5 // pred_fallthru
      _
  $region6: #{dqn_forward.4} parent=0 // loop_footer
    %s13 = sadd.s32 1, %s9
  $region7: #{dqn_forward.4} parent=0 // loop_footer_branch
    %8 = sbr.rel target = $region3
  $region8: #{dqn_forward.4} parent=0 // loop_exit
    _

// kernel: dqn_forward.5
$region0: #{dqn_forward.5}
  #allocation0 [shape = 'u32[]', space=smem, size = 0x4, offset = 0x4, fixed_abs, tag = 'smem constant byte address 0x4 - core index']
  #allocation1 [shape = 'u32[144,128]{1,0:T(1,128)}', space=vmem, size = 0x12000, scoped, tag = 'internal scratch']
  %s0 = inlined_call_operand.vmem [shape: bf16[104,896], index: 0, kind: input, shape index: {}]
  %s1 = inlined_call_operand.vmem [shape: bf16[896,128], index: 1, kind: input, shape index: {}]
  %s2 = inlined_call_operand.vmem [shape: f32[1,128], index: 2, kind: input, shape index: {}]
  %s3 = inlined_call_operand.vmem [shape: bf16[104,128], index: 3, kind: output, shape index: {}]
  %s4 = sld [smem:[#allocation0]]
  $region22: #{dqn_forward.5} parent=0
    _
  %s6 = ssub.s32 1, %s4
  %s7 = scalar_select 0, %s6, %s4
  // Predicated region
  $region2: #{dqn_forward.5} parent=0 // pred_check
    _
  $region3: #{dqn_forward.5} parent=0 // pred_check_branch
    %9 = sbr.rel (0) target = $region5
  $region4: #{dqn_forward.5} parent=0 // pred_region
    _
  $region5: #{dqn_forward.5} parent=0 // pred_fallthru
    _
  // Predicated region
  $region6: #{dqn_forward.5} parent=0 // pred_check
    _
  $region7: #{dqn_forward.5} parent=0 // pred_check_branch
    %11 = sbr.rel (0) target = $region9
  $region8: #{dqn_forward.5} parent=0 // pred_region
    _
  $region9: #{dqn_forward.5} parent=0 // pred_fallthru
    _
  // Predicated region
  $region10: #{dqn_forward.5} parent=0 // pred_check
    _
  $region11: #{dqn_forward.5} parent=0 // pred_check_branch
    %13 = sbr.rel (0) target = $region13
  $region12: #{dqn_forward.5} parent=0 // pred_region
    _
  $region13: #{dqn_forward.5} parent=0 // pred_fallthru
    _
  %v15 = vld [vmem:[%s0] sm:$0xff]
  %v16 = vld [vmem:[%s0 + $0x8] sm:$0xff]
  %v17 = vld [vmem:[%s0 + $0x10] sm:$0xff]
  %v18 = vld [vmem:[%s0 + $0x18] sm:$0xf]
  %v19 = vld [vmem:[%s0 + $0x1c] sm:$0xff]
  %v20 = vld [vmem:[%s0 + $0x24] sm:$0xff]
  %v21 = vld [vmem:[%s0 + $0x2c] sm:$0xff]
  %v22 = vld [vmem:[%s0 + $0x34] sm:$0xf]
  %v23 = vld [vmem:[%s0 + $0x38] sm:$0xff]
  %v24 = vld [vmem:[%s0 + $0x40] sm:$0xff]
  %v25 = vld [vmem:[%s0 + $0x48] sm:$0xff]
  %v26 = vld [vmem:[%s0 + $0x50] sm:$0xf]
  %v27 = vld [vmem:[%s0 + $0x54] sm:$0xff]
  %v28 = vld [vmem:[%s0 + $0x5c] sm:$0xff]
  %v29 = vld [vmem:[%s0 + $0x64] sm:$0xff]
  %v30 = vld [vmem:[%s0 + $0x6c] sm:$0xf]
  %v31 = vld [vmem:[%s0 + $0x70] sm:$0xff]
  %v32 = vld [vmem:[%s0 + $0x78] sm:$0xff]
  %v33 = vld [vmem:[%s0 + $0x80] sm:$0xff]
  %v34 = vld [vmem:[%s0 + $0x88] sm:$0xf]
  %v35 = vld [vmem:[%s0 + $0x8c] sm:$0xff]
  %v36 = vld [vmem:[%s0 + $0x94] sm:$0xff]
  %v37 = vld [vmem:[%s0 + $0x9c] sm:$0xff]
  %v38 = vld [vmem:[%s0 + $0xa4] sm:$0xf]
  %v39 = vld [vmem:[%s0 + $0xa8] sm:$0xff]
  %v40 = vld [vmem:[%s0 + $0xb0] sm:$0xff]
  %v41 = vld [vmem:[%s0 + $0xb8] sm:$0xff]
  %v42 = vld [vmem:[%s0 + $0xc0] sm:$0xf]
  %v43 = vld [vmem:[%s0 + $0xc4] sm:$0xff]
  %v44 = vld [vmem:[%s0 + $0xcc] sm:$0xff]
  %v45 = vld [vmem:[%s0 + $0xd4] sm:$0xff]
  %v46 = vld [vmem:[%s0 + $0xdc] sm:$0xf]
  %v47 = vld [vmem:[%s0 + $0xe0] sm:$0xff]
  %v48 = vld [vmem:[%s0 + $0xe8] sm:$0xff]
  %v49 = vld [vmem:[%s0 + $0xf0] sm:$0xff]
  %v50 = vld [vmem:[%s0 + $0xf8] sm:$0xf]
  %v51 = vld [vmem:[%s0 + $0xfc] sm:$0xff]
  %v52 = vld [vmem:[%s0 + $0x104] sm:$0xff]
  %v53 = vld [vmem:[%s0 + $0x10c] sm:$0xff]
  %v54 = vld [vmem:[%s0 + $0x114] sm:$0xf]
  %v55 = vld [vmem:[%s0 + $0x118] sm:$0xff]
  %v56 = vld [vmem:[%s0 + $0x120] sm:$0xff]
  %v57 = vld [vmem:[%s0 + $0x128] sm:$0xff]
  %v58 = vld [vmem:[%s0 + $0x130] sm:$0xf]
  %v59 = vld [vmem:[%s0 + $0x134] sm:$0xff]
  %v60 = vld [vmem:[%s0 + $0x13c] sm:$0xff]
  %v61 = vld [vmem:[%s0 + $0x144] sm:$0xff]
  %v62 = vld [vmem:[%s0 + $0x14c] sm:$0xf]
  %v63 = vld [vmem:[%s0 + $0x150] sm:$0xff]
  %v64 = vld [vmem:[%s0 + $0x158] sm:$0xff]
  %v65 = vld [vmem:[%s0 + $0x160] sm:$0xff]
  %v66 = vld [vmem:[%s0 + $0x168] sm:$0xf]
  %v67 = vld [vmem:[%s1] sm:$0xf]
  %v68 = vld [vmem:[%s1 + $0x4] sm:$0xf]
  %v69 = vld [vmem:[%s1 + $0x8] sm:$0xf]
  %v70 = vld [vmem:[%s1 + $0xc] sm:$0xf]
  %v71 = vld [vmem:[%s1 + $0x10] sm:$0xf]
  %v72 = vld [vmem:[%s1 + $0x14] sm:$0xf]
  %v73 = vld [vmem:[%s1 + $0x18] sm:$0xf]
  %v74 = vld [vmem:[%s1 + $0x1c] sm:$0xf]
  %v75 = vld [vmem:[%s1 + $0x20] sm:$0xf]
  %v76 = vld [vmem:[%s1 + $0x24] sm:$0xf]
  %v77 = vld [vmem:[%s1 + $0x28] sm:$0xf]
  %v78 = vld [vmem:[%s1 + $0x2c] sm:$0xf]
  %v79 = vld [vmem:[%s1 + $0x30] sm:$0xf]
  %v80 = vld [vmem:[%s1 + $0x34] sm:$0xf]
  %v81 = vld [vmem:[%s1 + $0x38] sm:$0xf]
  %v82 = vld [vmem:[%s1 + $0x3c] sm:$0xf]
  %v83 = vld [vmem:[%s1 + $0x40] sm:$0xf]
  %v84 = vld [vmem:[%s1 + $0x44] sm:$0xf]
  %v85 = vld [vmem:[%s1 + $0x48] sm:$0xf]
  %v86 = vld [vmem:[%s1 + $0x4c] sm:$0xf]
  %v87 = vld [vmem:[%s1 + $0x50] sm:$0xf]
  %v88 = vld [vmem:[%s1 + $0x54] sm:$0xf]
  %v89 = vld [vmem:[%s1 + $0x58] sm:$0xf]
  %v90 = vld [vmem:[%s1 + $0x5c] sm:$0xf]
  %v91 = vld [vmem:[%s1 + $0x60] sm:$0xf]
  %v92 = vld [vmem:[%s1 + $0x64] sm:$0xf]
  %v93 = vld [vmem:[%s1 + $0x68] sm:$0xf]
  %v94 = vld [vmem:[%s1 + $0x6c] sm:$0xf]
  %v95 = vld [vmem:[%s1 + $0x70] sm:$0xf]
  %v96 = vld [vmem:[%s1 + $0x74] sm:$0xf]
  %v97 = vld [vmem:[%s1 + $0x78] sm:$0xf]
  %v98 = vld [vmem:[%s1 + $0x7c] sm:$0xf]
  %v99 = vld [vmem:[%s1 + $0x80] sm:$0xf]
  %v100 = vld [vmem:[%s1 + $0x84] sm:$0xf]
  %v101 = vld [vmem:[%s1 + $0x88] sm:$0xf]
  %v102 = vld [vmem:[%s1 + $0x8c] sm:$0xf]
  %v103 = vld [vmem:[%s1 + $0x90] sm:$0xf]
  %v104 = vld [vmem:[%s1 + $0x94] sm:$0xf]
  %v105 = vld [vmem:[%s1 + $0x98] sm:$0xf]
  %v106 = vld [vmem:[%s1 + $0x9c] sm:$0xf]
  %v107 = vld [vmem:[%s1 + $0xa0] sm:$0xf]
  %v108 = vld [vmem:[%s1 + $0xa4] sm:$0xf]
  %v109 = vld [vmem:[%s1 + $0xa8] sm:$0xf]
  %v110 = vld [vmem:[%s1 + $0xac] sm:$0xf]
  %v111 = vld [vmem:[%s1 + $0xb0] sm:$0xf]
  %v112 = vld [vmem:[%s1 + $0xb4] sm:$0xf]
  %v113 = vld [vmem:[%s1 + $0xb8] sm:$0xf]
  %v114 = vld [vmem:[%s1 + $0xbc] sm:$0xf]
  %v115 = vld [vmem:[%s1 + $0xc0] sm:$0xf]
  %v116 = vld [vmem:[%s1 + $0xc4] sm:$0xf]
  %v117 = vld [vmem:[%s1 + $0xc8] sm:$0xf]
  %v118 = vld [vmem:[%s1 + $0xcc] sm:$0xf]
  %v119 = vld [vmem:[%s1 + $0xd0] sm:$0xf]
  %v120 = vld [vmem:[%s1 + $0xd4] sm:$0xf]
  %v121 = vld [vmem:[%s1 + $0xd8] sm:$0xf]
  %v122 = vld [vmem:[%s1 + $0xdc] sm:$0xf]
  %v123 = vld [vmem:[%s1 + $0xe0] sm:$0xf]
  %v124 = vld [vmem:[%s1 + $0xe4] sm:$0xf]
  %v125 = vld [vmem:[%s1 + $0xe8] sm:$0xf]
  %v126 = vld [vmem:[%s1 + $0xec] sm:$0xf]
  %v127 = vld [vmem:[%s1 + $0xf0] sm:$0xf]
  %v128 = vld [vmem:[%s1 + $0xf4] sm:$0xf]
  %v129 = vld [vmem:[%s1 + $0xf8] sm:$0xf]
  %v130 = vld [vmem:[%s1 + $0xfc] sm:$0xf]
  %v131 = vld [vmem:[%s1 + $0x100] sm:$0xf]
  %v132 = vld [vmem:[%s1 + $0x104] sm:$0xf]
  %v133 = vld [vmem:[%s1 + $0x108] sm:$0xf]
  %v134 = vld [vmem:[%s1 + $0x10c] sm:$0xf]
  %v135 = vld [vmem:[%s1 + $0x110] sm:$0xf]
  %v136 = vld [vmem:[%s1 + $0x114] sm:$0xf]
  %v137 = vld [vmem:[%s1 + $0x118] sm:$0xf]
  %v138 = vld [vmem:[%s1 + $0x11c] sm:$0xf]
  %v139 = vld [vmem:[%s1 + $0x120] sm:$0xf]
  %v140 = vld [vmem:[%s1 + $0x124] sm:$0xf]
  %v141 = vld [vmem:[%s1 + $0x128] sm:$0xf]
  %v142 = vld [vmem:[%s1 + $0x12c] sm:$0xf]
  %v143 = vld [vmem:[%s1 + $0x130] sm:$0xf]
  %v144 = vld [vmem:[%s1 + $0x134] sm:$0xf]
  %v145 = vld [vmem:[%s1 + $0x138] sm:$0xf]
  %v146 = vld [vmem:[%s1 + $0x13c] sm:$0xf]
  %v147 = vld [vmem:[%s1 + $0x140] sm:$0xf]
  %v148 = vld [vmem:[%s1 + $0x144] sm:$0xf]
  %v149 = vld [vmem:[%s1 + $0x148] sm:$0xf]
  %v150 = vld [vmem:[%s1 + $0x14c] sm:$0xf]
  %v151 = vld [vmem:[%s1 + $0x150] sm:$0xf]
  %v152 = vld [vmem:[%s1 + $0x154] sm:$0xf]
  %v153 = vld [vmem:[%s1 + $0x158] sm:$0xf]
  %v154 = vld [vmem:[%s1 + $0x15c] sm:$0xf]
  %v155 = vld [vmem:[%s1 + $0x160] sm:$0xf]
  %v156 = vld [vmem:[%s1 + $0x164] sm:$0xf]
  %v157 = vld [vmem:[%s1 + $0x168] sm:$0xf]
  %v158 = vld [vmem:[%s1 + $0x16c] sm:$0xf]
  %v159 = vld [vmem:[%s1 + $0x170] sm:$0xf]
  %v160 = vld [vmem:[%s1 + $0x174] sm:$0xf]
  %v161 = vld [vmem:[%s1 + $0x178] sm:$0xf]
  %v162 = vld [vmem:[%s1 + $0x17c] sm:$0xf]
  %v163 = vld [vmem:[%s1 + $0x180] sm:$0xf]
  %v164 = vld [vmem:[%s1 + $0x184] sm:$0xf]
  %v165 = vld [vmem:[%s1 + $0x188] sm:$0xf]
  %v166 = vld [vmem:[%s1 + $0x18c] sm:$0xf]
  %v167 = vld [vmem:[%s1 + $0x190] sm:$0xf]
  %v168 = vld [vmem:[%s1 + $0x194] sm:$0xf]
  %v169 = vld [vmem:[%s1 + $0x198] sm:$0xf]
  %v170 = vld [vmem:[%s1 + $0x19c] sm:$0xf]
  %v171 = vld [vmem:[%s1 + $0x1a0] sm:$0xf]
  %v172 = vld [vmem:[%s1 + $0x1a4] sm:$0xf]
  %v173 = vld [vmem:[%s1 + $0x1a8] sm:$0xf]
  %v174 = vld [vmem:[%s1 + $0x1ac] sm:$0xf]
  %v175 = vld [vmem:[%s1 + $0x1b0] sm:$0xf]
  %v176 = vld [vmem:[%s1 + $0x1b4] sm:$0xf]
  %v177 = vld [vmem:[%s1 + $0x1b8] sm:$0xf]
  %v178 = vld [vmem:[%s1 + $0x1bc] sm:$0xf]
  %v179 = vld [vmem:[%s2] sm:$0x1]
  %v181 = vlaneseq
  %v182 = vshrl.u32 %v181, 7
  %v183 = vsub.s32 0, %v182
  %v184 = vrot.slane %v179, %v183
  %v238 = vunpack.c.l.b16 %v15
  %v239 = vunpack.c.h.b16 %v15
  %v240 = vunpack.c.l.b16 %v16
  %v241 = vunpack.c.h.b16 %v16
  %v242 = vunpack.c.l.b16 %v17
  %v243 = vunpack.c.h.b16 %v17
  %v244 = vunpack.c.l.b16 %v18
  %v245 = vunpack.c.l.b16 %v19
  %v246 = vunpack.c.h.b16 %v19
  %v247 = vunpack.c.l.b16 %v20
  %v248 = vunpack.c.h.b16 %v20
  %v249 = vunpack.c.l.b16 %v21
  %v250 = vunpack.c.h.b16 %v21
  %v251 = vunpack.c.l.b16 %v22
  %v252 = vunpack.c.l.b16 %v23
  %v253 = vunpack.c.h.b16 %v23
  %v254 = vunpack.c.l.b16 %v24
  %v255 = vunpack.c.h.b16 %v24
  %v256 = vunpack.c.l.b16 %v25
  %v257 = vunpack.c.h.b16 %v25
  %v258 = vunpack.c.l.b16 %v26
  %v259 = vunpack.c.l.b16 %v27
  %v260 = vunpack.c.h.b16 %v27
  %v261 = vunpack.c.l.b16 %v28
  %v262 = vunpack.c.h.b16 %v28
  %v263 = vunpack.c.l.b16 %v29
  %v264 = vunpack.c.h.b16 %v29
  %v265 = vunpack.c.l.b16 %v30
  %v266 = vunpack.c.l.b16 %v31
  %v267 = vunpack.c.h.b16 %v31
  %v268 = vunpack.c.l.b16 %v32
  %v269 = vunpack.c.h.b16 %v32
  %v270 = vunpack.c.l.b16 %v33
  %v271 = vunpack.c.h.b16 %v33
  %v272 = vunpack.c.l.b16 %v34
  %v273 = vunpack.c.l.b16 %v35
  %v274 = vunpack.c.h.b16 %v35
  %v275 = vunpack.c.l.b16 %v36
  %v276 = vunpack.c.h.b16 %v36
  %v277 = vunpack.c.l.b16 %v37
  %v278 = vunpack.c.h.b16 %v37
  %v279 = vunpack.c.l.b16 %v38
  %v280 = vunpack.c.l.b16 %v39
  %v281 = vunpack.c.h.b16 %v39
  %v282 = vunpack.c.l.b16 %v40
  %v283 = vunpack.c.h.b16 %v40
  %v284 = vunpack.c.l.b16 %v41
  %v285 = vunpack.c.h.b16 %v41
  %v286 = vunpack.c.l.b16 %v42
  %v287 = vunpack.c.l.b16 %v43
  %v288 = vunpack.c.h.b16 %v43
  %v289 = vunpack.c.l.b16 %v44
  %v290 = vunpack.c.h.b16 %v44
  %v291 = vunpack.c.l.b16 %v45
  %v292 = vunpack.c.h.b16 %v45
  %v293 = vunpack.c.l.b16 %v46
  %v294 = vunpack.c.l.b16 %v47
  %v295 = vunpack.c.h.b16 %v47
  %v296 = vunpack.c.l.b16 %v48
  %v297 = vunpack.c.h.b16 %v48
  %v298 = vunpack.c.l.b16 %v49
  %v299 = vunpack.c.h.b16 %v49
  %v300 = vunpack.c.l.b16 %v50
  %v301 = vunpack.c.l.b16 %v51
  %v302 = vunpack.c.h.b16 %v51
  %v303 = vunpack.c.l.b16 %v52
  %v304 = vunpack.c.h.b16 %v52
  %v305 = vunpack.c.l.b16 %v53
  %v306 = vunpack.c.h.b16 %v53
  %v307 = vunpack.c.l.b16 %v54
  %v308 = vunpack.c.l.b16 %v55
  %v309 = vunpack.c.h.b16 %v55
  %v310 = vunpack.c.l.b16 %v56
  %v311 = vunpack.c.h.b16 %v56
  %v312 = vunpack.c.l.b16 %v57
  %v313 = vunpack.c.h.b16 %v57
  %v314 = vunpack.c.l.b16 %v58
  %v315 = vunpack.c.l.b16 %v59
  %v316 = vunpack.c.h.b16 %v59
  %v317 = vunpack.c.l.b16 %v60
  %v318 = vunpack.c.h.b16 %v60
  %v319 = vunpack.c.l.b16 %v61
  %v320 = vunpack.c.h.b16 %v61
  %v321 = vunpack.c.l.b16 %v62
  %v322 = vunpack.c.l.b16 %v63
  %v323 = vunpack.c.h.b16 %v63
  %v324 = vunpack.c.l.b16 %v64
  %v325 = vunpack.c.h.b16 %v64
  %v326 = vunpack.c.l.b16 %v65
  %v327 = vunpack.c.h.b16 %v65
  %v328 = vunpack.c.l.b16 %v66
  %v329 = vpack.c.b16 %v245, %v238
  %v330 = vpack.c.b16 %v246, %v239
  %v331 = vpack.c.b16 %v247, %v240
  %v332 = vpack.c.b16 %v248, %v241
  %v333 = vpack.c.b16 %v249, %v242
  %v334 = vpack.c.b16 %v250, %v243
  %v335 = vpack.c.b16 %v251, %v244
  %v336 = vpack.c.b16 %v259, %v252
  %v337 = vpack.c.b16 %v260, %v253
  %v338 = vpack.c.b16 %v261, %v254
  %v339 = vpack.c.b16 %v262, %v255
  %v340 = vpack.c.b16 %v263, %v256
  %v341 = vpack.c.b16 %v264, %v257
  %v342 = vpack.c.b16 %v265, %v258
  %v343 = vpack.c.b16 %v273, %v266
  %v344 = vpack.c.b16 %v274, %v267
  %v345 = vpack.c.b16 %v275, %v268
  %v346 = vpack.c.b16 %v276, %v269
  %v347 = vpack.c.b16 %v277, %v270
  %v348 = vpack.c.b16 %v278, %v271
  %v349 = vpack.c.b16 %v279, %v272
  %v350 = vpack.c.b16 %v287, %v280
  %v351 = vpack.c.b16 %v288, %v281
  %v352 = vpack.c.b16 %v289, %v282
  %v353 = vpack.c.b16 %v290, %v283
  %v354 = vpack.c.b16 %v291, %v284
  %v355 = vpack.c.b16 %v292, %v285
  %v356 = vpack.c.b16 %v293, %v286
  %v357 = vpack.c.b16 %v301, %v294
  %v358 = vpack.c.b16 %v302, %v295
  %v359 = vpack.c.b16 %v303, %v296
  %v360 = vpack.c.b16 %v304, %v297
  %v361 = vpack.c.b16 %v305, %v298
  %v362 = vpack.c.b16 %v306, %v299
  %v363 = vpack.c.b16 %v307, %v300
  %v364 = vpack.c.b16 %v315, %v308
  %v365 = vpack.c.b16 %v316, %v309
  %v366 = vpack.c.b16 %v317, %v310
  %v367 = vpack.c.b16 %v318, %v311
  %v368 = vpack.c.b16 %v319, %v312
  %v369 = vpack.c.b16 %v320, %v313
  %v370 = vpack.c.b16 %v321, %v314
  %v371 = vpack.c.b16 %v322, %v322
  %v372 = vpack.c.b16 %v323, %v323
  %v373 = vpack.c.b16 %v324, %v324
  %v374 = vpack.c.b16 %v325, %v325
  %v375 = vpack.c.b16 %v326, %v326
  %v376 = vpack.c.b16 %v327, %v327
  %v377 = vpack.c.b16 %v328, %v328
  %v539 = vunpack.c.l.b16 %v67
  %v540 = vunpack.c.l.b16 %v68
  %v541 = vunpack.c.l.b16 %v69
  %v542 = vunpack.c.l.b16 %v70
  %v543 = vunpack.c.l.b16 %v71
  %v544 = vunpack.c.l.b16 %v72
  %v545 = vunpack.c.l.b16 %v73
  %v546 = vunpack.c.l.b16 %v74
  %v547 = vunpack.c.l.b16 %v75
  %v548 = vunpack.c.l.b16 %v76
  %v549 = vunpack.c.l.b16 %v77
  %v550 = vunpack.c.l.b16 %v78
  %v551 = vunpack.c.l.b16 %v79
  %v552 = vunpack.c.l.b16 %v80
  %v553 = vunpack.c.l.b16 %v81
  %v554 = vunpack.c.l.b16 %v82
  %v555 = vunpack.c.l.b16 %v83
  %v556 = vunpack.c.l.b16 %v84
  %v557 = vunpack.c.l.b16 %v85
  %v558 = vunpack.c.l.b16 %v86
  %v559 = vunpack.c.l.b16 %v87
  %v560 = vunpack.c.l.b16 %v88
  %v561 = vunpack.c.l.b16 %v89
  %v562 = vunpack.c.l.b16 %v90
  %v563 = vunpack.c.l.b16 %v91
  %v564 = vunpack.c.l.b16 %v92
  %v565 = vunpack.c.l.b16 %v93
  %v566 = vunpack.c.l.b16 %v94
  %v567 = vunpack.c.l.b16 %v95
  %v568 = vunpack.c.l.b16 %v96
  %v569 = vunpack.c.l.b16 %v97
  %v570 = vunpack.c.l.b16 %v98
  %v571 = vunpack.c.l.b16 %v99
  %v572 = vunpack.c.l.b16 %v100
  %v573 = vunpack.c.l.b16 %v101
  %v574 = vunpack.c.l.b16 %v102
  %v575 = vunpack.c.l.b16 %v103
  %v576 = vunpack.c.l.b16 %v104
  %v577 = vunpack.c.l.b16 %v105
  %v578 = vunpack.c.l.b16 %v106
  %v579 = vunpack.c.l.b16 %v107
  %v580 = vunpack.c.l.b16 %v108
  %v581 = vunpack.c.l.b16 %v109
  %v582 = vunpack.c.l.b16 %v110
  %v583 = vunpack.c.l.b16 %v111
  %v584 = vunpack.c.l.b16 %v112
  %v585 = vunpack.c.l.b16 %v113
  %v586 = vunpack.c.l.b16 %v114
  %v587 = vunpack.c.l.b16 %v115
  %v588 = vunpack.c.l.b16 %v116
  %v589 = vunpack.c.l.b16 %v117
  %v590 = vunpack.c.l.b16 %v118
  %v591 = vunpack.c.l.b16 %v119
  %v592 = vunpack.c.l.b16 %v120
  %v593 = vunpack.c.l.b16 %v121
  %v594 = vunpack.c.l.b16 %v122
  %v595 = vunpack.c.l.b16 %v123
  %v596 = vunpack.c.l.b16 %v124
  %v597 = vunpack.c.l.b16 %v125
  %v598 = vunpack.c.l.b16 %v126
  %v599 = vunpack.c.l.b16 %v127
  %v600 = vunpack.c.l.b16 %v128
  %v601 = vunpack.c.l.b16 %v129
  %v602 = vunpack.c.l.b16 %v130
  %v603 = vunpack.c.l.b16 %v131
  %v604 = vunpack.c.l.b16 %v132
  %v605 = vunpack.c.l.b16 %v133
  %v606 = vunpack.c.l.b16 %v134
  %v607 = vunpack.c.l.b16 %v135
  %v608 = vunpack.c.l.b16 %v136
  %v609 = vunpack.c.l.b16 %v137
  %v610 = vunpack.c.l.b16 %v138
  %v611 = vunpack.c.l.b16 %v139
  %v612 = vunpack.c.l.b16 %v140
  %v613 = vunpack.c.l.b16 %v141
  %v614 = vunpack.c.l.b16 %v142
  %v615 = vunpack.c.l.b16 %v143
  %v616 = vunpack.c.l.b16 %v144
  %v617 = vunpack.c.l.b16 %v145
  %v618 = vunpack.c.l.b16 %v146
  %v619 = vunpack.c.l.b16 %v147
  %v620 = vunpack.c.l.b16 %v148
  %v621 = vunpack.c.l.b16 %v149
  %v622 = vunpack.c.l.b16 %v150
  %v623 = vunpack.c.l.b16 %v151
  %v624 = vunpack.c.l.b16 %v152
  %v625 = vunpack.c.l.b16 %v153
  %v626 = vunpack.c.l.b16 %v154
  %v627 = vunpack.c.l.b16 %v155
  %v628 = vunpack.c.l.b16 %v156
  %v629 = vunpack.c.l.b16 %v157
  %v630 = vunpack.c.l.b16 %v158
  %v631 = vunpack.c.l.b16 %v159
  %v632 = vunpack.c.l.b16 %v160
  %v633 = vunpack.c.l.b16 %v161
  %v634 = vunpack.c.l.b16 %v162
  %v635 = vunpack.c.l.b16 %v163
  %v636 = vunpack.c.l.b16 %v164
  %v637 = vunpack.c.l.b16 %v165
  %v638 = vunpack.c.l.b16 %v166
  %v639 = vunpack.c.l.b16 %v167
  %v640 = vunpack.c.l.b16 %v168
  %v641 = vunpack.c.l.b16 %v169
  %v642 = vunpack.c.l.b16 %v170
  %v643 = vunpack.c.l.b16 %v171
  %v644 = vunpack.c.l.b16 %v172
  %v645 = vunpack.c.l.b16 %v173
  %v646 = vunpack.c.l.b16 %v174
  %v647 = vunpack.c.l.b16 %v175
  %v648 = vunpack.c.l.b16 %v176
  %v649 = vunpack.c.l.b16 %v177
  %v650 = vunpack.c.l.b16 %v178
  %v651 = vpack.c.b16 %v540, %v539
  %v652 = vpack.c.b16 %v542, %v541
  %v653 = vpack.c.b16 %v544, %v543
  %v654 = vpack.c.b16 %v546, %v545
  %v655 = vpack.c.b16 %v548, %v547
  %v656 = vpack.c.b16 %v550, %v549
  %v657 = vpack.c.b16 %v552, %v551
  %v658 = vpack.c.b16 %v554, %v553
  %v659 = vpack.c.b16 %v556, %v555
  %v660 = vpack.c.b16 %v558, %v557
  %v661 = vpack.c.b16 %v560, %v559
  %v662 = vpack.c.b16 %v562, %v561
  %v663 = vpack.c.b16 %v564, %v563
  %v664 = vpack.c.b16 %v566, %v565
  %v665 = vpack.c.b16 %v568, %v567
  %v666 = vpack.c.b16 %v570, %v569
  %v667 = vpack.c.b16 %v572, %v571
  %v668 = vpack.c.b16 %v574, %v573
  %v669 = vpack.c.b16 %v576, %v575
  %v670 = vpack.c.b16 %v578, %v577
  %v671 = vpack.c.b16 %v580, %v579
  %v672 = vpack.c.b16 %v582, %v581
  %v673 = vpack.c.b16 %v584, %v583
  %v674 = vpack.c.b16 %v586, %v585
  %v675 = vpack.c.b16 %v588, %v587
  %v676 = vpack.c.b16 %v590, %v589
  %v677 = vpack.c.b16 %v592, %v591
  %v678 = vpack.c.b16 %v594, %v593
  %v679 = vpack.c.b16 %v596, %v595
  %v680 = vpack.c.b16 %v598, %v597
  %v681 = vpack.c.b16 %v600, %v599
  %v682 = vpack.c.b16 %v602, %v601
  %v683 = vpack.c.b16 %v604, %v603
  %v684 = vpack.c.b16 %v606, %v605
  %v685 = vpack.c.b16 %v608, %v607
  %v686 = vpack.c.b16 %v610, %v609
  %v687 = vpack.c.b16 %v612, %v611
  %v688 = vpack.c.b16 %v614, %v613
  %v689 = vpack.c.b16 %v616, %v615
  %v690 = vpack.c.b16 %v618, %v617
  %v691 = vpack.c.b16 %v620, %v619
  %v692 = vpack.c.b16 %v622, %v621
  %v693 = vpack.c.b16 %v624, %v623
  %v694 = vpack.c.b16 %v626, %v625
  %v695 = vpack.c.b16 %v628, %v627
  %v696 = vpack.c.b16 %v630, %v629
  %v697 = vpack.c.b16 %v632, %v631
  %v698 = vpack.c.b16 %v634, %v633
  %v699 = vpack.c.b16 %v636, %v635
  %v700 = vpack.c.b16 %v638, %v637
  %v701 = vpack.c.b16 %v640, %v639
  %v702 = vpack.c.b16 %v642, %v641
  %v703 = vpack.c.b16 %v644, %v643
  %v704 = vpack.c.b16 %v646, %v645
  %v705 = vpack.c.b16 %v648, %v647
  %v706 = vpack.c.b16 %v650, %v649
  %763 = vmatprep.subr.bf16.mxu0 0
  %764 = vmatpush1.bf16.msra.mxu0 %v658
  %765 = vmatprep.subr.bf16.mxu0 0
  %766 = vmatpush1.bf16.msra.mxu0 %v657
  %767 = vmatprep.subr.bf16.mxu0 0
  %768 = vmatpush1.bf16.msra.mxu0 %v656
  %769 = vmatprep.subr.bf16.mxu0 0
  %770 = vmatpush1.bf16.msra.mxu0 %v655
  %771 = vmatprep.subr.bf16.mxu0 0
  %772 = vmatpush1.bf16.msra.mxu0 %v654
  %773 = vmatprep.subr.bf16.mxu0 0
  %774 = vmatpush1.bf16.msra.mxu0 %v653
  %775 = vmatprep.subr.bf16.mxu0 0
  %776 = vmatpush1.bf16.msra.mxu0 %v652
  %777 = vmatprep.subr.bf16.mxu0 0
  %778 = vmatpush1.bf16.msra.mxu0 %v651
  %779 = vmatprep.subr.bf16.mxu0 0
  %780 = vmatpush2.bf16.msra.mxu0 %v666
  %781 = vmatprep.subr.bf16.mxu0 0
  %782 = vmatpush2.bf16.msra.mxu0 %v665
  %783 = vmatprep.subr.bf16.mxu0 0
  %784 = vmatpush2.bf16.msra.mxu0 %v664
  %785 = vmatprep.subr.bf16.mxu0 0
  %786 = vmatpush2.bf16.msra.mxu0 %v663
  %787 = vmatprep.subr.bf16.mxu0 0
  %788 = vmatpush2.bf16.msra.mxu0 %v662
  %789 = vmatprep.subr.bf16.mxu0 0
  %790 = vmatpush2.bf16.msra.mxu0 %v661
  %791 = vmatprep.subr.bf16.mxu0 0
  %792 = vmatpush2.bf16.msra.mxu0 %v660
  %793 = vmatprep.subr.bf16.mxu0 0
  %794 = vmatpush2.bf16.msra.mxu0 %v659
  %795 = vmatprep.mubr.bf16.mxu0 %v330
  %796 = vmatmul.mubr.bf16.gmra.mxu0 %v329
  %v797 = vpop.f32.mrf.mxu0
  %v798 = vadd.f32 %v184, %v797
  %v799 = vpop.f32.mrf.mxu0
  %v800 = vpop.f32.mrf.mxu0
  %v801 = vadd.f32 %v184, %v800
  %v802 = vpop.f32.mrf.mxu0
  %803 = vmatprep.mubr.bf16.mxu0 %v337
  %804 = vmatmul.mubr.bf16.gmra.mxu0 %v336
  %v805 = vpop.f32.mrf.mxu0
  %v806 = vadd.f32 %v184, %v805
  %v807 = vpop.f32.mrf.mxu0
  %v808 = vpop.f32.mrf.mxu0
  %v809 = vadd.f32 %v184, %v808
  %v810 = vpop.f32.mrf.mxu0
  %811 = vmatprep.mubr.bf16.mxu0 %v344
  %812 = vmatmul.mubr.bf16.gmra.mxu0 %v343
  %v813 = vpop.f32.mrf.mxu0
  %v814 = vadd.f32 %v184, %v813
  %v815 = vpop.f32.mrf.mxu0
  %v816 = vpop.f32.mrf.mxu0
  %v817 = vadd.f32 %v184, %v816
  %v818 = vpop.f32.mrf.mxu0
  %819 = vmatprep.mubr.bf16.mxu0 %v351
  %820 = vmatmul.mubr.bf16.gmra.mxu0 %v350
  %v821 = vpop.f32.mrf.mxu0
  %v822 = vadd.f32 %v184, %v821
  %v823 = vpop.f32.mrf.mxu0
  %v824 = vpop.f32.mrf.mxu0
  %v825 = vadd.f32 %v184, %v824
  %v826 = vpop.f32.mrf.mxu0
  %827 = vmatprep.mubr.bf16.mxu0 %v358
  %828 = vmatmul.mubr.bf16.gmra.mxu0 %v357
  %v829 = vpop.f32.mrf.mxu0
  %v830 = vadd.f32 %v184, %v829
  %v831 = vpop.f32.mrf.mxu0
  %v832 = vpop.f32.mrf.mxu0
  %v833 = vadd.f32 %v184, %v832
  %v834 = vpop.f32.mrf.mxu0
  %835 = vmatprep.mubr.bf16.mxu0 %v365
  %836 = vmatmul.mubr.bf16.gmra.mxu0 %v364
  %v837 = vpop.f32.mrf.mxu0
  %v838 = vadd.f32 %v184, %v837
  %v839 = vpop.f32.mrf.mxu0
  %v840 = vpop.f32.mrf.mxu0
  %v841 = vadd.f32 %v184, %v840
  %v842 = vpop.f32.mrf.mxu0
  %843 = vmatprep.mubr.bf16.mxu0 %v372
  %844 = vmatmul.mubr.bf16.gmra.mxu0 %v371
  %v845 = vpop.f32.mrf.mxu0
  %v846 = vadd.f32 %v184, %v845
  %v847 = vpop.f32.mrf.mxu0
  %v848 = vpop.f32.mrf.mxu0
  %v849 = vpop.f32.mrf.mxu0
  %850 = vdwg.mxu0
  %851 = vmatprep.subr.bf16.mxu0 0
  %852 = vmatpush1.bf16.msra.mxu0 %v674
  %853 = vmatprep.subr.bf16.mxu0 0
  %854 = vmatpush1.bf16.msra.mxu0 %v673
  %855 = vmatprep.subr.bf16.mxu0 0
  %856 = vmatpush1.bf16.msra.mxu0 %v672
  %857 = vmatprep.subr.bf16.mxu0 0
  %858 = vmatpush1.bf16.msra.mxu0 %v671
  %859 = vmatprep.subr.bf16.mxu0 0
  %860 = vmatpush1.bf16.msra.mxu0 %v670
  %861 = vmatprep.subr.bf16.mxu0 0
  %862 = vmatpush1.bf16.msra.mxu0 %v669
  %863 = vmatprep.subr.bf16.mxu0 0
  %864 = vmatpush1.bf16.msra.mxu0 %v668
  %865 = vmatprep.subr.bf16.mxu0 0
  %866 = vmatpush1.bf16.msra.mxu0 %v667
  %867 = vmatprep.subr.bf16.mxu0 0
  %868 = vmatpush2.bf16.msra.mxu0 %v682
  %869 = vmatprep.subr.bf16.mxu0 0
  %870 = vmatpush2.bf16.msra.mxu0 %v681
  %871 = vmatprep.subr.bf16.mxu0 0
  %872 = vmatpush2.bf16.msra.mxu0 %v680
  %873 = vmatprep.subr.bf16.mxu0 0
  %874 = vmatpush2.bf16.msra.mxu0 %v679
  %875 = vmatprep.subr.bf16.mxu0 0
  %876 = vmatpush2.bf16.msra.mxu0 %v678
  %877 = vmatprep.subr.bf16.mxu0 0
  %878 = vmatpush2.bf16.msra.mxu0 %v677
  %879 = vmatprep.subr.bf16.mxu0 0
  %880 = vmatpush2.bf16.msra.mxu0 %v676
  %881 = vmatprep.subr.bf16.mxu0 0
  %882 = vmatpush2.bf16.msra.mxu0 %v675
  %883 = vmatprep.mubr.bf16.mxu0 %v332
  %884 = vmatmul.mubr.bf16.gmra.mxu0 %v331
  %v885 = vpop.f32.mrf.mxu0
  %v886 = vadd.f32 %v798, %v885
  %v887 = vpop.f32.mrf.mxu0
  %v888 = vpop.f32.mrf.mxu0
  %v889 = vadd.f32 %v801, %v888
  %v890 = vpop.f32.mrf.mxu0
  %891 = vmatprep.mubr.bf16.mxu0 %v339
  %892 = vmatmul.mubr.bf16.gmra.mxu0 %v338
  %v893 = vpop.f32.mrf.mxu0
  %v894 = vadd.f32 %v806, %v893
  %v895 = vpop.f32.mrf.mxu0
  %v896 = vpop.f32.mrf.mxu0
  %v897 = vadd.f32 %v809, %v896
  %v898 = vpop.f32.mrf.mxu0
  %899 = vmatprep.mubr.bf16.mxu0 %v346
  %900 = vmatmul.mubr.bf16.gmra.mxu0 %v345
  %v901 = vpop.f32.mrf.mxu0
  %v902 = vadd.f32 %v814, %v901
  %v903 = vpop.f32.mrf.mxu0
  %v904 = vpop.f32.mrf.mxu0
  %v905 = vadd.f32 %v817, %v904
  %v906 = vpop.f32.mrf.mxu0
  %907 = vmatprep.mubr.bf16.mxu0 %v353
  %908 = vmatmul.mubr.bf16.gmra.mxu0 %v352
  %v909 = vpop.f32.mrf.mxu0
  %v910 = vadd.f32 %v822, %v909
  %v911 = vpop.f32.mrf.mxu0
  %v912 = vpop.f32.mrf.mxu0
  %v913 = vadd.f32 %v825, %v912
  %v914 = vpop.f32.mrf.mxu0
  %915 = vmatprep.mubr.bf16.mxu0 %v360
  %916 = vmatmul.mubr.bf16.gmra.mxu0 %v359
  %v917 = vpop.f32.mrf.mxu0
  %v918 = vadd.f32 %v830, %v917
  %v919 = vpop.f32.mrf.mxu0
  %v920 = vpop.f32.mrf.mxu0
  %v921 = vadd.f32 %v833, %v920
  %v922 = vpop.f32.mrf.mxu0
  %923 = vmatprep.mubr.bf16.mxu0 %v367
  %924 = vmatmul.mubr.bf16.gmra.mxu0 %v366
  %v925 = vpop.f32.mrf.mxu0
  %v926 = vadd.f32 %v838, %v925
  %v927 = vpop.f32.mrf.mxu0
  %v928 = vpop.f32.mrf.mxu0
  %v929 = vadd.f32 %v841, %v928
  %v930 = vpop.f32.mrf.mxu0
  %931 = vmatprep.mubr.bf16.mxu0 %v374
  %932 = vmatmul.mubr.bf16.gmra.mxu0 %v373
  %v933 = vpop.f32.mrf.mxu0
  %v934 = vadd.f32 %v846, %v933
  %v935 = vpop.f32.mrf.mxu0
  %v936 = vpop.f32.mrf.mxu0
  %v937 = vpop.f32.mrf.mxu0
  %938 = vdwg.mxu0
  %939 = vmatprep.subr.bf16.mxu0 0
  %940 = vmatpush1.bf16.msra.mxu0 %v690
  %941 = vmatprep.subr.bf16.mxu0 0
  %942 = vmatpush1.bf16.msra.mxu0 %v689
  %943 = vmatprep.subr.bf16.mxu0 0
  %944 = vmatpush1.bf16.msra.mxu0 %v688
  %945 = vmatprep.subr.bf16.mxu0 0
  %946 = vmatpush1.bf16.msra.mxu0 %v687
  %947 = vmatprep.subr.bf16.mxu0 0
  %948 = vmatpush1.bf16.msra.mxu0 %v686
  %949 = vmatprep.subr.bf16.mxu0 0
  %950 = vmatpush1.bf16.msra.mxu0 %v685
  %951 = vmatprep.subr.bf16.mxu0 0
  %952 = vmatpush1.bf16.msra.mxu0 %v684
  %953 = vmatprep.subr.bf16.mxu0 0
  %954 = vmatpush1.bf16.msra.mxu0 %v683
  %955 = vmatprep.subr.bf16.mxu0 0
  %956 = vmatpush2.bf16.msra.mxu0 %v698
  %957 = vmatprep.subr.bf16.mxu0 0
  %958 = vmatpush2.bf16.msra.mxu0 %v697
  %959 = vmatprep.subr.bf16.mxu0 0
  %960 = vmatpush2.bf16.msra.mxu0 %v696
  %961 = vmatprep.subr.bf16.mxu0 0
  %962 = vmatpush2.bf16.msra.mxu0 %v695
  %963 = vmatprep.subr.bf16.mxu0 0
  %964 = vmatpush2.bf16.msra.mxu0 %v694
  %965 = vmatprep.subr.bf16.mxu0 0
  %966 = vmatpush2.bf16.msra.mxu0 %v693
  %967 = vmatprep.subr.bf16.mxu0 0
  %968 = vmatpush2.bf16.msra.mxu0 %v692
  %969 = vmatprep.subr.bf16.mxu0 0
  %970 = vmatpush2.bf16.msra.mxu0 %v691
  %971 = vmatprep.mubr.bf16.mxu0 %v334
  %972 = vmatmul.mubr.bf16.gmra.mxu0 %v333
  %v973 = vpop.f32.mrf.mxu0
  %v974 = vadd.f32 %v886, %v973
  %v975 = vpop.f32.mrf.mxu0
  %v976 = vpop.f32.mrf.mxu0
  %v977 = vadd.f32 %v889, %v976
  %v978 = vpop.f32.mrf.mxu0
  %979 = vmatprep.mubr.bf16.mxu0 %v341
  %980 = vmatmul.mubr.bf16.gmra.mxu0 %v340
  %v981 = vpop.f32.mrf.mxu0
  %v982 = vadd.f32 %v894, %v981
  %v983 = vpop.f32.mrf.mxu0
  %v984 = vpop.f32.mrf.mxu0
  %v985 = vadd.f32 %v897, %v984
  %v986 = vpop.f32.mrf.mxu0
  %987 = vmatprep.mubr.bf16.mxu0 %v348
  %988 = vmatmul.mubr.bf16.gmra.mxu0 %v347
  %v989 = vpop.f32.mrf.mxu0
  %v990 = vadd.f32 %v902, %v989
  %v991 = vpop.f32.mrf.mxu0
  %v992 = vpop.f32.mrf.mxu0
  %v993 = vadd.f32 %v905, %v992
  %v994 = vpop.f32.mrf.mxu0
  %995 = vmatprep.mubr.bf16.mxu0 %v355
  %996 = vmatmul.mubr.bf16.gmra.mxu0 %v354
  %v997 = vpop.f32.mrf.mxu0
  %v998 = vadd.f32 %v910, %v997
  %v999 = vpop.f32.mrf.mxu0
  %v1000 = vpop.f32.mrf.mxu0
  %v1001 = vadd.f32 %v913, %v1000
  %v1002 = vpop.f32.mrf.mxu0
  %1003 = vmatprep.mubr.bf16.mxu0 %v362
  %1004 = vmatmul.mubr.bf16.gmra.mxu0 %v361
  %v1005 = vpop.f32.mrf.mxu0
  %v1006 = vadd.f32 %v918, %v1005
  %v1007 = vpop.f32.mrf.mxu0
  %v1008 = vpop.f32.mrf.mxu0
  %v1009 = vadd.f32 %v921, %v1008
  %v1010 = vpop.f32.mrf.mxu0
  %1011 = vmatprep.mubr.bf16.mxu0 %v369
  %1012 = vmatmul.mubr.bf16.gmra.mxu0 %v368
  %v1013 = vpop.f32.mrf.mxu0
  %v1014 = vadd.f32 %v926, %v1013
  %v1015 = vpop.f32.mrf.mxu0
  %v1016 = vpop.f32.mrf.mxu0
  %v1017 = vadd.f32 %v929, %v1016
  %v1018 = vpop.f32.mrf.mxu0
  %1019 = vmatprep.mubr.bf16.mxu0 %v376
  %1020 = vmatmul.mubr.bf16.gmra.mxu0 %v375
  %v1021 = vpop.f32.mrf.mxu0
  %v1022 = vadd.f32 %v934, %v1021
  %v1023 = vpop.f32.mrf.mxu0
  %v1024 = vpop.f32.mrf.mxu0
  %v1025 = vpop.f32.mrf.mxu0
  %1026 = vdwg.mxu0
  %1027 = vmatprep.subr.bf16.mxu0 0
  %1028 = vmatpush1.bf16.msra.mxu0 %v706
  %1029 = vmatprep.subr.bf16.mxu0 0
  %1030 = vmatpush1.bf16.msra.mxu0 %v705
  %1031 = vmatprep.subr.bf16.mxu0 0
  %1032 = vmatpush1.bf16.msra.mxu0 %v704
  %1033 = vmatprep.subr.bf16.mxu0 0
  %1034 = vmatpush1.bf16.msra.mxu0 %v703
  %1035 = vmatprep.subr.bf16.mxu0 0
  %1036 = vmatpush1.bf16.msra.mxu0 %v702
  %1037 = vmatprep.subr.bf16.mxu0 0
  %1038 = vmatpush1.bf16.msra.mxu0 %v701
  %1039 = vmatprep.subr.bf16.mxu0 0
  %1040 = vmatpush1.bf16.msra.mxu0 %v700
  %1041 = vmatprep.subr.bf16.mxu0 0
  %1042 = vmatpush1.bf16.msra.mxu0 %v699
  %1043 = vmatprep.subr.bf16.mxu0 0
  %1044 = vmatpush2.bf16.msra.mxu0 0
  %1045 = vmatprep.subr.bf16.mxu0 0
  %1046 = vmatpush2.bf16.msra.mxu0 0
  %1047 = vmatprep.subr.bf16.mxu0 0
  %1048 = vmatpush2.bf16.msra.mxu0 0
  %1049 = vmatprep.subr.bf16.mxu0 0
  %1050 = vmatpush2.bf16.msra.mxu0 0
  %1051 = vmatprep.subr.bf16.mxu0 0
  %1052 = vmatpush2.bf16.msra.mxu0 0
  %1053 = vmatprep.subr.bf16.mxu0 0
  %1054 = vmatpush2.bf16.msra.mxu0 0
  %1055 = vmatprep.subr.bf16.mxu0 0
  %1056 = vmatpush2.bf16.msra.mxu0 0
  %1057 = vmatprep.subr.bf16.mxu0 0
  %1058 = vmatpush2.bf16.msra.mxu0 0
  %1059 = vmatprep.mubr.bf16.mxu0 0
  %1060 = vmatmul.mubr.bf16.gmra.mxu0 %v335
  %v1061 = vpop.f32.mrf.mxu0
  %v1062 = vadd.f32 %v974, %v1061
  %v1063 = vpop.f32.mrf.mxu0
  %v1064 = vpop.f32.mrf.mxu0
  %v1065 = vadd.f32 %v977, %v1064
  %v1066 = vpop.f32.mrf.mxu0
  %1067 = vmatprep.mubr.bf16.mxu0 0
  %1068 = vmatmul.mubr.bf16.gmra.mxu0 %v342
  %v1069 = vpop.f32.mrf.mxu0
  %v1070 = vadd.f32 %v982, %v1069
  %v1071 = vpop.f32.mrf.mxu0
  %v1072 = vpop.f32.mrf.mxu0
  %v1073 = vadd.f32 %v985, %v1072
  %v1074 = vpop.f32.mrf.mxu0
  %1075 = vmatprep.mubr.bf16.mxu0 0
  %1076 = vmatmul.mubr.bf16.gmra.mxu0 %v349
  %v1077 = vpop.f32.mrf.mxu0
  %v1078 = vadd.f32 %v990, %v1077
  %v1079 = vpop.f32.mrf.mxu0
  %v1080 = vpop.f32.mrf.mxu0
  %v1081 = vadd.f32 %v993, %v1080
  %v1082 = vpop.f32.mrf.mxu0
  %1083 = vmatprep.mubr.bf16.mxu0 0
  %1084 = vmatmul.mubr.bf16.gmra.mxu0 %v356
  %v1085 = vpop.f32.mrf.mxu0
  %v1086 = vadd.f32 %v998, %v1085
  %v1087 = vpop.f32.mrf.mxu0
  %v1088 = vpop.f32.mrf.mxu0
  %v1089 = vadd.f32 %v1001, %v1088
  %v1090 = vpop.f32.mrf.mxu0
  %1091 = vmatprep.mubr.bf16.mxu0 0
  %1092 = vmatmul.mubr.bf16.gmra.mxu0 %v363
  %v1093 = vpop.f32.mrf.mxu0
  %v1094 = vadd.f32 %v1006, %v1093
  %v1095 = vpop.f32.mrf.mxu0
  %v1096 = vpop.f32.mrf.mxu0
  %v1097 = vadd.f32 %v1009, %v1096
  %v1098 = vpop.f32.mrf.mxu0
  %1099 = vmatprep.mubr.bf16.mxu0 0
  %1100 = vmatmul.mubr.bf16.gmra.mxu0 %v370
  %v1101 = vpop.f32.mrf.mxu0
  %v1102 = vadd.f32 %v1014, %v1101
  %v1103 = vpop.f32.mrf.mxu0
  %v1104 = vpop.f32.mrf.mxu0
  %v1105 = vadd.f32 %v1017, %v1104
  %v1106 = vpop.f32.mrf.mxu0
  %1107 = vmatprep.mubr.bf16.mxu0 0
  %1108 = vmatmul.mubr.bf16.gmra.mxu0 %v377
  %v1109 = vpop.f32.mrf.mxu0
  %v1110 = vadd.f32 %v1022, %v1109
  %v1111 = vpop.f32.mrf.mxu0
  %v1112 = vpop.f32.mrf.mxu0
  %v1113 = vpop.f32.mrf.mxu0
  %1114 = vdwg.mxu0
  %v1115 = vmax.f32 %v1062, 0.0
  %v1116 = vmax.f32 %v1065, 0.0
  %v1117 = vmax.f32 %v1070, 0.0
  %v1118 = vmax.f32 %v1073, 0.0
  %v1119 = vmax.f32 %v1078, 0.0
  %v1120 = vmax.f32 %v1081, 0.0
  %v1121 = vmax.f32 %v1086, 0.0
  %v1122 = vmax.f32 %v1089, 0.0
  %v1123 = vmax.f32 %v1094, 0.0
  %v1124 = vmax.f32 %v1097, 0.0
  %v1125 = vmax.f32 %v1102, 0.0
  %v1126 = vmax.f32 %v1105, 0.0
  %v1127 = vmax.f32 %v1110, 0.0
  %v1128 = vpack.c.bf16 %v1116, %v1115
  %v1129 = vpack.c.bf16 %v1118, %v1117
  %v1130 = vpack.c.bf16 %v1120, %v1119
  %v1131 = vpack.c.bf16 %v1122, %v1121
  %v1132 = vpack.c.bf16 %v1124, %v1123
  %v1133 = vpack.c.bf16 %v1126, %v1125
  %v1134 = vpack.c.bf16 %v1127, %v1127
  %v1142 = vunpack.c.l.b16 %v1128
  %v1143 = vunpack.c.h.b16 %v1128
  %v1144 = vunpack.c.l.b16 %v1129
  %v1145 = vunpack.c.h.b16 %v1129
  %v1146 = vunpack.c.l.b16 %v1130
  %v1147 = vunpack.c.h.b16 %v1130
  %v1148 = vunpack.c.l.b16 %v1131
  %v1149 = vunpack.c.h.b16 %v1131
  %v1150 = vunpack.c.l.b16 %v1132
  %v1151 = vunpack.c.h.b16 %v1132
  %v1152 = vunpack.c.l.b16 %v1133
  %v1153 = vunpack.c.h.b16 %v1133
  %v1154 = vunpack.c.l.b16 %v1134
  %v1155 = vpack.c.b16 %v1142, %v1142
  %v1156 = vpack.c.b16 %v1143, %v1143
  %v1157 = vpack.c.b16 %v1144, %v1144
  %v1158 = vpack.c.b16 %v1145, %v1145
  %v1159 = vpack.c.b16 %v1146, %v1146
  %v1160 = vpack.c.b16 %v1147, %v1147
  %v1161 = vpack.c.b16 %v1148, %v1148
  %v1162 = vpack.c.b16 %v1149, %v1149
  %v1163 = vpack.c.b16 %v1150, %v1150
  %v1164 = vpack.c.b16 %v1151, %v1151
  %v1165 = vpack.c.b16 %v1152, %v1152
  %v1166 = vpack.c.b16 %v1153, %v1153
  %v1167 = vpack.c.b16 %v1154, %v1154
  %1181 = vst [vmem:[%s3] sm:$0xf] %v1155
  %1182 = vst [vmem:[%s3 + $0x4] sm:$0xf] %v1156
  %1183 = vst [vmem:[%s3 + $0x8] sm:$0xf] %v1157
  %1184 = vst [vmem:[%s3 + $0xc] sm:$0xf] %v1158
  %1185 = vst [vmem:[%s3 + $0x10] sm:$0xf] %v1159
  %1186 = vst [vmem:[%s3 + $0x14] sm:$0xf] %v1160
  %1187 = vst [vmem:[%s3 + $0x18] sm:$0xf] %v1161
  %1188 = vst [vmem:[%s3 + $0x1c] sm:$0xf] %v1162
  %1189 = vst [vmem:[%s3 + $0x20] sm:$0xf] %v1163
  %1190 = vst [vmem:[%s3 + $0x24] sm:$0xf] %v1164
  %1191 = vst [vmem:[%s3 + $0x28] sm:$0xf] %v1165
  %1192 = vst [vmem:[%s3 + $0x2c] sm:$0xf] %v1166
  %1193 = vst [vmem:[%s3 + $0x30] sm:$0xf] %v1167
  // Predicated region
  $region14: #{dqn_forward.5} parent=0 // pred_check
    _
  $region15: #{dqn_forward.5} parent=0 // pred_check_branch
    %1195 = sbr.rel (0) target = $region17
  $region16: #{dqn_forward.5} parent=0 // pred_region
    _
  $region17: #{dqn_forward.5} parent=0 // pred_fallthru
    _
  // Predicated region
  $region18: #{dqn_forward.5} parent=0 // pred_check
    _
  $region19: #{dqn_forward.5} parent=0 // pred_check_branch
    %1197 = sbr.rel (0) target = $region21
  $region20: #{dqn_forward.5} parent=0 // pred_region
    _
  $region21: #{dqn_forward.5} parent=0 // pred_fallthru
    _

// kernel: dqn_forward.6
$region0: #{dqn_forward.6}
  #allocation0 [shape = 'u32[]', space=smem, size = 0x4, offset = 0x4, fixed_abs, tag = 'smem constant byte address 0x4 - core index']
  #allocation1 [shape = 'u32[144,128]{1,0:T(1,128)}', space=vmem, size = 0x12000, scoped, tag = 'internal scratch']
  %s0 = inlined_call_operand.vmem [shape: bf16[32,1024], index: 0, kind: input, shape index: {}]
  %s1 = inlined_call_operand.vmem [shape: bf16[1024,128], index: 1, kind: input, shape index: {}]
  %s2 = inlined_call_operand.vmem [shape: f32[1,128], index: 2, kind: input, shape index: {}]
  %s3 = inlined_call_operand.vmem [shape: bf16[32,128], index: 3, kind: output, shape index: {}]
  %s4 = sld [smem:[#allocation0]]
  $region22: #{dqn_forward.6} parent=0
    _
  %s6 = ssub.s32 1, %s4
  %s7 = scalar_select 0, %s6, %s4
  // Predicated region
  $region2: #{dqn_forward.6} parent=0 // pred_check
    _
  $region3: #{dqn_forward.6} parent=0 // pred_check_branch
    %9 = sbr.rel (0) target = $region5
  $region4: #{dqn_forward.6} parent=0 // pred_region
    _
  $region5: #{dqn_forward.6} parent=0 // pred_fallthru
    _
  // Predicated region
  $region6: #{dqn_forward.6} parent=0 // pred_check
    _
  $region7: #{dqn_forward.6} parent=0 // pred_check_branch
    %11 = sbr.rel (0) target = $region9
  $region8: #{dqn_forward.6} parent=0 // pred_region
    _
  $region9: #{dqn_forward.6} parent=0 // pred_fallthru
    _
  // Predicated region
  $region10: #{dqn_forward.6} parent=0 // pred_check
    _
  $region11: #{dqn_forward.6} parent=0 // pred_check_branch
    %13 = sbr.rel (0) target = $region13
  $region12: #{dqn_forward.6} parent=0 // pred_region
    _
  $region13: #{dqn_forward.6} parent=0 // pred_fallthru
    _
  %v15 = vld [vmem:[%s0] sm:$0xff]
  %v16 = vld [vmem:[%s0 + $0x8] sm:$0xff]
  %v17 = vld [vmem:[%s0 + $0x10] sm:$0xff]
  %v18 = vld [vmem:[%s0 + $0x18] sm:$0xff]
  %v19 = vld [vmem:[%s0 + $0x20] sm:$0xff]
  %v20 = vld [vmem:[%s0 + $0x28] sm:$0xff]
  %v21 = vld [vmem:[%s0 + $0x30] sm:$0xff]
  %v22 = vld [vmem:[%s0 + $0x38] sm:$0xff]
  %v23 = vld [vmem:[%s0 + $0x40] sm:$0xff]
  %v24 = vld [vmem:[%s0 + $0x48] sm:$0xff]
  %v25 = vld [vmem:[%s0 + $0x50] sm:$0xff]
  %v26 = vld [vmem:[%s0 + $0x58] sm:$0xff]
  %v27 = vld [vmem:[%s0 + $0x60] sm:$0xff]
  %v28 = vld [vmem:[%s0 + $0x68] sm:$0xff]
  %v29 = vld [vmem:[%s0 + $0x70] sm:$0xff]
  %v30 = vld [vmem:[%s0 + $0x78] sm:$0xff]
  %v31 = vld [vmem:[%s1] sm:$0xf]
  %v32 = vld [vmem:[%s1 + $0x4] sm:$0xf]
  %v33 = vld [vmem:[%s1 + $0x8] sm:$0xf]
  %v34 = vld [vmem:[%s1 + $0xc] sm:$0xf]
  %v35 = vld [vmem:[%s1 + $0x10] sm:$0xf]
  %v36 = vld [vmem:[%s1 + $0x14] sm:$0xf]
  %v37 = vld [vmem:[%s1 + $0x18] sm:$0xf]
  %v38 = vld [vmem:[%s1 + $0x1c] sm:$0xf]
  %v39 = vld [vmem:[%s1 + $0x20] sm:$0xf]
  %v40 = vld [vmem:[%s1 + $0x24] sm:$0xf]
  %v41 = vld [vmem:[%s1 + $0x28] sm:$0xf]
  %v42 = vld [vmem:[%s1 + $0x2c] sm:$0xf]
  %v43 = vld [vmem:[%s1 + $0x30] sm:$0xf]
  %v44 = vld [vmem:[%s1 + $0x34] sm:$0xf]
  %v45 = vld [vmem:[%s1 + $0x38] sm:$0xf]
  %v46 = vld [vmem:[%s1 + $0x3c] sm:$0xf]
  %v47 = vld [vmem:[%s1 + $0x40] sm:$0xf]
  %v48 = vld [vmem:[%s1 + $0x44] sm:$0xf]
  %v49 = vld [vmem:[%s1 + $0x48] sm:$0xf]
  %v50 = vld [vmem:[%s1 + $0x4c] sm:$0xf]
  %v51 = vld [vmem:[%s1 + $0x50] sm:$0xf]
  %v52 = vld [vmem:[%s1 + $0x54] sm:$0xf]
  %v53 = vld [vmem:[%s1 + $0x58] sm:$0xf]
  %v54 = vld [vmem:[%s1 + $0x5c] sm:$0xf]
  %v55 = vld [vmem:[%s1 + $0x60] sm:$0xf]
  %v56 = vld [vmem:[%s1 + $0x64] sm:$0xf]
  %v57 = vld [vmem:[%s1 + $0x68] sm:$0xf]
  %v58 = vld [vmem:[%s1 + $0x6c] sm:$0xf]
  %v59 = vld [vmem:[%s1 + $0x70] sm:$0xf]
  %v60 = vld [vmem:[%s1 + $0x74] sm:$0xf]
  %v61 = vld [vmem:[%s1 + $0x78] sm:$0xf]
  %v62 = vld [vmem:[%s1 + $0x7c] sm:$0xf]
  %v63 = vld [vmem:[%s1 + $0x80] sm:$0xf]
  %v64 = vld [vmem:[%s1 + $0x84] sm:$0xf]
  %v65 = vld [vmem:[%s1 + $0x88] sm:$0xf]
  %v66 = vld [vmem:[%s1 + $0x8c] sm:$0xf]
  %v67 = vld [vmem:[%s1 + $0x90] sm:$0xf]
  %v68 = vld [vmem:[%s1 + $0x94] sm:$0xf]
  %v69 = vld [vmem:[%s1 + $0x98] sm:$0xf]
  %v70 = vld [vmem:[%s1 + $0x9c] sm:$0xf]
  %v71 = vld [vmem:[%s1 + $0xa0] sm:$0xf]
  %v72 = vld [vmem:[%s1 + $0xa4] sm:$0xf]
  %v73 = vld [vmem:[%s1 + $0xa8] sm:$0xf]
  %v74 = vld [vmem:[%s1 + $0xac] sm:$0xf]
  %v75 = vld [vmem:[%s1 + $0xb0] sm:$0xf]
  %v76 = vld [vmem:[%s1 + $0xb4] sm:$0xf]
  %v77 = vld [vmem:[%s1 + $0xb8] sm:$0xf]
  %v78 = vld [vmem:[%s1 + $0xbc] sm:$0xf]
  %v79 = vld [vmem:[%s1 + $0xc0] sm:$0xf]
  %v80 = vld [vmem:[%s1 + $0xc4] sm:$0xf]
  %v81 = vld [vmem:[%s1 + $0xc8] sm:$0xf]
  %v82 = vld [vmem:[%s1 + $0xcc] sm:$0xf]
  %v83 = vld [vmem:[%s1 + $0xd0] sm:$0xf]
  %v84 = vld [vmem:[%s1 + $0xd4] sm:$0xf]
  %v85 = vld [vmem:[%s1 + $0xd8] sm:$0xf]
  %v86 = vld [vmem:[%s1 + $0xdc] sm:$0xf]
  %v87 = vld [vmem:[%s1 + $0xe0] sm:$0xf]
  %v88 = vld [vmem:[%s1 + $0xe4] sm:$0xf]
  %v89 = vld [vmem:[%s1 + $0xe8] sm:$0xf]
  %v90 = vld [vmem:[%s1 + $0xec] sm:$0xf]
  %v91 = vld [vmem:[%s1 + $0xf0] sm:$0xf]
  %v92 = vld [vmem:[%s1 + $0xf4] sm:$0xf]
  %v93 = vld [vmem:[%s1 + $0xf8] sm:$0xf]
  %v94 = vld [vmem:[%s1 + $0xfc] sm:$0xf]
  %v95 = vld [vmem:[%s1 + $0x100] sm:$0xf]
  %v96 = vld [vmem:[%s1 + $0x104] sm:$0xf]
  %v97 = vld [vmem:[%s1 + $0x108] sm:$0xf]
  %v98 = vld [vmem:[%s1 + $0x10c] sm:$0xf]
  %v99 = vld [vmem:[%s1 + $0x110] sm:$0xf]
  %v100 = vld [vmem:[%s1 + $0x114] sm:$0xf]
  %v101 = vld [vmem:[%s1 + $0x118] sm:$0xf]
  %v102 = vld [vmem:[%s1 + $0x11c] sm:$0xf]
  %v103 = vld [vmem:[%s1 + $0x120] sm:$0xf]
  %v104 = vld [vmem:[%s1 + $0x124] sm:$0xf]
  %v105 = vld [vmem:[%s1 + $0x128] sm:$0xf]
  %v106 = vld [vmem:[%s1 + $0x12c] sm:$0xf]
  %v107 = vld [vmem:[%s1 + $0x130] sm:$0xf]
  %v108 = vld [vmem:[%s1 + $0x134] sm:$0xf]
  %v109 = vld [vmem:[%s1 + $0x138] sm:$0xf]
  %v110 = vld [vmem:[%s1 + $0x13c] sm:$0xf]
  %v111 = vld [vmem:[%s1 + $0x140] sm:$0xf]
  %v112 = vld [vmem:[%s1 + $0x144] sm:$0xf]
  %v113 = vld [vmem:[%s1 + $0x148] sm:$0xf]
  %v114 = vld [vmem:[%s1 + $0x14c] sm:$0xf]
  %v115 = vld [vmem:[%s1 + $0x150] sm:$0xf]
  %v116 = vld [vmem:[%s1 + $0x154] sm:$0xf]
  %v117 = vld [vmem:[%s1 + $0x158] sm:$0xf]
  %v118 = vld [vmem:[%s1 + $0x15c] sm:$0xf]
  %v119 = vld [vmem:[%s1 + $0x160] sm:$0xf]
  %v120 = vld [vmem:[%s1 + $0x164] sm:$0xf]
  %v121 = vld [vmem:[%s1 + $0x168] sm:$0xf]
  %v122 = vld [vmem:[%s1 + $0x16c] sm:$0xf]
  %v123 = vld [vmem:[%s1 + $0x170] sm:$0xf]
  %v124 = vld [vmem:[%s1 + $0x174] sm:$0xf]
  %v125 = vld [vmem:[%s1 + $0x178] sm:$0xf]
  %v126 = vld [vmem:[%s1 + $0x17c] sm:$0xf]
  %v127 = vld [vmem:[%s1 + $0x180] sm:$0xf]
  %v128 = vld [vmem:[%s1 + $0x184] sm:$0xf]
  %v129 = vld [vmem:[%s1 + $0x188] sm:$0xf]
  %v130 = vld [vmem:[%s1 + $0x18c] sm:$0xf]
  %v131 = vld [vmem:[%s1 + $0x190] sm:$0xf]
  %v132 = vld [vmem:[%s1 + $0x194] sm:$0xf]
  %v133 = vld [vmem:[%s1 + $0x198] sm:$0xf]
  %v134 = vld [vmem:[%s1 + $0x19c] sm:$0xf]
  %v135 = vld [vmem:[%s1 + $0x1a0] sm:$0xf]
  %v136 = vld [vmem:[%s1 + $0x1a4] sm:$0xf]
  %v137 = vld [vmem:[%s1 + $0x1a8] sm:$0xf]
  %v138 = vld [vmem:[%s1 + $0x1ac] sm:$0xf]
  %v139 = vld [vmem:[%s1 + $0x1b0] sm:$0xf]
  %v140 = vld [vmem:[%s1 + $0x1b4] sm:$0xf]
  %v141 = vld [vmem:[%s1 + $0x1b8] sm:$0xf]
  %v142 = vld [vmem:[%s1 + $0x1bc] sm:$0xf]
  %v143 = vld [vmem:[%s1 + $0x1c0] sm:$0xf]
  %v144 = vld [vmem:[%s1 + $0x1c4] sm:$0xf]
  %v145 = vld [vmem:[%s1 + $0x1c8] sm:$0xf]
  %v146 = vld [vmem:[%s1 + $0x1cc] sm:$0xf]
  %v147 = vld [vmem:[%s1 + $0x1d0] sm:$0xf]
  %v148 = vld [vmem:[%s1 + $0x1d4] sm:$0xf]
  %v149 = vld [vmem:[%s1 + $0x1d8] sm:$0xf]
  %v150 = vld [vmem:[%s1 + $0x1dc] sm:$0xf]
  %v151 = vld [vmem:[%s1 + $0x1e0] sm:$0xf]
  %v152 = vld [vmem:[%s1 + $0x1e4] sm:$0xf]
  %v153 = vld [vmem:[%s1 + $0x1e8] sm:$0xf]
  %v154 = vld [vmem:[%s1 + $0x1ec] sm:$0xf]
  %v155 = vld [vmem:[%s1 + $0x1f0] sm:$0xf]
  %v156 = vld [vmem:[%s1 + $0x1f4] sm:$0xf]
  %v157 = vld [vmem:[%s1 + $0x1f8] sm:$0xf]
  %v158 = vld [vmem:[%s1 + $0x1fc] sm:$0xf]
  %v159 = vld [vmem:[%s2] sm:$0x1]
  %v161 = vlaneseq
  %v162 = vshrl.u32 %v161, 7
  %v163 = vsub.s32 0, %v162
  %v164 = vrot.slane %v159, %v163
  %v182 = vunpack.c.l.b16 %v15
  %v183 = vunpack.c.h.b16 %v15
  %v184 = vunpack.c.l.b16 %v16
  %v185 = vunpack.c.h.b16 %v16
  %v186 = vunpack.c.l.b16 %v17
  %v187 = vunpack.c.h.b16 %v17
  %v188 = vunpack.c.l.b16 %v18
  %v189 = vunpack.c.h.b16 %v18
  %v190 = vunpack.c.l.b16 %v19
  %v191 = vunpack.c.h.b16 %v19
  %v192 = vunpack.c.l.b16 %v20
  %v193 = vunpack.c.h.b16 %v20
  %v194 = vunpack.c.l.b16 %v21
  %v195 = vunpack.c.h.b16 %v21
  %v196 = vunpack.c.l.b16 %v22
  %v197 = vunpack.c.h.b16 %v22
  %v198 = vunpack.c.l.b16 %v23
  %v199 = vunpack.c.h.b16 %v23
  %v200 = vunpack.c.l.b16 %v24
  %v201 = vunpack.c.h.b16 %v24
  %v202 = vunpack.c.l.b16 %v25
  %v203 = vunpack.c.h.b16 %v25
  %v204 = vunpack.c.l.b16 %v26
  %v205 = vunpack.c.h.b16 %v26
  %v206 = vunpack.c.l.b16 %v27
  %v207 = vunpack.c.h.b16 %v27
  %v208 = vunpack.c.l.b16 %v28
  %v209 = vunpack.c.h.b16 %v28
  %v210 = vunpack.c.l.b16 %v29
  %v211 = vunpack.c.h.b16 %v29
  %v212 = vunpack.c.l.b16 %v30
  %v213 = vunpack.c.h.b16 %v30
  %v214 = vpack.c.b16 %v190, %v182
  %v215 = vpack.c.b16 %v191, %v183
  %v216 = vpack.c.b16 %v192, %v184
  %v217 = vpack.c.b16 %v193, %v185
  %v218 = vpack.c.b16 %v194, %v186
  %v219 = vpack.c.b16 %v195, %v187
  %v220 = vpack.c.b16 %v196, %v188
  %v221 = vpack.c.b16 %v197, %v189
  %v222 = vpack.c.b16 %v206, %v198
  %v223 = vpack.c.b16 %v207, %v199
  %v224 = vpack.c.b16 %v208, %v200
  %v225 = vpack.c.b16 %v209, %v201
  %v226 = vpack.c.b16 %v210, %v202
  %v227 = vpack.c.b16 %v211, %v203
  %v228 = vpack.c.b16 %v212, %v204
  %v229 = vpack.c.b16 %v213, %v205
  %v374 = vunpack.c.l.b16 %v31
  %v375 = vunpack.c.l.b16 %v32
  %v376 = vunpack.c.l.b16 %v33
  %v377 = vunpack.c.l.b16 %v34
  %v378 = vunpack.c.l.b16 %v35
  %v379 = vunpack.c.l.b16 %v36
  %v380 = vunpack.c.l.b16 %v37
  %v381 = vunpack.c.l.b16 %v38
  %v382 = vunpack.c.l.b16 %v39
  %v383 = vunpack.c.l.b16 %v40
  %v384 = vunpack.c.l.b16 %v41
  %v385 = vunpack.c.l.b16 %v42
  %v386 = vunpack.c.l.b16 %v43
  %v387 = vunpack.c.l.b16 %v44
  %v388 = vunpack.c.l.b16 %v45
  %v389 = vunpack.c.l.b16 %v46
  %v390 = vunpack.c.l.b16 %v47
  %v391 = vunpack.c.l.b16 %v48
  %v392 = vunpack.c.l.b16 %v49
  %v393 = vunpack.c.l.b16 %v50
  %v394 = vunpack.c.l.b16 %v51
  %v395 = vunpack.c.l.b16 %v52
  %v396 = vunpack.c.l.b16 %v53
  %v397 = vunpack.c.l.b16 %v54
  %v398 = vunpack.c.l.b16 %v55
  %v399 = vunpack.c.l.b16 %v56
  %v400 = vunpack.c.l.b16 %v57
  %v401 = vunpack.c.l.b16 %v58
  %v402 = vunpack.c.l.b16 %v59
  %v403 = vunpack.c.l.b16 %v60
  %v404 = vunpack.c.l.b16 %v61
  %v405 = vunpack.c.l.b16 %v62
  %v406 = vunpack.c.l.b16 %v63
  %v407 = vunpack.c.l.b16 %v64
  %v408 = vunpack.c.l.b16 %v65
  %v409 = vunpack.c.l.b16 %v66
  %v410 = vunpack.c.l.b16 %v67
  %v411 = vunpack.c.l.b16 %v68
  %v412 = vunpack.c.l.b16 %v69
  %v413 = vunpack.c.l.b16 %v70
  %v414 = vunpack.c.l.b16 %v71
  %v415 = vunpack.c.l.b16 %v72
  %v416 = vunpack.c.l.b16 %v73
  %v417 = vunpack.c.l.b16 %v74
  %v418 = vunpack.c.l.b16 %v75
  %v419 = vunpack.c.l.b16 %v76
  %v420 = vunpack.c.l.b16 %v77
  %v421 = vunpack.c.l.b16 %v78
  %v422 = vunpack.c.l.b16 %v79
  %v423 = vunpack.c.l.b16 %v80
  %v424 = vunpack.c.l.b16 %v81
  %v425 = vunpack.c.l.b16 %v82
  %v426 = vunpack.c.l.b16 %v83
  %v427 = vunpack.c.l.b16 %v84
  %v428 = vunpack.c.l.b16 %v85
  %v429 = vunpack.c.l.b16 %v86
  %v430 = vunpack.c.l.b16 %v87
  %v431 = vunpack.c.l.b16 %v88
  %v432 = vunpack.c.l.b16 %v89
  %v433 = vunpack.c.l.b16 %v90
  %v434 = vunpack.c.l.b16 %v91
  %v435 = vunpack.c.l.b16 %v92
  %v436 = vunpack.c.l.b16 %v93
  %v437 = vunpack.c.l.b16 %v94
  %v438 = vunpack.c.l.b16 %v95
  %v439 = vunpack.c.l.b16 %v96
  %v440 = vunpack.c.l.b16 %v97
  %v441 = vunpack.c.l.b16 %v98
  %v442 = vunpack.c.l.b16 %v99
  %v443 = vunpack.c.l.b16 %v100
  %v444 = vunpack.c.l.b16 %v101
  %v445 = vunpack.c.l.b16 %v102
  %v446 = vunpack.c.l.b16 %v103
  %v447 = vunpack.c.l.b16 %v104
  %v448 = vunpack.c.l.b16 %v105
  %v449 = vunpack.c.l.b16 %v106
  %v450 = vunpack.c.l.b16 %v107
  %v451 = vunpack.c.l.b16 %v108
  %v452 = vunpack.c.l.b16 %v109
  %v453 = vunpack.c.l.b16 %v110
  %v454 = vunpack.c.l.b16 %v111
  %v455 = vunpack.c.l.b16 %v112
  %v456 = vunpack.c.l.b16 %v113
  %v457 = vunpack.c.l.b16 %v114
  %v458 = vunpack.c.l.b16 %v115
  %v459 = vunpack.c.l.b16 %v116
  %v460 = vunpack.c.l.b16 %v117
  %v461 = vunpack.c.l.b16 %v118
  %v462 = vunpack.c.l.b16 %v119
  %v463 = vunpack.c.l.b16 %v120
  %v464 = vunpack.c.l.b16 %v121
  %v465 = vunpack.c.l.b16 %v122
  %v466 = vunpack.c.l.b16 %v123
  %v467 = vunpack.c.l.b16 %v124
  %v468 = vunpack.c.l.b16 %v125
  %v469 = vunpack.c.l.b16 %v126
  %v470 = vunpack.c.l.b16 %v127
  %v471 = vunpack.c.l.b16 %v128
  %v472 = vunpack.c.l.b16 %v129
  %v473 = vunpack.c.l.b16 %v130
  %v474 = vunpack.c.l.b16 %v131
  %v475 = vunpack.c.l.b16 %v132
  %v476 = vunpack.c.l.b16 %v133
  %v477 = vunpack.c.l.b16 %v134
  %v478 = vunpack.c.l.b16 %v135
  %v479 = vunpack.c.l.b16 %v136
  %v480 = vunpack.c.l.b16 %v137
  %v481 = vunpack.c.l.b16 %v138
  %v482 = vunpack.c.l.b16 %v139
  %v483 = vunpack.c.l.b16 %v140
  %v484 = vunpack.c.l.b16 %v141
  %v485 = vunpack.c.l.b16 %v142
  %v486 = vunpack.c.l.b16 %v143
  %v487 = vunpack.c.l.b16 %v144
  %v488 = vunpack.c.l.b16 %v145
  %v489 = vunpack.c.l.b16 %v146
  %v490 = vunpack.c.l.b16 %v147
  %v491 = vunpack.c.l.b16 %v148
  %v492 = vunpack.c.l.b16 %v149
  %v493 = vunpack.c.l.b16 %v150
  %v494 = vunpack.c.l.b16 %v151
  %v495 = vunpack.c.l.b16 %v152
  %v496 = vunpack.c.l.b16 %v153
  %v497 = vunpack.c.l.b16 %v154
  %v498 = vunpack.c.l.b16 %v155
  %v499 = vunpack.c.l.b16 %v156
  %v500 = vunpack.c.l.b16 %v157
  %v501 = vunpack.c.l.b16 %v158
  %v502 = vpack.c.b16 %v375, %v374
  %v503 = vpack.c.b16 %v377, %v376
  %v504 = vpack.c.b16 %v379, %v378
  %v505 = vpack.c.b16 %v381, %v380
  %v506 = vpack.c.b16 %v383, %v382
  %v507 = vpack.c.b16 %v385, %v384
  %v508 = vpack.c.b16 %v387, %v386
  %v509 = vpack.c.b16 %v389, %v388
  %v510 = vpack.c.b16 %v391, %v390
  %v511 = vpack.c.b16 %v393, %v392
  %v512 = vpack.c.b16 %v395, %v394
  %v513 = vpack.c.b16 %v397, %v396
  %v514 = vpack.c.b16 %v399, %v398
  %v515 = vpack.c.b16 %v401, %v400
  %v516 = vpack.c.b16 %v403, %v402
  %v517 = vpack.c.b16 %v405, %v404
  %v518 = vpack.c.b16 %v407, %v406
  %v519 = vpack.c.b16 %v409, %v408
  %v520 = vpack.c.b16 %v411, %v410
  %v521 = vpack.c.b16 %v413, %v412
  %v522 = vpack.c.b16 %v415, %v414
  %v523 = vpack.c.b16 %v417, %v416
  %v524 = vpack.c.b16 %v419, %v418
  %v525 = vpack.c.b16 %v421, %v420
  %v526 = vpack.c.b16 %v423, %v422
  %v527 = vpack.c.b16 %v425, %v424
  %v528 = vpack.c.b16 %v427, %v426
  %v529 = vpack.c.b16 %v429, %v428
  %v530 = vpack.c.b16 %v431, %v430
  %v531 = vpack.c.b16 %v433, %v432
  %v532 = vpack.c.b16 %v435, %v434
  %v533 = vpack.c.b16 %v437, %v436
  %v534 = vpack.c.b16 %v439, %v438
  %v535 = vpack.c.b16 %v441, %v440
  %v536 = vpack.c.b16 %v443, %v442
  %v537 = vpack.c.b16 %v445, %v444
  %v538 = vpack.c.b16 %v447, %v446
  %v539 = vpack.c.b16 %v449, %v448
  %v540 = vpack.c.b16 %v451, %v450
  %v541 = vpack.c.b16 %v453, %v452
  %v542 = vpack.c.b16 %v455, %v454
  %v543 = vpack.c.b16 %v457, %v456
  %v544 = vpack.c.b16 %v459, %v458
  %v545 = vpack.c.b16 %v461, %v460
  %v546 = vpack.c.b16 %v463, %v462
  %v547 = vpack.c.b16 %v465, %v464
  %v548 = vpack.c.b16 %v467, %v466
  %v549 = vpack.c.b16 %v469, %v468
  %v550 = vpack.c.b16 %v471, %v470
  %v551 = vpack.c.b16 %v473, %v472
  %v552 = vpack.c.b16 %v475, %v474
  %v553 = vpack.c.b16 %v477, %v476
  %v554 = vpack.c.b16 %v479, %v478
  %v555 = vpack.c.b16 %v481, %v480
  %v556 = vpack.c.b16 %v483, %v482
  %v557 = vpack.c.b16 %v485, %v484
  %v558 = vpack.c.b16 %v487, %v486
  %v559 = vpack.c.b16 %v489, %v488
  %v560 = vpack.c.b16 %v491, %v490
  %v561 = vpack.c.b16 %v493, %v492
  %v562 = vpack.c.b16 %v495, %v494
  %v563 = vpack.c.b16 %v497, %v496
  %v564 = vpack.c.b16 %v499, %v498
  %v565 = vpack.c.b16 %v501, %v500
  %630 = vmatprep.subr.bf16.mxu0 0
  %631 = vmatpush1.bf16.msra.mxu0 %v509
  %632 = vmatprep.subr.bf16.mxu0 0
  %633 = vmatpush1.bf16.msra.mxu0 %v508
  %634 = vmatprep.subr.bf16.mxu0 0
  %635 = vmatpush1.bf16.msra.mxu0 %v507
  %636 = vmatprep.subr.bf16.mxu0 0
  %637 = vmatpush1.bf16.msra.mxu0 %v506
  %638 = vmatprep.subr.bf16.mxu0 0
  %639 = vmatpush1.bf16.msra.mxu0 %v505
  %640 = vmatprep.subr.bf16.mxu0 0
  %641 = vmatpush1.bf16.msra.mxu0 %v504
  %642 = vmatprep.subr.bf16.mxu0 0
  %643 = vmatpush1.bf16.msra.mxu0 %v503
  %644 = vmatprep.subr.bf16.mxu0 0
  %645 = vmatpush1.bf16.msra.mxu0 %v502
  %646 = vmatprep.subr.bf16.mxu0 0
  %647 = vmatpush2.bf16.msra.mxu0 %v517
  %648 = vmatprep.subr.bf16.mxu0 0
  %649 = vmatpush2.bf16.msra.mxu0 %v516
  %650 = vmatprep.subr.bf16.mxu0 0
  %651 = vmatpush2.bf16.msra.mxu0 %v515
  %652 = vmatprep.subr.bf16.mxu0 0
  %653 = vmatpush2.bf16.msra.mxu0 %v514
  %654 = vmatprep.subr.bf16.mxu0 0
  %655 = vmatpush2.bf16.msra.mxu0 %v513
  %656 = vmatprep.subr.bf16.mxu0 0
  %657 = vmatpush2.bf16.msra.mxu0 %v512
  %658 = vmatprep.subr.bf16.mxu0 0
  %659 = vmatpush2.bf16.msra.mxu0 %v511
  %660 = vmatprep.subr.bf16.mxu0 0
  %661 = vmatpush2.bf16.msra.mxu0 %v510
  %662 = vmatprep.mubr.bf16.mxu0 %v215
  %663 = vmatmul.mubr.bf16.gmra.mxu0 %v214
  %v664 = vpop.f32.mrf.mxu0
  %v665 = vadd.f32 %v164, %v664
  %v666 = vpop.f32.mrf.mxu0
  %v667 = vpop.f32.mrf.mxu0
  %v668 = vadd.f32 %v164, %v667
  %v669 = vpop.f32.mrf.mxu0
  %670 = vmatprep.mubr.bf16.mxu0 %v223
  %671 = vmatmul.mubr.bf16.gmra.mxu0 %v222
  %v672 = vpop.f32.mrf.mxu0
  %v673 = vadd.f32 %v164, %v672
  %v674 = vpop.f32.mrf.mxu0
  %v675 = vpop.f32.mrf.mxu0
  %v676 = vadd.f32 %v164, %v675
  %v677 = vpop.f32.mrf.mxu0
  %678 = vdwg.mxu0
  %679 = vmatprep.subr.bf16.mxu0 0
  %680 = vmatpush1.bf16.msra.mxu0 %v525
  %681 = vmatprep.subr.bf16.mxu0 0
  %682 = vmatpush1.bf16.msra.mxu0 %v524
  %683 = vmatprep.subr.bf16.mxu0 0
  %684 = vmatpush1.bf16.msra.mxu0 %v523
  %685 = vmatprep.subr.bf16.mxu0 0
  %686 = vmatpush1.bf16.msra.mxu0 %v522
  %687 = vmatprep.subr.bf16.mxu0 0
  %688 = vmatpush1.bf16.msra.mxu0 %v521
  %689 = vmatprep.subr.bf16.mxu0 0
  %690 = vmatpush1.bf16.msra.mxu0 %v520
  %691 = vmatprep.subr.bf16.mxu0 0
  %692 = vmatpush1.bf16.msra.mxu0 %v519
  %693 = vmatprep.subr.bf16.mxu0 0
  %694 = vmatpush1.bf16.msra.mxu0 %v518
  %695 = vmatprep.subr.bf16.mxu0 0
  %696 = vmatpush2.bf16.msra.mxu0 %v533
  %697 = vmatprep.subr.bf16.mxu0 0
  %698 = vmatpush2.bf16.msra.mxu0 %v532
  %699 = vmatprep.subr.bf16.mxu0 0
  %700 = vmatpush2.bf16.msra.mxu0 %v531
  %701 = vmatprep.subr.bf16.mxu0 0
  %702 = vmatpush2.bf16.msra.mxu0 %v530
  %703 = vmatprep.subr.bf16.mxu0 0
  %704 = vmatpush2.bf16.msra.mxu0 %v529
  %705 = vmatprep.subr.bf16.mxu0 0
  %706 = vmatpush2.bf16.msra.mxu0 %v528
  %707 = vmatprep.subr.bf16.mxu0 0
  %708 = vmatpush2.bf16.msra.mxu0 %v527
  %709 = vmatprep.subr.bf16.mxu0 0
  %710 = vmatpush2.bf16.msra.mxu0 %v526
  %711 = vmatprep.mubr.bf16.mxu0 %v217
  %712 = vmatmul.mubr.bf16.gmra.mxu0 %v216
  %v713 = vpop.f32.mrf.mxu0
  %v714 = vadd.f32 %v665, %v713
  %v715 = vpop.f32.mrf.mxu0
  %v716 = vpop.f32.mrf.mxu0
  %v717 = vadd.f32 %v668, %v716
  %v718 = vpop.f32.mrf.mxu0
  %719 = vmatprep.mubr.bf16.mxu0 %v225
  %720 = vmatmul.mubr.bf16.gmra.mxu0 %v224
  %v721 = vpop.f32.mrf.mxu0
  %v722 = vadd.f32 %v673, %v721
  %v723 = vpop.f32.mrf.mxu0
  %v724 = vpop.f32.mrf.mxu0
  %v725 = vadd.f32 %v676, %v724
  %v726 = vpop.f32.mrf.mxu0
  %727 = vdwg.mxu0
  %728 = vmatprep.subr.bf16.mxu0 0
  %729 = vmatpush1.bf16.msra.mxu0 %v541
  %730 = vmatprep.subr.bf16.mxu0 0
  %731 = vmatpush1.bf16.msra.mxu0 %v540
  %732 = vmatprep.subr.bf16.mxu0 0
  %733 = vmatpush1.bf16.msra.mxu0 %v539
  %734 = vmatprep.subr.bf16.mxu0 0
  %735 = vmatpush1.bf16.msra.mxu0 %v538
  %736 = vmatprep.subr.bf16.mxu0 0
  %737 = vmatpush1.bf16.msra.mxu0 %v537
  %738 = vmatprep.subr.bf16.mxu0 0
  %739 = vmatpush1.bf16.msra.mxu0 %v536
  %740 = vmatprep.subr.bf16.mxu0 0
  %741 = vmatpush1.bf16.msra.mxu0 %v535
  %742 = vmatprep.subr.bf16.mxu0 0
  %743 = vmatpush1.bf16.msra.mxu0 %v534
  %744 = vmatprep.subr.bf16.mxu0 0
  %745 = vmatpush2.bf16.msra.mxu0 %v549
  %746 = vmatprep.subr.bf16.mxu0 0
  %747 = vmatpush2.bf16.msra.mxu0 %v548
  %748 = vmatprep.subr.bf16.mxu0 0
  %749 = vmatpush2.bf16.msra.mxu0 %v547
  %750 = vmatprep.subr.bf16.mxu0 0
  %751 = vmatpush2.bf16.msra.mxu0 %v546
  %752 = vmatprep.subr.bf16.mxu0 0
  %753 = vmatpush2.bf16.msra.mxu0 %v545
  %754 = vmatprep.subr.bf16.mxu0 0
  %755 = vmatpush2.bf16.msra.mxu0 %v544
  %756 = vmatprep.subr.bf16.mxu0 0
  %757 = vmatpush2.bf16.msra.mxu0 %v543
  %758 = vmatprep.subr.bf16.mxu0 0
  %759 = vmatpush2.bf16.msra.mxu0 %v542
  %760 = vmatprep.mubr.bf16.mxu0 %v219
  %761 = vmatmul.mubr.bf16.gmra.mxu0 %v218
  %v762 = vpop.f32.mrf.mxu0
  %v763 = vadd.f32 %v714, %v762
  %v764 = vpop.f32.mrf.mxu0
  %v765 = vpop.f32.mrf.mxu0
  %v766 = vadd.f32 %v717, %v765
  %v767 = vpop.f32.mrf.mxu0
  %768 = vmatprep.mubr.bf16.mxu0 %v227
  %769 = vmatmul.mubr.bf16.gmra.mxu0 %v226
  %v770 = vpop.f32.mrf.mxu0
  %v771 = vadd.f32 %v722, %v770
  %v772 = vpop.f32.mrf.mxu0
  %v773 = vpop.f32.mrf.mxu0
  %v774 = vadd.f32 %v725, %v773
  %v775 = vpop.f32.mrf.mxu0
  %776 = vdwg.mxu0
  %777 = vmatprep.subr.bf16.mxu0 0
  %778 = vmatpush1.bf16.msra.mxu0 %v557
  %779 = vmatprep.subr.bf16.mxu0 0
  %780 = vmatpush1.bf16.msra.mxu0 %v556
  %781 = vmatprep.subr.bf16.mxu0 0
  %782 = vmatpush1.bf16.msra.mxu0 %v555
  %783 = vmatprep.subr.bf16.mxu0 0
  %784 = vmatpush1.bf16.msra.mxu0 %v554
  %785 = vmatprep.subr.bf16.mxu0 0
  %786 = vmatpush1.bf16.msra.mxu0 %v553
  %787 = vmatprep.subr.bf16.mxu0 0
  %788 = vmatpush1.bf16.msra.mxu0 %v552
  %789 = vmatprep.subr.bf16.mxu0 0
  %790 = vmatpush1.bf16.msra.mxu0 %v551
  %791 = vmatprep.subr.bf16.mxu0 0
  %792 = vmatpush1.bf16.msra.mxu0 %v550
  %793 = vmatprep.subr.bf16.mxu0 0
  %794 = vmatpush2.bf16.msra.mxu0 %v565
  %795 = vmatprep.subr.bf16.mxu0 0
  %796 = vmatpush2.bf16.msra.mxu0 %v564
  %797 = vmatprep.subr.bf16.mxu0 0
  %798 = vmatpush2.bf16.msra.mxu0 %v563
  %799 = vmatprep.subr.bf16.mxu0 0
  %800 = vmatpush2.bf16.msra.mxu0 %v562
  %801 = vmatprep.subr.bf16.mxu0 0
  %802 = vmatpush2.bf16.msra.mxu0 %v561
  %803 = vmatprep.subr.bf16.mxu0 0
  %804 = vmatpush2.bf16.msra.mxu0 %v560
  %805 = vmatprep.subr.bf16.mxu0 0
  %806 = vmatpush2.bf16.msra.mxu0 %v559
  %807 = vmatprep.subr.bf16.mxu0 0
  %808 = vmatpush2.bf16.msra.mxu0 %v558
  %809 = vmatprep.mubr.bf16.mxu0 %v221
  %810 = vmatmul.mubr.bf16.gmra.mxu0 %v220
  %v811 = vpop.f32.mrf.mxu0
  %v812 = vadd.f32 %v763, %v811
  %v813 = vpop.f32.mrf.mxu0
  %v814 = vpop.f32.mrf.mxu0
  %v815 = vadd.f32 %v766, %v814
  %v816 = vpop.f32.mrf.mxu0
  %817 = vmatprep.mubr.bf16.mxu0 %v229
  %818 = vmatmul.mubr.bf16.gmra.mxu0 %v228
  %v819 = vpop.f32.mrf.mxu0
  %v820 = vadd.f32 %v771, %v819
  %v821 = vpop.f32.mrf.mxu0
  %v822 = vpop.f32.mrf.mxu0
  %v823 = vadd.f32 %v774, %v822
  %v824 = vpop.f32.mrf.mxu0
  %825 = vdwg.mxu0
  %v826 = vmax.f32 %v812, 0.0
  %v827 = vmax.f32 %v815, 0.0
  %v828 = vmax.f32 %v820, 0.0
  %v829 = vmax.f32 %v823, 0.0
  %v830 = vpack.c.bf16 %v827, %v826
  %v831 = vpack.c.bf16 %v829, %v828
  %v834 = vunpack.c.l.b16 %v830
  %v835 = vunpack.c.h.b16 %v830
  %v836 = vunpack.c.l.b16 %v831
  %v837 = vunpack.c.h.b16 %v831
  %v838 = vpack.c.b16 %v834, %v834
  %v839 = vpack.c.b16 %v835, %v835
  %v840 = vpack.c.b16 %v836, %v836
  %v841 = vpack.c.b16 %v837, %v837
  %846 = vst [vmem:[%s3] sm:$0xf] %v838
  %847 = vst [vmem:[%s3 + $0x4] sm:$0xf] %v839
  %848 = vst [vmem:[%s3 + $0x8] sm:$0xf] %v840
  %849 = vst [vmem:[%s3 + $0xc] sm:$0xf] %v841
  // Predicated region
  $region14: #{dqn_forward.6} parent=0 // pred_check
    _
  $region15: #{dqn_forward.6} parent=0 // pred_check_branch
    %851 = sbr.rel (0) target = $region17
  $region16: #{dqn_forward.6} parent=0 // pred_region
    _
  $region17: #{dqn_forward.6} parent=0 // pred_fallthru
    _
  // Predicated region
  $region18: #{dqn_forward.6} parent=0 // pred_check
    _
  $region19: #{dqn_forward.6} parent=0 // pred_check_branch
    %853 = sbr.rel (0) target = $region21
  $region20: #{dqn_forward.6} parent=0 // pred_region
    _
  $region21: #{dqn_forward.6} parent=0 // pred_fallthru
    _

// kernel: dqn_forward.7
$region0: #{dqn_forward.7}
  #allocation0 [shape = 'u32[]', space=smem, size = 0x4, offset = 0x4, fixed_abs, tag = 'smem constant byte address 0x4 - core index']
  #allocation1 [shape = 'u32[144,128]{1,0:T(1,128)}', space=vmem, size = 0x12000, scoped, tag = 'internal scratch']
  %s0 = inlined_call_operand.vmem [shape: bf16[8,512], index: 0, kind: input, shape index: {}]
  %s1 = inlined_call_operand.vmem [shape: bf16[512,512], index: 1, kind: input, shape index: {}]
  %s2 = inlined_call_operand.vmem [shape: f32[1,512], index: 2, kind: input, shape index: {}]
  %s3 = inlined_call_operand.vmem [shape: bf16[512,128], index: 3, kind: input, shape index: {}]
  %s4 = inlined_call_operand.vmem [shape: f32[1,128], index: 4, kind: input, shape index: {}]
  %s5 = inlined_call_operand.vmem [shape: f32[8,128], index: 5, kind: output, shape index: {}]
  %s6 = sld [smem:[#allocation0]]
  $region30: #{dqn_forward.7} parent=0
    _
  %s8 = ssub.s32 1, %s6
  %s9 = scalar_select 0, %s8, %s6
  // Predicated region
  $region2: #{dqn_forward.7} parent=0 // pred_check
    _
  $region3: #{dqn_forward.7} parent=0 // pred_check_branch
    %11 = sbr.rel (0) target = $region5
  $region4: #{dqn_forward.7} parent=0 // pred_region
    _
  $region5: #{dqn_forward.7} parent=0 // pred_fallthru
    _
  // Predicated region
  $region6: #{dqn_forward.7} parent=0 // pred_check
    _
  $region7: #{dqn_forward.7} parent=0 // pred_check_branch
    %13 = sbr.rel (0) target = $region9
  $region8: #{dqn_forward.7} parent=0 // pred_region
    _
  $region9: #{dqn_forward.7} parent=0 // pred_fallthru
    _
  // Predicated region
  $region10: #{dqn_forward.7} parent=0 // pred_check
    _
  $region11: #{dqn_forward.7} parent=0 // pred_check_branch
    %15 = sbr.rel (0) target = $region13
  $region12: #{dqn_forward.7} parent=0 // pred_region
    _
  $region13: #{dqn_forward.7} parent=0 // pred_fallthru
    _
  // Predicated region
  $region14: #{dqn_forward.7} parent=0 // pred_check
    _
  $region15: #{dqn_forward.7} parent=0 // pred_check_branch
    %17 = sbr.rel (0) target = $region17
  $region16: #{dqn_forward.7} parent=0 // pred_region
    _
  $region17: #{dqn_forward.7} parent=0 // pred_fallthru
    _
  // Predicated region
  $region18: #{dqn_forward.7} parent=0 // pred_check
    _
  $region19: #{dqn_forward.7} parent=0 // pred_check_branch
    %19 = sbr.rel (0) target = $region21
  $region20: #{dqn_forward.7} parent=0 // pred_region
    _
  $region21: #{dqn_forward.7} parent=0 // pred_fallthru
    _
  %v21 = vld [vmem:[%s0] sm:$0xff]
  %v22 = vld [vmem:[%s0 + $0x8] sm:$0xff]
  %v23 = vld [vmem:[%s1] sm:$0xff]
  %v24 = vld [vmem:[%s1 + $0x8] sm:$0xff]
  %v25 = vld [vmem:[%s1 + $0x10] sm:$0xff]
  %v26 = vld [vmem:[%s1 + $0x18] sm:$0xff]
  %v27 = vld [vmem:[%s1 + $0x20] sm:$0xff]
  %v28 = vld [vmem:[%s1 + $0x28] sm:$0xff]
  %v29 = vld [vmem:[%s1 + $0x30] sm:$0xff]
  %v30 = vld [vmem:[%s1 + $0x38] sm:$0xff]
  %v31 = vld [vmem:[%s1 + $0x40] sm:$0xff]
  %v32 = vld [vmem:[%s1 + $0x48] sm:$0xff]
  %v33 = vld [vmem:[%s1 + $0x50] sm:$0xff]
  %v34 = vld [vmem:[%s1 + $0x58] sm:$0xff]
  %v35 = vld [vmem:[%s1 + $0x60] sm:$0xff]
  %v36 = vld [vmem:[%s1 + $0x68] sm:$0xff]
  %v37 = vld [vmem:[%s1 + $0x70] sm:$0xff]
  %v38 = vld [vmem:[%s1 + $0x78] sm:$0xff]
  %v39 = vld [vmem:[%s1 + $0x80] sm:$0xff]
  %v40 = vld [vmem:[%s1 + $0x88] sm:$0xff]
  %v41 = vld [vmem:[%s1 + $0x90] sm:$0xff]
  %v42 = vld [vmem:[%s1 + $0x98] sm:$0xff]
  %v43 = vld [vmem:[%s1 + $0xa0] sm:$0xff]
  %v44 = vld [vmem:[%s1 + $0xa8] sm:$0xff]
  %v45 = vld [vmem:[%s1 + $0xb0] sm:$0xff]
  %v46 = vld [vmem:[%s1 + $0xb8] sm:$0xff]
  %v47 = vld [vmem:[%s1 + $0xc0] sm:$0xff]
  %v48 = vld [vmem:[%s1 + $0xc8] sm:$0xff]
  %v49 = vld [vmem:[%s1 + $0xd0] sm:$0xff]
  %v50 = vld [vmem:[%s1 + $0xd8] sm:$0xff]
  %v51 = vld [vmem:[%s1 + $0xe0] sm:$0xff]
  %v52 = vld [vmem:[%s1 + $0xe8] sm:$0xff]
  %v53 = vld [vmem:[%s1 + $0xf0] sm:$0xff]
  %v54 = vld [vmem:[%s1 + $0xf8] sm:$0xff]
  %v55 = vld [vmem:[%s1 + $0x100] sm:$0xff]
  %v56 = vld [vmem:[%s1 + $0x108] sm:$0xff]
  %v57 = vld [vmem:[%s1 + $0x110] sm:$0xff]
  %v58 = vld [vmem:[%s1 + $0x118] sm:$0xff]
  %v59 = vld [vmem:[%s1 + $0x120] sm:$0xff]
  %v60 = vld [vmem:[%s1 + $0x128] sm:$0xff]
  %v61 = vld [vmem:[%s1 + $0x130] sm:$0xff]
  %v62 = vld [vmem:[%s1 + $0x138] sm:$0xff]
  %v63 = vld [vmem:[%s1 + $0x140] sm:$0xff]
  %v64 = vld [vmem:[%s1 + $0x148] sm:$0xff]
  %v65 = vld [vmem:[%s1 + $0x150] sm:$0xff]
  %v66 = vld [vmem:[%s1 + $0x158] sm:$0xff]
  %v67 = vld [vmem:[%s1 + $0x160] sm:$0xff]
  %v68 = vld [vmem:[%s1 + $0x168] sm:$0xff]
  %v69 = vld [vmem:[%s1 + $0x170] sm:$0xff]
  %v70 = vld [vmem:[%s1 + $0x178] sm:$0xff]
  %v71 = vld [vmem:[%s1 + $0x180] sm:$0xff]
  %v72 = vld [vmem:[%s1 + $0x188] sm:$0xff]
  %v73 = vld [vmem:[%s1 + $0x190] sm:$0xff]
  %v74 = vld [vmem:[%s1 + $0x198] sm:$0xff]
  %v75 = vld [vmem:[%s1 + $0x1a0] sm:$0xff]
  %v76 = vld [vmem:[%s1 + $0x1a8] sm:$0xff]
  %v77 = vld [vmem:[%s1 + $0x1b0] sm:$0xff]
  %v78 = vld [vmem:[%s1 + $0x1b8] sm:$0xff]
  %v79 = vld [vmem:[%s1 + $0x1c0] sm:$0xff]
  %v80 = vld [vmem:[%s1 + $0x1c8] sm:$0xff]
  %v81 = vld [vmem:[%s1 + $0x1d0] sm:$0xff]
  %v82 = vld [vmem:[%s1 + $0x1d8] sm:$0xff]
  %v83 = vld [vmem:[%s1 + $0x1e0] sm:$0xff]
  %v84 = vld [vmem:[%s1 + $0x1e8] sm:$0xff]
  %v85 = vld [vmem:[%s1 + $0x1f0] sm:$0xff]
  %v86 = vld [vmem:[%s1 + $0x1f8] sm:$0xff]
  %v87 = vld [vmem:[%s1 + $0x200] sm:$0xff]
  %v88 = vld [vmem:[%s1 + $0x208] sm:$0xff]
  %v89 = vld [vmem:[%s1 + $0x210] sm:$0xff]
  %v90 = vld [vmem:[%s1 + $0x218] sm:$0xff]
  %v91 = vld [vmem:[%s1 + $0x220] sm:$0xff]
  %v92 = vld [vmem:[%s1 + $0x228] sm:$0xff]
  %v93 = vld [vmem:[%s1 + $0x230] sm:$0xff]
  %v94 = vld [vmem:[%s1 + $0x238] sm:$0xff]
  %v95 = vld [vmem:[%s1 + $0x240] sm:$0xff]
  %v96 = vld [vmem:[%s1 + $0x248] sm:$0xff]
  %v97 = vld [vmem:[%s1 + $0x250] sm:$0xff]
  %v98 = vld [vmem:[%s1 + $0x258] sm:$0xff]
  %v99 = vld [vmem:[%s1 + $0x260] sm:$0xff]
  %v100 = vld [vmem:[%s1 + $0x268] sm:$0xff]
  %v101 = vld [vmem:[%s1 + $0x270] sm:$0xff]
  %v102 = vld [vmem:[%s1 + $0x278] sm:$0xff]
  %v103 = vld [vmem:[%s1 + $0x280] sm:$0xff]
  %v104 = vld [vmem:[%s1 + $0x288] sm:$0xff]
  %v105 = vld [vmem:[%s1 + $0x290] sm:$0xff]
  %v106 = vld [vmem:[%s1 + $0x298] sm:$0xff]
  %v107 = vld [vmem:[%s1 + $0x2a0] sm:$0xff]
  %v108 = vld [vmem:[%s1 + $0x2a8] sm:$0xff]
  %v109 = vld [vmem:[%s1 + $0x2b0] sm:$0xff]
  %v110 = vld [vmem:[%s1 + $0x2b8] sm:$0xff]
  %v111 = vld [vmem:[%s1 + $0x2c0] sm:$0xff]
  %v112 = vld [vmem:[%s1 + $0x2c8] sm:$0xff]
  %v113 = vld [vmem:[%s1 + $0x2d0] sm:$0xff]
  %v114 = vld [vmem:[%s1 + $0x2d8] sm:$0xff]
  %v115 = vld [vmem:[%s1 + $0x2e0] sm:$0xff]
  %v116 = vld [vmem:[%s1 + $0x2e8] sm:$0xff]
  %v117 = vld [vmem:[%s1 + $0x2f0] sm:$0xff]
  %v118 = vld [vmem:[%s1 + $0x2f8] sm:$0xff]
  %v119 = vld [vmem:[%s1 + $0x300] sm:$0xff]
  %v120 = vld [vmem:[%s1 + $0x308] sm:$0xff]
  %v121 = vld [vmem:[%s1 + $0x310] sm:$0xff]
  %v122 = vld [vmem:[%s1 + $0x318] sm:$0xff]
  %v123 = vld [vmem:[%s1 + $0x320] sm:$0xff]
  %v124 = vld [vmem:[%s1 + $0x328] sm:$0xff]
  %v125 = vld [vmem:[%s1 + $0x330] sm:$0xff]
  %v126 = vld [vmem:[%s1 + $0x338] sm:$0xff]
  %v127 = vld [vmem:[%s1 + $0x340] sm:$0xff]
  %v128 = vld [vmem:[%s1 + $0x348] sm:$0xff]
  %v129 = vld [vmem:[%s1 + $0x350] sm:$0xff]
  %v130 = vld [vmem:[%s1 + $0x358] sm:$0xff]
  %v131 = vld [vmem:[%s1 + $0x360] sm:$0xff]
  %v132 = vld [vmem:[%s1 + $0x368] sm:$0xff]
  %v133 = vld [vmem:[%s1 + $0x370] sm:$0xff]
  %v134 = vld [vmem:[%s1 + $0x378] sm:$0xff]
  %v135 = vld [vmem:[%s1 + $0x380] sm:$0xff]
  %v136 = vld [vmem:[%s1 + $0x388] sm:$0xff]
  %v137 = vld [vmem:[%s1 + $0x390] sm:$0xff]
  %v138 = vld [vmem:[%s1 + $0x398] sm:$0xff]
  %v139 = vld [vmem:[%s1 + $0x3a0] sm:$0xff]
  %v140 = vld [vmem:[%s1 + $0x3a8] sm:$0xff]
  %v141 = vld [vmem:[%s1 + $0x3b0] sm:$0xff]
  %v142 = vld [vmem:[%s1 + $0x3b8] sm:$0xff]
  %v143 = vld [vmem:[%s1 + $0x3c0] sm:$0xff]
  %v144 = vld [vmem:[%s1 + $0x3c8] sm:$0xff]
  %v145 = vld [vmem:[%s1 + $0x3d0] sm:$0xff]
  %v146 = vld [vmem:[%s1 + $0x3d8] sm:$0xff]
  %v147 = vld [vmem:[%s1 + $0x3e0] sm:$0xff]
  %v148 = vld [vmem:[%s1 + $0x3e8] sm:$0xff]
  %v149 = vld [vmem:[%s1 + $0x3f0] sm:$0xff]
  %v150 = vld [vmem:[%s1 + $0x3f8] sm:$0xff]
  %v151 = vld [vmem:[%s2] sm:$0xf]
  %v153 = vlaneseq
  %v154 = vshrl.u32 %v153, 7
  %v155 = vsub.s32 0, %v154
  %v156 = vrot.slane %v151, %v155
  %v157 = vlaneseq
  %v158 = vshrl.u32 %v157, 7
  %v159 = vsub.s32 1, %v158
  %v160 = vrot.slane %v151, %v159
  %v161 = vlaneseq
  %v162 = vshrl.u32 %v161, 7
  %v163 = vsub.s32 2, %v162
  %v164 = vrot.slane %v151, %v163
  %v165 = vlaneseq
  %v166 = vshrl.u32 %v165, 7
  %v167 = vsub.s32 3, %v166
  %v168 = vrot.slane %v151, %v167
  %v175 = vunpack.c.l.b16 %v21
  %v176 = vunpack.c.h.b16 %v21
  %v177 = vunpack.c.l.b16 %v22
  %v178 = vunpack.c.h.b16 %v22
  %v179 = vpack.c.b16 %v175, %v175
  %v180 = vpack.c.b16 %v176, %v176
  %v181 = vpack.c.b16 %v177, %v177
  %v182 = vpack.c.b16 %v178, %v178
  %v315 = vunpack.c.l.b16 %v23
  %v316 = vunpack.c.h.b16 %v23
  %v317 = vunpack.c.l.b16 %v24
  %v318 = vunpack.c.h.b16 %v24
  %v319 = vunpack.c.l.b16 %v25
  %v320 = vunpack.c.h.b16 %v25
  %v321 = vunpack.c.l.b16 %v26
  %v322 = vunpack.c.h.b16 %v26
  %v323 = vunpack.c.l.b16 %v27
  %v324 = vunpack.c.h.b16 %v27
  %v325 = vunpack.c.l.b16 %v28
  %v326 = vunpack.c.h.b16 %v28
  %v327 = vunpack.c.l.b16 %v29
  %v328 = vunpack.c.h.b16 %v29
  %v329 = vunpack.c.l.b16 %v30
  %v330 = vunpack.c.h.b16 %v30
  %v331 = vunpack.c.l.b16 %v31
  %v332 = vunpack.c.h.b16 %v31
  %v333 = vunpack.c.l.b16 %v32
  %v334 = vunpack.c.h.b16 %v32
  %v335 = vunpack.c.l.b16 %v33
  %v336 = vunpack.c.h.b16 %v33
  %v337 = vunpack.c.l.b16 %v34
  %v338 = vunpack.c.h.b16 %v34
  %v339 = vunpack.c.l.b16 %v35
  %v340 = vunpack.c.h.b16 %v35
  %v341 = vunpack.c.l.b16 %v36
  %v342 = vunpack.c.h.b16 %v36
  %v343 = vunpack.c.l.b16 %v37
  %v344 = vunpack.c.h.b16 %v37
  %v345 = vunpack.c.l.b16 %v38
  %v346 = vunpack.c.h.b16 %v38
  %v347 = vunpack.c.l.b16 %v39
  %v348 = vunpack.c.h.b16 %v39
  %v349 = vunpack.c.l.b16 %v40
  %v350 = vunpack.c.h.b16 %v40
  %v351 = vunpack.c.l.b16 %v41
  %v352 = vunpack.c.h.b16 %v41
  %v353 = vunpack.c.l.b16 %v42
  %v354 = vunpack.c.h.b16 %v42
  %v355 = vunpack.c.l.b16 %v43
  %v356 = vunpack.c.h.b16 %v43
  %v357 = vunpack.c.l.b16 %v44
  %v358 = vunpack.c.h.b16 %v44
  %v359 = vunpack.c.l.b16 %v45
  %v360 = vunpack.c.h.b16 %v45
  %v361 = vunpack.c.l.b16 %v46
  %v362 = vunpack.c.h.b16 %v46
  %v363 = vunpack.c.l.b16 %v47
  %v364 = vunpack.c.h.b16 %v47
  %v365 = vunpack.c.l.b16 %v48
  %v366 = vunpack.c.h.b16 %v48
  %v367 = vunpack.c.l.b16 %v49
  %v368 = vunpack.c.h.b16 %v49
  %v369 = vunpack.c.l.b16 %v50
  %v370 = vunpack.c.h.b16 %v50
  %v371 = vunpack.c.l.b16 %v51
  %v372 = vunpack.c.h.b16 %v51
  %v373 = vunpack.c.l.b16 %v52
  %v374 = vunpack.c.h.b16 %v52
  %v375 = vunpack.c.l.b16 %v53
  %v376 = vunpack.c.h.b16 %v53
  %v377 = vunpack.c.l.b16 %v54
  %v378 = vunpack.c.h.b16 %v54
  %v379 = vunpack.c.l.b16 %v55
  %v380 = vunpack.c.h.b16 %v55
  %v381 = vunpack.c.l.b16 %v56
  %v382 = vunpack.c.h.b16 %v56
  %v383 = vunpack.c.l.b16 %v57
  %v384 = vunpack.c.h.b16 %v57
  %v385 = vunpack.c.l.b16 %v58
  %v386 = vunpack.c.h.b16 %v58
  %v387 = vunpack.c.l.b16 %v59
  %v388 = vunpack.c.h.b16 %v59
  %v389 = vunpack.c.l.b16 %v60
  %v390 = vunpack.c.h.b16 %v60
  %v391 = vunpack.c.l.b16 %v61
  %v392 = vunpack.c.h.b16 %v61
  %v393 = vunpack.c.l.b16 %v62
  %v394 = vunpack.c.h.b16 %v62
  %v395 = vunpack.c.l.b16 %v63
  %v396 = vunpack.c.h.b16 %v63
  %v397 = vunpack.c.l.b16 %v64
  %v398 = vunpack.c.h.b16 %v64
  %v399 = vunpack.c.l.b16 %v65
  %v400 = vunpack.c.h.b16 %v65
  %v401 = vunpack.c.l.b16 %v66
  %v402 = vunpack.c.h.b16 %v66
  %v403 = vunpack.c.l.b16 %v67
  %v404 = vunpack.c.h.b16 %v67
  %v405 = vunpack.c.l.b16 %v68
  %v406 = vunpack.c.h.b16 %v68
  %v407 = vunpack.c.l.b16 %v69
  %v408 = vunpack.c.h.b16 %v69
  %v409 = vunpack.c.l.b16 %v70
  %v410 = vunpack.c.h.b16 %v70
  %v411 = vunpack.c.l.b16 %v71
  %v412 = vunpack.c.h.b16 %v71
  %v413 = vunpack.c.l.b16 %v72
  %v414 = vunpack.c.h.b16 %v72
  %v415 = vunpack.c.l.b16 %v73
  %v416 = vunpack.c.h.b16 %v73
  %v417 = vunpack.c.l.b16 %v74
  %v418 = vunpack.c.h.b16 %v74
  %v419 = vunpack.c.l.b16 %v75
  %v420 = vunpack.c.h.b16 %v75
  %v421 = vunpack.c.l.b16 %v76
  %v422 = vunpack.c.h.b16 %v76
  %v423 = vunpack.c.l.b16 %v77
  %v424 = vunpack.c.h.b16 %v77
  %v425 = vunpack.c.l.b16 %v78
  %v426 = vunpack.c.h.b16 %v78
  %v427 = vunpack.c.l.b16 %v79
  %v428 = vunpack.c.h.b16 %v79
  %v429 = vunpack.c.l.b16 %v80
  %v430 = vunpack.c.h.b16 %v80
  %v431 = vunpack.c.l.b16 %v81
  %v432 = vunpack.c.h.b16 %v81
  %v433 = vunpack.c.l.b16 %v82
  %v434 = vunpack.c.h.b16 %v82
  %v435 = vunpack.c.l.b16 %v83
  %v436 = vunpack.c.h.b16 %v83
  %v437 = vunpack.c.l.b16 %v84
  %v438 = vunpack.c.h.b16 %v84
  %v439 = vunpack.c.l.b16 %v85
  %v440 = vunpack.c.h.b16 %v85
  %v441 = vunpack.c.l.b16 %v86
  %v442 = vunpack.c.h.b16 %v86
  %v443 = vunpack.c.l.b16 %v87
  %v444 = vunpack.c.h.b16 %v87
  %v445 = vunpack.c.l.b16 %v88
  %v446 = vunpack.c.h.b16 %v88
  %v447 = vunpack.c.l.b16 %v89
  %v448 = vunpack.c.h.b16 %v89
  %v449 = vunpack.c.l.b16 %v90
  %v450 = vunpack.c.h.b16 %v90
  %v451 = vunpack.c.l.b16 %v91
  %v452 = vunpack.c.h.b16 %v91
  %v453 = vunpack.c.l.b16 %v92
  %v454 = vunpack.c.h.b16 %v92
  %v455 = vunpack.c.l.b16 %v93
  %v456 = vunpack.c.h.b16 %v93
  %v457 = vunpack.c.l.b16 %v94
  %v458 = vunpack.c.h.b16 %v94
  %v459 = vunpack.c.l.b16 %v95
  %v460 = vunpack.c.h.b16 %v95
  %v461 = vunpack.c.l.b16 %v96
  %v462 = vunpack.c.h.b16 %v96
  %v463 = vunpack.c.l.b16 %v97
  %v464 = vunpack.c.h.b16 %v97
  %v465 = vunpack.c.l.b16 %v98
  %v466 = vunpack.c.h.b16 %v98
  %v467 = vunpack.c.l.b16 %v99
  %v468 = vunpack.c.h.b16 %v99
  %v469 = vunpack.c.l.b16 %v100
  %v470 = vunpack.c.h.b16 %v100
  %v471 = vunpack.c.l.b16 %v101
  %v472 = vunpack.c.h.b16 %v101
  %v473 = vunpack.c.l.b16 %v102
  %v474 = vunpack.c.h.b16 %v102
  %v475 = vunpack.c.l.b16 %v103
  %v476 = vunpack.c.h.b16 %v103
  %v477 = vunpack.c.l.b16 %v104
  %v478 = vunpack.c.h.b16 %v104
  %v479 = vunpack.c.l.b16 %v105
  %v480 = vunpack.c.h.b16 %v105
  %v481 = vunpack.c.l.b16 %v106
  %v482 = vunpack.c.h.b16 %v106
  %v483 = vunpack.c.l.b16 %v107
  %v484 = vunpack.c.h.b16 %v107
  %v485 = vunpack.c.l.b16 %v108
  %v486 = vunpack.c.h.b16 %v108
  %v487 = vunpack.c.l.b16 %v109
  %v488 = vunpack.c.h.b16 %v109
  %v489 = vunpack.c.l.b16 %v110
  %v490 = vunpack.c.h.b16 %v110
  %v491 = vunpack.c.l.b16 %v111
  %v492 = vunpack.c.h.b16 %v111
  %v493 = vunpack.c.l.b16 %v112
  %v494 = vunpack.c.h.b16 %v112
  %v495 = vunpack.c.l.b16 %v113
  %v496 = vunpack.c.h.b16 %v113
  %v497 = vunpack.c.l.b16 %v114
  %v498 = vunpack.c.h.b16 %v114
  %v499 = vunpack.c.l.b16 %v115
  %v500 = vunpack.c.h.b16 %v115
  %v501 = vunpack.c.l.b16 %v116
  %v502 = vunpack.c.h.b16 %v116
  %v503 = vunpack.c.l.b16 %v117
  %v504 = vunpack.c.h.b16 %v117
  %v505 = vunpack.c.l.b16 %v118
  %v506 = vunpack.c.h.b16 %v118
  %v507 = vunpack.c.l.b16 %v119
  %v508 = vunpack.c.h.b16 %v119
  %v509 = vunpack.c.l.b16 %v120
  %v510 = vunpack.c.h.b16 %v120
  %v511 = vunpack.c.l.b16 %v121
  %v512 = vunpack.c.h.b16 %v121
  %v513 = vunpack.c.l.b16 %v122
  %v514 = vunpack.c.h.b16 %v122
  %v515 = vunpack.c.l.b16 %v123
  %v516 = vunpack.c.h.b16 %v123
  %v517 = vunpack.c.l.b16 %v124
  %v518 = vunpack.c.h.b16 %v124
  %v519 = vunpack.c.l.b16 %v125
  %v520 = vunpack.c.h.b16 %v125
  %v521 = vunpack.c.l.b16 %v126
  %v522 = vunpack.c.h.b16 %v126
  %v523 = vunpack.c.l.b16 %v127
  %v524 = vunpack.c.h.b16 %v127
  %v525 = vunpack.c.l.b16 %v128
  %v526 = vunpack.c.h.b16 %v128
  %v527 = vunpack.c.l.b16 %v129
  %v528 = vunpack.c.h.b16 %v129
  %v529 = vunpack.c.l.b16 %v130
  %v530 = vunpack.c.h.b16 %v130
  %v531 = vunpack.c.l.b16 %v131
  %v532 = vunpack.c.h.b16 %v131
  %v533 = vunpack.c.l.b16 %v132
  %v534 = vunpack.c.h.b16 %v132
  %v535 = vunpack.c.l.b16 %v133
  %v536 = vunpack.c.h.b16 %v133
  %v537 = vunpack.c.l.b16 %v134
  %v538 = vunpack.c.h.b16 %v134
  %v539 = vunpack.c.l.b16 %v135
  %v540 = vunpack.c.h.b16 %v135
  %v541 = vunpack.c.l.b16 %v136
  %v542 = vunpack.c.h.b16 %v136
  %v543 = vunpack.c.l.b16 %v137
  %v544 = vunpack.c.h.b16 %v137
  %v545 = vunpack.c.l.b16 %v138
  %v546 = vunpack.c.h.b16 %v138
  %v547 = vunpack.c.l.b16 %v139
  %v548 = vunpack.c.h.b16 %v139
  %v549 = vunpack.c.l.b16 %v140
  %v550 = vunpack.c.h.b16 %v140
  %v551 = vunpack.c.l.b16 %v141
  %v552 = vunpack.c.h.b16 %v141
  %v553 = vunpack.c.l.b16 %v142
  %v554 = vunpack.c.h.b16 %v142
  %v555 = vunpack.c.l.b16 %v143
  %v556 = vunpack.c.h.b16 %v143
  %v557 = vunpack.c.l.b16 %v144
  %v558 = vunpack.c.h.b16 %v144
  %v559 = vunpack.c.l.b16 %v145
  %v560 = vunpack.c.h.b16 %v145
  %v561 = vunpack.c.l.b16 %v146
  %v562 = vunpack.c.h.b16 %v146
  %v563 = vunpack.c.l.b16 %v147
  %v564 = vunpack.c.h.b16 %v147
  %v565 = vunpack.c.l.b16 %v148
  %v566 = vunpack.c.h.b16 %v148
  %v567 = vunpack.c.l.b16 %v149
  %v568 = vunpack.c.h.b16 %v149
  %v569 = vunpack.c.l.b16 %v150
  %v570 = vunpack.c.h.b16 %v150
  %v571 = vpack.c.b16 %v319, %v315
  %v572 = vpack.c.b16 %v320, %v316
  %v573 = vpack.c.b16 %v321, %v317
  %v574 = vpack.c.b16 %v322, %v318
  %v575 = vpack.c.b16 %v327, %v323
  %v576 = vpack.c.b16 %v328, %v324
  %v577 = vpack.c.b16 %v329, %v325
  %v578 = vpack.c.b16 %v330, %v326
  %v579 = vpack.c.b16 %v335, %v331
  %v580 = vpack.c.b16 %v336, %v332
  %v581 = vpack.c.b16 %v337, %v333
  %v582 = vpack.c.b16 %v338, %v334
  %v583 = vpack.c.b16 %v343, %v339
  %v584 = vpack.c.b16 %v344, %v340
  %v585 = vpack.c.b16 %v345, %v341
  %v586 = vpack.c.b16 %v346, %v342
  %v587 = vpack.c.b16 %v351, %v347
  %v588 = vpack.c.b16 %v352, %v348
  %v589 = vpack.c.b16 %v353, %v349
  %v590 = vpack.c.b16 %v354, %v350
  %v591 = vpack.c.b16 %v359, %v355
  %v592 = vpack.c.b16 %v360, %v356
  %v593 = vpack.c.b16 %v361, %v357
  %v594 = vpack.c.b16 %v362, %v358
  %v595 = vpack.c.b16 %v367, %v363
  %v596 = vpack.c.b16 %v368, %v364
  %v597 = vpack.c.b16 %v369, %v365
  %v598 = vpack.c.b16 %v370, %v366
  %v599 = vpack.c.b16 %v375, %v371
  %v600 = vpack.c.b16 %v376, %v372
  %v601 = vpack.c.b16 %v377, %v373
  %v602 = vpack.c.b16 %v378, %v374
  %v603 = vpack.c.b16 %v383, %v379
  %v604 = vpack.c.b16 %v384, %v380
  %v605 = vpack.c.b16 %v385, %v381
  %v606 = vpack.c.b16 %v386, %v382
  %v607 = vpack.c.b16 %v391, %v387
  %v608 = vpack.c.b16 %v392, %v388
  %v609 = vpack.c.b16 %v393, %v389
  %v610 = vpack.c.b16 %v394, %v390
  %v611 = vpack.c.b16 %v399, %v395
  %v612 = vpack.c.b16 %v400, %v396
  %v613 = vpack.c.b16 %v401, %v397
  %v614 = vpack.c.b16 %v402, %v398
  %v615 = vpack.c.b16 %v407, %v403
  %v616 = vpack.c.b16 %v408, %v404
  %v617 = vpack.c.b16 %v409, %v405
  %v618 = vpack.c.b16 %v410, %v406
  %v619 = vpack.c.b16 %v415, %v411
  %v620 = vpack.c.b16 %v416, %v412
  %v621 = vpack.c.b16 %v417, %v413
  %v622 = vpack.c.b16 %v418, %v414
  %v623 = vpack.c.b16 %v423, %v419
  %v624 = vpack.c.b16 %v424, %v420
  %v625 = vpack.c.b16 %v425, %v421
  %v626 = vpack.c.b16 %v426, %v422
  %v627 = vpack.c.b16 %v431, %v427
  %v628 = vpack.c.b16 %v432, %v428
  %v629 = vpack.c.b16 %v433, %v429
  %v630 = vpack.c.b16 %v434, %v430
  %v631 = vpack.c.b16 %v439, %v435
  %v632 = vpack.c.b16 %v440, %v436
  %v633 = vpack.c.b16 %v441, %v437
  %v634 = vpack.c.b16 %v442, %v438
  %v635 = vpack.c.b16 %v447, %v443
  %v636 = vpack.c.b16 %v448, %v444
  %v637 = vpack.c.b16 %v449, %v445
  %v638 = vpack.c.b16 %v450, %v446
  %v639 = vpack.c.b16 %v455, %v451
  %v640 = vpack.c.b16 %v456, %v452
  %v641 = vpack.c.b16 %v457, %v453
  %v642 = vpack.c.b16 %v458, %v454
  %v643 = vpack.c.b16 %v463, %v459
  %v644 = vpack.c.b16 %v464, %v460
  %v645 = vpack.c.b16 %v465, %v461
  %v646 = vpack.c.b16 %v466, %v462
  %v647 = vpack.c.b16 %v471, %v467
  %v648 = vpack.c.b16 %v472, %v468
  %v649 = vpack.c.b16 %v473, %v469
  %v650 = vpack.c.b16 %v474, %v470
  %v651 = vpack.c.b16 %v479, %v475
  %v652 = vpack.c.b16 %v480, %v476
  %v653 = vpack.c.b16 %v481, %v477
  %v654 = vpack.c.b16 %v482, %v478
  %v655 = vpack.c.b16 %v487, %v483
  %v656 = vpack.c.b16 %v488, %v484
  %v657 = vpack.c.b16 %v489, %v485
  %v658 = vpack.c.b16 %v490, %v486
  %v659 = vpack.c.b16 %v495, %v491
  %v660 = vpack.c.b16 %v496, %v492
  %v661 = vpack.c.b16 %v497, %v493
  %v662 = vpack.c.b16 %v498, %v494
  %v663 = vpack.c.b16 %v503, %v499
  %v664 = vpack.c.b16 %v504, %v500
  %v665 = vpack.c.b16 %v505, %v501
  %v666 = vpack.c.b16 %v506, %v502
  %v667 = vpack.c.b16 %v511, %v507
  %v668 = vpack.c.b16 %v512, %v508
  %v669 = vpack.c.b16 %v513, %v509
  %v670 = vpack.c.b16 %v514, %v510
  %v671 = vpack.c.b16 %v519, %v515
  %v672 = vpack.c.b16 %v520, %v516
  %v673 = vpack.c.b16 %v521, %v517
  %v674 = vpack.c.b16 %v522, %v518
  %v675 = vpack.c.b16 %v527, %v523
  %v676 = vpack.c.b16 %v528, %v524
  %v677 = vpack.c.b16 %v529, %v525
  %v678 = vpack.c.b16 %v530, %v526
  %v679 = vpack.c.b16 %v535, %v531
  %v680 = vpack.c.b16 %v536, %v532
  %v681 = vpack.c.b16 %v537, %v533
  %v682 = vpack.c.b16 %v538, %v534
  %v683 = vpack.c.b16 %v543, %v539
  %v684 = vpack.c.b16 %v544, %v540
  %v685 = vpack.c.b16 %v545, %v541
  %v686 = vpack.c.b16 %v546, %v542
  %v687 = vpack.c.b16 %v551, %v547
  %v688 = vpack.c.b16 %v552, %v548
  %v689 = vpack.c.b16 %v553, %v549
  %v690 = vpack.c.b16 %v554, %v550
  %v691 = vpack.c.b16 %v559, %v555
  %v692 = vpack.c.b16 %v560, %v556
  %v693 = vpack.c.b16 %v561, %v557
  %v694 = vpack.c.b16 %v562, %v558
  %v695 = vpack.c.b16 %v567, %v563
  %v696 = vpack.c.b16 %v568, %v564
  %v697 = vpack.c.b16 %v569, %v565
  %v698 = vpack.c.b16 %v570, %v566
  %827 = vmatprep.subr.bf16.mxu0 %v600
  %828 = vmatpush1.bf16.msra.mxu0 %v599
  %829 = vmatprep.subr.bf16.mxu0 %v596
  %830 = vmatpush1.bf16.msra.mxu0 %v595
  %831 = vmatprep.subr.bf16.mxu0 %v592
  %832 = vmatpush1.bf16.msra.mxu0 %v591
  %833 = vmatprep.subr.bf16.mxu0 %v588
  %834 = vmatpush1.bf16.msra.mxu0 %v587
  %835 = vmatprep.subr.bf16.mxu0 %v584
  %836 = vmatpush1.bf16.msra.mxu0 %v583
  %837 = vmatprep.subr.bf16.mxu0 %v580
  %838 = vmatpush1.bf16.msra.mxu0 %v579
  %839 = vmatprep.subr.bf16.mxu0 %v576
  %840 = vmatpush1.bf16.msra.mxu0 %v575
  %841 = vmatprep.subr.bf16.mxu0 %v572
  %842 = vmatpush1.bf16.msra.mxu0 %v571
  %843 = vmatprep.subr.bf16.mxu0 %v632
  %844 = vmatpush2.bf16.msra.mxu0 %v631
  %845 = vmatprep.subr.bf16.mxu0 %v628
  %846 = vmatpush2.bf16.msra.mxu0 %v627
  %847 = vmatprep.subr.bf16.mxu0 %v624
  %848 = vmatpush2.bf16.msra.mxu0 %v623
  %849 = vmatprep.subr.bf16.mxu0 %v620
  %850 = vmatpush2.bf16.msra.mxu0 %v619
  %851 = vmatprep.subr.bf16.mxu0 %v616
  %852 = vmatpush2.bf16.msra.mxu0 %v615
  %853 = vmatprep.subr.bf16.mxu0 %v612
  %854 = vmatpush2.bf16.msra.mxu0 %v611
  %855 = vmatprep.subr.bf16.mxu0 %v608
  %856 = vmatpush2.bf16.msra.mxu0 %v607
  %857 = vmatprep.subr.bf16.mxu0 %v604
  %858 = vmatpush2.bf16.msra.mxu0 %v603
  %859 = vmatprep.mubr.bf16.mxu0 %v180
  %860 = vmatmul.mubr.bf16.gmra.mxu0 %v179
  %v861 = vpop.f32.mrf.mxu0
  %v862 = vadd.f32 %v156, %v861
  %v863 = vpop.f32.mrf.mxu0
  %v864 = vadd.f32 %v160, %v863
  %v865 = vpop.f32.mrf.mxu0
  %v866 = vpop.f32.mrf.mxu0
  %867 = vdwg.mxu0
  %868 = vmatprep.subr.bf16.mxu0 %v664
  %869 = vmatpush1.bf16.msra.mxu0 %v663
  %870 = vmatprep.subr.bf16.mxu0 %v660
  %871 = vmatpush1.bf16.msra.mxu0 %v659
  %872 = vmatprep.subr.bf16.mxu0 %v656
  %873 = vmatpush1.bf16.msra.mxu0 %v655
  %874 = vmatprep.subr.bf16.mxu0 %v652
  %875 = vmatpush1.bf16.msra.mxu0 %v651
  %876 = vmatprep.subr.bf16.mxu0 %v648
  %877 = vmatpush1.bf16.msra.mxu0 %v647
  %878 = vmatprep.subr.bf16.mxu0 %v644
  %879 = vmatpush1.bf16.msra.mxu0 %v643
  %880 = vmatprep.subr.bf16.mxu0 %v640
  %881 = vmatpush1.bf16.msra.mxu0 %v639
  %882 = vmatprep.subr.bf16.mxu0 %v636
  %883 = vmatpush1.bf16.msra.mxu0 %v635
  %884 = vmatprep.subr.bf16.mxu0 %v696
  %885 = vmatpush2.bf16.msra.mxu0 %v695
  %886 = vmatprep.subr.bf16.mxu0 %v692
  %887 = vmatpush2.bf16.msra.mxu0 %v691
  %888 = vmatprep.subr.bf16.mxu0 %v688
  %889 = vmatpush2.bf16.msra.mxu0 %v687
  %890 = vmatprep.subr.bf16.mxu0 %v684
  %891 = vmatpush2.bf16.msra.mxu0 %v683
  %892 = vmatprep.subr.bf16.mxu0 %v680
  %893 = vmatpush2.bf16.msra.mxu0 %v679
  %894 = vmatprep.subr.bf16.mxu0 %v676
  %895 = vmatpush2.bf16.msra.mxu0 %v675
  %896 = vmatprep.subr.bf16.mxu0 %v672
  %897 = vmatpush2.bf16.msra.mxu0 %v671
  %898 = vmatprep.subr.bf16.mxu0 %v668
  %899 = vmatpush2.bf16.msra.mxu0 %v667
  %900 = vmatprep.mubr.bf16.mxu0 %v182
  %901 = vmatmul.mubr.bf16.gmra.mxu0 %v181
  %v902 = vpop.f32.mrf.mxu0
  %v903 = vadd.f32 %v862, %v902
  %v904 = vpop.f32.mrf.mxu0
  %v905 = vadd.f32 %v864, %v904
  %v906 = vpop.f32.mrf.mxu0
  %v907 = vpop.f32.mrf.mxu0
  %908 = vdwg.mxu0
  %909 = vmatprep.subr.bf16.mxu0 %v602
  %910 = vmatpush1.bf16.msra.mxu0 %v601
  %911 = vmatprep.subr.bf16.mxu0 %v598
  %912 = vmatpush1.bf16.msra.mxu0 %v597
  %913 = vmatprep.subr.bf16.mxu0 %v594
  %914 = vmatpush1.bf16.msra.mxu0 %v593
  %915 = vmatprep.subr.bf16.mxu0 %v590
  %916 = vmatpush1.bf16.msra.mxu0 %v589
  %917 = vmatprep.subr.bf16.mxu0 %v586
  %918 = vmatpush1.bf16.msra.mxu0 %v585
  %919 = vmatprep.subr.bf16.mxu0 %v582
  %920 = vmatpush1.bf16.msra.mxu0 %v581
  %921 = vmatprep.subr.bf16.mxu0 %v578
  %922 = vmatpush1.bf16.msra.mxu0 %v577
  %923 = vmatprep.subr.bf16.mxu0 %v574
  %924 = vmatpush1.bf16.msra.mxu0 %v573
  %925 = vmatprep.subr.bf16.mxu0 %v634
  %926 = vmatpush2.bf16.msra.mxu0 %v633
  %927 = vmatprep.subr.bf16.mxu0 %v630
  %928 = vmatpush2.bf16.msra.mxu0 %v629
  %929 = vmatprep.subr.bf16.mxu0 %v626
  %930 = vmatpush2.bf16.msra.mxu0 %v625
  %931 = vmatprep.subr.bf16.mxu0 %v622
  %932 = vmatpush2.bf16.msra.mxu0 %v621
  %933 = vmatprep.subr.bf16.mxu0 %v618
  %934 = vmatpush2.bf16.msra.mxu0 %v617
  %935 = vmatprep.subr.bf16.mxu0 %v614
  %936 = vmatpush2.bf16.msra.mxu0 %v613
  %937 = vmatprep.subr.bf16.mxu0 %v610
  %938 = vmatpush2.bf16.msra.mxu0 %v609
  %939 = vmatprep.subr.bf16.mxu0 %v606
  %940 = vmatpush2.bf16.msra.mxu0 %v605
  %941 = vmatprep.mubr.bf16.mxu0 %v180
  %942 = vmatmul.mubr.bf16.gmra.mxu0 %v179
  %v943 = vpop.f32.mrf.mxu0
  %v944 = vadd.f32 %v164, %v943
  %v945 = vpop.f32.mrf.mxu0
  %v946 = vadd.f32 %v168, %v945
  %v947 = vpop.f32.mrf.mxu0
  %v948 = vpop.f32.mrf.mxu0
  %949 = vdwg.mxu0
  %950 = vmatprep.subr.bf16.mxu0 %v666
  %951 = vmatpush1.bf16.msra.mxu0 %v665
  %952 = vmatprep.subr.bf16.mxu0 %v662
  %953 = vmatpush1.bf16.msra.mxu0 %v661
  %954 = vmatprep.subr.bf16.mxu0 %v658
  %955 = vmatpush1.bf16.msra.mxu0 %v657
  %956 = vmatprep.subr.bf16.mxu0 %v654
  %957 = vmatpush1.bf16.msra.mxu0 %v653
  %958 = vmatprep.subr.bf16.mxu0 %v650
  %959 = vmatpush1.bf16.msra.mxu0 %v649
  %960 = vmatprep.subr.bf16.mxu0 %v646
  %961 = vmatpush1.bf16.msra.mxu0 %v645
  %962 = vmatprep.subr.bf16.mxu0 %v642
  %963 = vmatpush1.bf16.msra.mxu0 %v641
  %964 = vmatprep.subr.bf16.mxu0 %v638
  %965 = vmatpush1.bf16.msra.mxu0 %v637
  %966 = vmatprep.subr.bf16.mxu0 %v698
  %967 = vmatpush2.bf16.msra.mxu0 %v697
  %968 = vmatprep.subr.bf16.mxu0 %v694
  %969 = vmatpush2.bf16.msra.mxu0 %v693
  %970 = vmatprep.subr.bf16.mxu0 %v690
  %971 = vmatpush2.bf16.msra.mxu0 %v689
  %972 = vmatprep.subr.bf16.mxu0 %v686
  %973 = vmatpush2.bf16.msra.mxu0 %v685
  %974 = vmatprep.subr.bf16.mxu0 %v682
  %975 = vmatpush2.bf16.msra.mxu0 %v681
  %976 = vmatprep.subr.bf16.mxu0 %v678
  %977 = vmatpush2.bf16.msra.mxu0 %v677
  %978 = vmatprep.subr.bf16.mxu0 %v674
  %979 = vmatpush2.bf16.msra.mxu0 %v673
  %980 = vmatprep.subr.bf16.mxu0 %v670
  %981 = vmatpush2.bf16.msra.mxu0 %v669
  %982 = vmatprep.mubr.bf16.mxu0 %v182
  %983 = vmatmul.mubr.bf16.gmra.mxu0 %v181
  %v984 = vpop.f32.mrf.mxu0
  %v985 = vadd.f32 %v944, %v984
  %v986 = vpop.f32.mrf.mxu0
  %v987 = vadd.f32 %v946, %v986
  %v988 = vpop.f32.mrf.mxu0
  %v989 = vpop.f32.mrf.mxu0
  %990 = vdwg.mxu0
  %v991 = vmax.f32 %v903, 0.0
  %v992 = vmax.f32 %v905, 0.0
  %v993 = vmax.f32 %v985, 0.0
  %v994 = vmax.f32 %v987, 0.0
  %v995 = vpack.c.bf16 %v991, %v991
  %v996 = vpack.c.bf16 %v992, %v992
  %v997 = vpack.c.bf16 %v993, %v993
  %v998 = vpack.c.bf16 %v994, %v994
  %v999 = vld [vmem:[%s3] sm:$0xf]
  %v1000 = vld [vmem:[%s3 + $0x4] sm:$0xf]
  %v1001 = vld [vmem:[%s3 + $0x8] sm:$0xf]
  %v1002 = vld [vmem:[%s3 + $0xc] sm:$0xf]
  %v1003 = vld [vmem:[%s3 + $0x10] sm:$0xf]
  %v1004 = vld [vmem:[%s3 + $0x14] sm:$0xf]
  %v1005 = vld [vmem:[%s3 + $0x18] sm:$0xf]
  %v1006 = vld [vmem:[%s3 + $0x1c] sm:$0xf]
  %v1007 = vld [vmem:[%s3 + $0x20] sm:$0xf]
  %v1008 = vld [vmem:[%s3 + $0x24] sm:$0xf]
  %v1009 = vld [vmem:[%s3 + $0x28] sm:$0xf]
  %v1010 = vld [vmem:[%s3 + $0x2c] sm:$0xf]
  %v1011 = vld [vmem:[%s3 + $0x30] sm:$0xf]
  %v1012 = vld [vmem:[%s3 + $0x34] sm:$0xf]
  %v1013 = vld [vmem:[%s3 + $0x38] sm:$0xf]
  %v1014 = vld [vmem:[%s3 + $0x3c] sm:$0xf]
  %v1015 = vld [vmem:[%s3 + $0x40] sm:$0xf]
  %v1016 = vld [vmem:[%s3 + $0x44] sm:$0xf]
  %v1017 = vld [vmem:[%s3 + $0x48] sm:$0xf]
  %v1018 = vld [vmem:[%s3 + $0x4c] sm:$0xf]
  %v1019 = vld [vmem:[%s3 + $0x50] sm:$0xf]
  %v1020 = vld [vmem:[%s3 + $0x54] sm:$0xf]
  %v1021 = vld [vmem:[%s3 + $0x58] sm:$0xf]
  %v1022 = vld [vmem:[%s3 + $0x5c] sm:$0xf]
  %v1023 = vld [vmem:[%s3 + $0x60] sm:$0xf]
  %v1024 = vld [vmem:[%s3 + $0x64] sm:$0xf]
  %v1025 = vld [vmem:[%s3 + $0x68] sm:$0xf]
  %v1026 = vld [vmem:[%s3 + $0x6c] sm:$0xf]
  %v1027 = vld [vmem:[%s3 + $0x70] sm:$0xf]
  %v1028 = vld [vmem:[%s3 + $0x74] sm:$0xf]
  %v1029 = vld [vmem:[%s3 + $0x78] sm:$0xf]
  %v1030 = vld [vmem:[%s3 + $0x7c] sm:$0xf]
  %v1031 = vld [vmem:[%s3 + $0x80] sm:$0xf]
  %v1032 = vld [vmem:[%s3 + $0x84] sm:$0xf]
  %v1033 = vld [vmem:[%s3 + $0x88] sm:$0xf]
  %v1034 = vld [vmem:[%s3 + $0x8c] sm:$0xf]
  %v1035 = vld [vmem:[%s3 + $0x90] sm:$0xf]
  %v1036 = vld [vmem:[%s3 + $0x94] sm:$0xf]
  %v1037 = vld [vmem:[%s3 + $0x98] sm:$0xf]
  %v1038 = vld [vmem:[%s3 + $0x9c] sm:$0xf]
  %v1039 = vld [vmem:[%s3 + $0xa0] sm:$0xf]
  %v1040 = vld [vmem:[%s3 + $0xa4] sm:$0xf]
  %v1041 = vld [vmem:[%s3 + $0xa8] sm:$0xf]
  %v1042 = vld [vmem:[%s3 + $0xac] sm:$0xf]
  %v1043 = vld [vmem:[%s3 + $0xb0] sm:$0xf]
  %v1044 = vld [vmem:[%s3 + $0xb4] sm:$0xf]
  %v1045 = vld [vmem:[%s3 + $0xb8] sm:$0xf]
  %v1046 = vld [vmem:[%s3 + $0xbc] sm:$0xf]
  %v1047 = vld [vmem:[%s3 + $0xc0] sm:$0xf]
  %v1048 = vld [vmem:[%s3 + $0xc4] sm:$0xf]
  %v1049 = vld [vmem:[%s3 + $0xc8] sm:$0xf]
  %v1050 = vld [vmem:[%s3 + $0xcc] sm:$0xf]
  %v1051 = vld [vmem:[%s3 + $0xd0] sm:$0xf]
  %v1052 = vld [vmem:[%s3 + $0xd4] sm:$0xf]
  %v1053 = vld [vmem:[%s3 + $0xd8] sm:$0xf]
  %v1054 = vld [vmem:[%s3 + $0xdc] sm:$0xf]
  %v1055 = vld [vmem:[%s3 + $0xe0] sm:$0xf]
  %v1056 = vld [vmem:[%s3 + $0xe4] sm:$0xf]
  %v1057 = vld [vmem:[%s3 + $0xe8] sm:$0xf]
  %v1058 = vld [vmem:[%s3 + $0xec] sm:$0xf]
  %v1059 = vld [vmem:[%s3 + $0xf0] sm:$0xf]
  %v1060 = vld [vmem:[%s3 + $0xf4] sm:$0xf]
  %v1061 = vld [vmem:[%s3 + $0xf8] sm:$0xf]
  %v1062 = vld [vmem:[%s3 + $0xfc] sm:$0xf]
  %v1063 = vld [vmem:[%s4] sm:$0x1]
  %v1065 = vlaneseq
  %v1066 = vshrl.u32 %v1065, 7
  %v1067 = vsub.s32 0, %v1066
  %v1068 = vrot.slane %v1063, %v1067
  %v1134 = vunpack.c.l.b16 %v999
  %v1135 = vunpack.c.l.b16 %v1000
  %v1136 = vunpack.c.l.b16 %v1001
  %v1137 = vunpack.c.l.b16 %v1002
  %v1138 = vunpack.c.l.b16 %v1003
  %v1139 = vunpack.c.l.b16 %v1004
  %v1140 = vunpack.c.l.b16 %v1005
  %v1141 = vunpack.c.l.b16 %v1006
  %v1142 = vunpack.c.l.b16 %v1007
  %v1143 = vunpack.c.l.b16 %v1008
  %v1144 = vunpack.c.l.b16 %v1009
  %v1145 = vunpack.c.l.b16 %v1010
  %v1146 = vunpack.c.l.b16 %v1011
  %v1147 = vunpack.c.l.b16 %v1012
  %v1148 = vunpack.c.l.b16 %v1013
  %v1149 = vunpack.c.l.b16 %v1014
  %v1150 = vunpack.c.l.b16 %v1015
  %v1151 = vunpack.c.l.b16 %v1016
  %v1152 = vunpack.c.l.b16 %v1017
  %v1153 = vunpack.c.l.b16 %v1018
  %v1154 = vunpack.c.l.b16 %v1019
  %v1155 = vunpack.c.l.b16 %v1020
  %v1156 = vunpack.c.l.b16 %v1021
  %v1157 = vunpack.c.l.b16 %v1022
  %v1158 = vunpack.c.l.b16 %v1023
  %v1159 = vunpack.c.l.b16 %v1024
  %v1160 = vunpack.c.l.b16 %v1025
  %v1161 = vunpack.c.l.b16 %v1026
  %v1162 = vunpack.c.l.b16 %v1027
  %v1163 = vunpack.c.l.b16 %v1028
  %v1164 = vunpack.c.l.b16 %v1029
  %v1165 = vunpack.c.l.b16 %v1030
  %v1166 = vunpack.c.l.b16 %v1031
  %v1167 = vunpack.c.l.b16 %v1032
  %v1168 = vunpack.c.l.b16 %v1033
  %v1169 = vunpack.c.l.b16 %v1034
  %v1170 = vunpack.c.l.b16 %v1035
  %v1171 = vunpack.c.l.b16 %v1036
  %v1172 = vunpack.c.l.b16 %v1037
  %v1173 = vunpack.c.l.b16 %v1038
  %v1174 = vunpack.c.l.b16 %v1039
  %v1175 = vunpack.c.l.b16 %v1040
  %v1176 = vunpack.c.l.b16 %v1041
  %v1177 = vunpack.c.l.b16 %v1042
  %v1178 = vunpack.c.l.b16 %v1043
  %v1179 = vunpack.c.l.b16 %v1044
  %v1180 = vunpack.c.l.b16 %v1045
  %v1181 = vunpack.c.l.b16 %v1046
  %v1182 = vunpack.c.l.b16 %v1047
  %v1183 = vunpack.c.l.b16 %v1048
  %v1184 = vunpack.c.l.b16 %v1049
  %v1185 = vunpack.c.l.b16 %v1050
  %v1186 = vunpack.c.l.b16 %v1051
  %v1187 = vunpack.c.l.b16 %v1052
  %v1188 = vunpack.c.l.b16 %v1053
  %v1189 = vunpack.c.l.b16 %v1054
  %v1190 = vunpack.c.l.b16 %v1055
  %v1191 = vunpack.c.l.b16 %v1056
  %v1192 = vunpack.c.l.b16 %v1057
  %v1193 = vunpack.c.l.b16 %v1058
  %v1194 = vunpack.c.l.b16 %v1059
  %v1195 = vunpack.c.l.b16 %v1060
  %v1196 = vunpack.c.l.b16 %v1061
  %v1197 = vunpack.c.l.b16 %v1062
  %v1198 = vpack.c.b16 %v1135, %v1134
  %v1199 = vpack.c.b16 %v1137, %v1136
  %v1200 = vpack.c.b16 %v1139, %v1138
  %v1201 = vpack.c.b16 %v1141, %v1140
  %v1202 = vpack.c.b16 %v1143, %v1142
  %v1203 = vpack.c.b16 %v1145, %v1144
  %v1204 = vpack.c.b16 %v1147, %v1146
  %v1205 = vpack.c.b16 %v1149, %v1148
  %v1206 = vpack.c.b16 %v1151, %v1150
  %v1207 = vpack.c.b16 %v1153, %v1152
  %v1208 = vpack.c.b16 %v1155, %v1154
  %v1209 = vpack.c.b16 %v1157, %v1156
  %v1210 = vpack.c.b16 %v1159, %v1158
  %v1211 = vpack.c.b16 %v1161, %v1160
  %v1212 = vpack.c.b16 %v1163, %v1162
  %v1213 = vpack.c.b16 %v1165, %v1164
  %v1214 = vpack.c.b16 %v1167, %v1166
  %v1215 = vpack.c.b16 %v1169, %v1168
  %v1216 = vpack.c.b16 %v1171, %v1170
  %v1217 = vpack.c.b16 %v1173, %v1172
  %v1218 = vpack.c.b16 %v1175, %v1174
  %v1219 = vpack.c.b16 %v1177, %v1176
  %v1220 = vpack.c.b16 %v1179, %v1178
  %v1221 = vpack.c.b16 %v1181, %v1180
  %v1222 = vpack.c.b16 %v1183, %v1182
  %v1223 = vpack.c.b16 %v1185, %v1184
  %v1224 = vpack.c.b16 %v1187, %v1186
  %v1225 = vpack.c.b16 %v1189, %v1188
  %v1226 = vpack.c.b16 %v1191, %v1190
  %v1227 = vpack.c.b16 %v1193, %v1192
  %v1228 = vpack.c.b16 %v1195, %v1194
  %v1229 = vpack.c.b16 %v1197, %v1196
  %1262 = vmatprep.subr.bf16.mxu0 0
  %1263 = vmatpush1.bf16.msra.mxu0 %v1205
  %1264 = vmatprep.subr.bf16.mxu0 0
  %1265 = vmatpush1.bf16.msra.mxu0 %v1204
  %1266 = vmatprep.subr.bf16.mxu0 0
  %1267 = vmatpush1.bf16.msra.mxu0 %v1203
  %1268 = vmatprep.subr.bf16.mxu0 0
  %1269 = vmatpush1.bf16.msra.mxu0 %v1202
  %1270 = vmatprep.subr.bf16.mxu0 0
  %1271 = vmatpush1.bf16.msra.mxu0 %v1201
  %1272 = vmatprep.subr.bf16.mxu0 0
  %1273 = vmatpush1.bf16.msra.mxu0 %v1200
  %1274 = vmatprep.subr.bf16.mxu0 0
  %1275 = vmatpush1.bf16.msra.mxu0 %v1199
  %1276 = vmatprep.subr.bf16.mxu0 0
  %1277 = vmatpush1.bf16.msra.mxu0 %v1198
  %1278 = vmatprep.subr.bf16.mxu0 0
  %1279 = vmatpush2.bf16.msra.mxu0 %v1213
  %1280 = vmatprep.subr.bf16.mxu0 0
  %1281 = vmatpush2.bf16.msra.mxu0 %v1212
  %1282 = vmatprep.subr.bf16.mxu0 0
  %1283 = vmatpush2.bf16.msra.mxu0 %v1211
  %1284 = vmatprep.subr.bf16.mxu0 0
  %1285 = vmatpush2.bf16.msra.mxu0 %v1210
  %1286 = vmatprep.subr.bf16.mxu0 0
  %1287 = vmatpush2.bf16.msra.mxu0 %v1209
  %1288 = vmatprep.subr.bf16.mxu0 0
  %1289 = vmatpush2.bf16.msra.mxu0 %v1208
  %1290 = vmatprep.subr.bf16.mxu0 0
  %1291 = vmatpush2.bf16.msra.mxu0 %v1207
  %1292 = vmatprep.subr.bf16.mxu0 0
  %1293 = vmatpush2.bf16.msra.mxu0 %v1206
  %1294 = vmatprep.mubr.bf16.mxu0 %v996
  %1295 = vmatmul.mubr.bf16.gmra.mxu0 %v995
  %v1296 = vpop.f32.mrf.mxu0
  %v1297 = vadd.f32 %v1068, %v1296
  %v1298 = vpop.f32.mrf.mxu0
  %v1299 = vpop.f32.mrf.mxu0
  %v1300 = vpop.f32.mrf.mxu0
  %1301 = vdwg.mxu0
  %1302 = vmatprep.subr.bf16.mxu0 0
  %1303 = vmatpush1.bf16.msra.mxu0 %v1221
  %1304 = vmatprep.subr.bf16.mxu0 0
  %1305 = vmatpush1.bf16.msra.mxu0 %v1220
  %1306 = vmatprep.subr.bf16.mxu0 0
  %1307 = vmatpush1.bf16.msra.mxu0 %v1219
  %1308 = vmatprep.subr.bf16.mxu0 0
  %1309 = vmatpush1.bf16.msra.mxu0 %v1218
  %1310 = vmatprep.subr.bf16.mxu0 0
  %1311 = vmatpush1.bf16.msra.mxu0 %v1217
  %1312 = vmatprep.subr.bf16.mxu0 0
  %1313 = vmatpush1.bf16.msra.mxu0 %v1216
  %1314 = vmatprep.subr.bf16.mxu0 0
  %1315 = vmatpush1.bf16.msra.mxu0 %v1215
  %1316 = vmatprep.subr.bf16.mxu0 0
  %1317 = vmatpush1.bf16.msra.mxu0 %v1214
  %1318 = vmatprep.subr.bf16.mxu0 0
  %1319 = vmatpush2.bf16.msra.mxu0 %v1229
  %1320 = vmatprep.subr.bf16.mxu0 0
  %1321 = vmatpush2.bf16.msra.mxu0 %v1228
  %1322 = vmatprep.subr.bf16.mxu0 0
  %1323 = vmatpush2.bf16.msra.mxu0 %v1227
  %1324 = vmatprep.subr.bf16.mxu0 0
  %1325 = vmatpush2.bf16.msra.mxu0 %v1226
  %1326 = vmatprep.subr.bf16.mxu0 0
  %1327 = vmatpush2.bf16.msra.mxu0 %v1225
  %1328 = vmatprep.subr.bf16.mxu0 0
  %1329 = vmatpush2.bf16.msra.mxu0 %v1224
  %1330 = vmatprep.subr.bf16.mxu0 0
  %1331 = vmatpush2.bf16.msra.mxu0 %v1223
  %1332 = vmatprep.subr.bf16.mxu0 0
  %1333 = vmatpush2.bf16.msra.mxu0 %v1222
  %1334 = vmatprep.mubr.bf16.mxu0 %v998
  %1335 = vmatmul.mubr.bf16.gmra.mxu0 %v997
  %v1336 = vpop.f32.mrf.mxu0
  %v1337 = vadd.f32 %v1297, %v1336
  %v1338 = vpop.f32.mrf.mxu0
  %v1339 = vpop.f32.mrf.mxu0
  %v1340 = vpop.f32.mrf.mxu0
  %1341 = vdwg.mxu0
  %1342 = vst [vmem:[%s5] sm:$0xff] %v1337
  // Predicated region
  $region22: #{dqn_forward.7} parent=0 // pred_check
    _
  $region23: #{dqn_forward.7} parent=0 // pred_check_branch
    %1344 = sbr.rel (0) target = $region25
  $region24: #{dqn_forward.7} parent=0 // pred_region
    _
  $region25: #{dqn_forward.7} parent=0 // pred_fallthru
    _
  // Predicated region
  $region26: #{dqn_forward.7} parent=0 // pred_check
    _
  $region27: #{dqn_forward.7} parent=0 // pred_check_branch
    %1346 = sbr.rel (0) target = $region29
  $region28: #{dqn_forward.7} parent=0 // pred_region
    _
  $region29: #{dqn_forward.7} parent=0 // pred_fallthru
    _

</llo_original>
